<compile_context>
chip_gen: v7x
topology: tpu7x:2x2x1
jax: 0.10.0
libtpu: 0.0.40
codegen_flags: <defaults>
</compile_context>

<pallas_src>
import functools

import jax
import jax.numpy as jnp
from jax import lax
from jax.experimental import pallas as pl
from jax.experimental.pallas import tpu as pltpu


def _residual_block_kernel(x_ref, xt_ref, xb_ref, w1_ref, b1_ref, w2_ref,
                           b2_ref, o_ref, xp_ref, *, t_axis):
    # x_ref : (1, TH, W, C)   rows of this H-tile (original, pre-ReLU)
    # xt_ref: (1, 1, W, C)    row above the tile (clamped index at t == 0)
    # xb_ref: (1, 1, W, C)    row below the tile (clamped index at last tile)
    # w1_ref: (9*C, C)        3x3 conv weights, rows ordered (dh, dw, cin)
    # b1_ref: (1, C) f32
    # w2_ref: (C, C)          1x1 conv weights, cin x cout
    # b2_ref: (1, C) f32
    # o_ref : (1, TH, W, C)
    # xp_ref: (TH+2, W+2, C)  VMEM scratch: zero-padded ReLU(x) tile
    _, TH, W, C = x_ref.shape
    cdt = xp_ref.dtype
    t = pl.program_id(t_axis)
    n_t = pl.num_programs(t_axis)

    # ---- Build the zero-padded ReLU(x) tile in VMEM -----------------------
    # (ReLU(0) == 0, so zero padding commutes with the leading ReLU.)
    # Interior rows: one bulk store.
    xp_ref[1:TH + 1, 1:W + 1, :] = jnp.maximum(x_ref[0], 0).astype(cdt)
    # Only the border is zeroed: left / right pad columns ...
    xp_ref[:, 0:1, :] = jnp.zeros((TH + 2, 1, C), cdt)
    xp_ref[:, W + 1:W + 2, :] = jnp.zeros((TH + 2, 1, C), cdt)

    # ... and the top / bottom halo rows (real rows inside the image, zeros at
    # the image edges).  Every scratch element the matmuls read is (re)written
    # each grid step, so nothing relies on scratch persistence across steps.
    @pl.when(t > 0)
    def _():
        xp_ref[0, 1:W + 1, :] = jnp.maximum(xt_ref[0, 0], 0).astype(cdt)

    @pl.when(t == 0)
    def _():
        xp_ref[0, 1:W + 1, :] = jnp.zeros((W, C), cdt)

    @pl.when(t < n_t - 1)
    def _():
        xp_ref[TH + 1, 1:W + 1, :] = jnp.maximum(xb_ref[0, 0], 0).astype(cdt)

    @pl.when(t == n_t - 1)
    def _():
        xp_ref[TH + 1, 1:W + 1, :] = jnp.zeros((W, C), cdt)

    # ---- 3x3 conv: 9 accumulating matmuls on shifted-window views ---------
    # (No materialized im2col buffer; each LHS is read straight from the
    # padded tile and fed to the MXU, accumulation stays in f32.)
    acc = jnp.zeros((TH * W, C), jnp.float32)
    for k in range(9):
        dh, dw = k // 3, k % 3
        lhs = xp_ref[dh:dh + TH, dw:dw + W, :].reshape(TH * W, C)
        acc = acc + jnp.dot(lhs, w1_ref[k * C:(k + 1) * C, :],
                            preferred_element_type=jnp.float32)

    # Bias + ReLU (f32), then the 1x1 conv (MXU operands in compute dtype).
    y = jnp.maximum(acc + b1_ref[...], 0.0).astype(cdt)
    z2 = jnp.dot(y, w2_ref[...],
                 preferred_element_type=jnp.float32) + b2_ref[...]

    # Residual add (pre-ReLU x, already in VMEM) + single output store.
    out = x_ref[0].reshape(TH * W, C).astype(jnp.float32) + z2
    o_ref[...] = out.reshape(1, TH, W, C).astype(o_ref.dtype)


def _vmem_budgets():
    """Per-chip VMEM budgets: v5e/v6e have 128 MiB/core, v7x only 64 MiB."""
    cap = None
    try:
        cap = int(pltpu.get_tpu_info().vmem_capacity_bytes)
    except Exception:
        cap = None
    if not cap or cap <= 0:
        cap = 64 << 20                              # assume smallest (v7x)
    tile_budget = min(int(cap * 0.125), 24 << 20)   # ~8 MiB v7x, ~16 MiB v6e
    vmem_limit = min(int(cap * 0.6), 96 << 20)      # ~38 MiB v7x, ~76 MiB v6e
    return tile_budget, vmem_limit


def _pick_tile_h(H, W, C, x_bytes, c_bytes, budget_bytes):
    """Largest divisor of H whose per-step working set fits the budget,
    preferring tiles with a sublane-aligned flattened row count (th*W % 8)."""
    # Resident (double-buffered) weight / bias blocks + slack.
    fixed = 2 * (9 * C * C + C * C) * c_bytes + 2 * 2 * 2 * C * 4 + (1 << 20)

    def est(th):
        return (2 * 2 * th * W * C * x_bytes        # double-buffered in + out
                + 2 * 2 * W * C * x_bytes           # double-buffered halo rows
                + (th + 2) * (W + 2) * C * c_bytes  # padded ReLU(x) scratch
                + th * W * C * (4 + c_bytes + 4))   # f32 acc + y + f32 result

    fits = [t for t in range(1, H + 1)
            if H % t == 0 and est(t) + fixed <= budget_bytes]
    if not fits:
        return 1
    aligned = [t for t in fits if (t * W) % 8 == 0]
    return max(aligned) if aligned else max(fits)


def residual_block_nhwc(x, w1, b1, w2, b2, *, tile_h=None, compute_dtype=None):
    """x: (B, H, W, C); w1: (3, 3, C, C) HWIO; w2: (C, C) cin x cout."""
    B, H, W, C = x.shape
    # MXU operand dtype: bf16 by default (full-rate MXU, half the VMEM bytes);
    # accumulation, biases and the residual stay f32 regardless.
    cdt = (jnp.dtype(compute_dtype) if compute_dtype is not None
           else jnp.dtype(jnp.bfloat16))

    tile_budget, vmem_limit = _vmem_budgets()
    if tile_h is None:
        tile_h = _pick_tile_h(H, W, C, jnp.dtype(x.dtype).itemsize,
                              jnp.dtype(cdt).itemsize, tile_budget)
    assert H % tile_h == 0, (H, tile_h)
    th = tile_h
    n_t = H // th

    w1m = w1.reshape(9 * C, C).astype(cdt)      # rows ordered (dh, dw, cin)
    w2m = w2.astype(cdt)
    b1f = b1.reshape(1, C).astype(jnp.float32)
    b2f = b2.reshape(1, C).astype(jnp.float32)

    # Grid: batch-major when B > 1 (v7x megacore shards over B); H-tile-major
    # when B == 1 so a parallel axis of extent >= 2 remains.
    batch_major = B > 1
    t_axis = 1 if batch_major else 0
    grid = (B, n_t) if batch_major else (n_t, B)

    def bt(i, j):
        return (i, j) if batch_major else (j, i)

    def tile_map(i, j):
        b, t = bt(i, j)
        return (b, t, 0, 0)

    def top_map(i, j):
        b, t = bt(i, j)
        return (b, jnp.maximum(t * th - 1, 0), 0, 0)

    def bot_map(i, j):
        b, t = bt(i, j)
        return (b, jnp.minimum((t + 1) * th, H - 1), 0, 0)

    def wmap(i, j):
        return (0, 0)

    kernel = functools.partial(_residual_block_kernel, t_axis=t_axis)

    return pl.pallas_call(
        kernel,
        out_shape=jax.ShapeDtypeStruct((B, H, W, C), x.dtype),
        grid_spec=pltpu.PrefetchScalarGridSpec(
            num_scalar_prefetch=0,
            grid=grid,
            in_specs=[
                pl.BlockSpec((1, th, W, C), tile_map),   # main rows
                pl.BlockSpec((1, 1, W, C), top_map),     # top halo row
                pl.BlockSpec((1, 1, W, C), bot_map),     # bottom halo row
                pl.BlockSpec((9 * C, C), wmap),          # 3x3 weights
                pl.BlockSpec((1, C), wmap),              # b1
                pl.BlockSpec((C, C), wmap),              # 1x1 weights
                pl.BlockSpec((1, C), wmap),              # b2
            ],
            out_specs=pl.BlockSpec((1, th, W, C), tile_map),
            scratch_shapes=[
                pltpu.VMEM((th + 2, W + 2, C), cdt),     # padded ReLU(x) tile
            ],
        ),
        compiler_params=pltpu.CompilerParams(
            dimension_semantics=("parallel", "parallel"),
            vmem_limit_bytes=int(vmem_limit),
        ),
    )(x, x, x, w1m, b1f, w2m, b2f)


def residual_block_nchw(x_nchw, w1, b1, w2, b2, *, tile_h=None,
                        compute_dtype=None):
    """PyTorch-facing entry point (NCHW). Prefer keeping the surrounding model
    in NHWC and calling residual_block_nhwc directly — each transpose here is
    an extra full HBM pass."""
    x_nhwc = jnp.transpose(x_nchw, (0, 2, 3, 1))
    y_nhwc = residual_block_nhwc(x_nhwc, w1, b1, w2, b2, tile_h=tile_h,
                                 compute_dtype=compute_dtype)
    return jnp.transpose(y_nhwc, (0, 3, 1, 2))


def _reference_nchw(x_nchw, w1, b1, w2, b2):
    """Pure-JAX reference (lax conv) matching PyTorch semantics."""
    x = jnp.transpose(x_nchw, (0, 2, 3, 1))
    y = jnp.maximum(x, 0.0)
    y = lax.conv_general_dilated(
        y, w1, window_strides=(1, 1), padding=((1, 1), (1, 1)),
        dimension_numbers=("NHWC", "HWIO", "NHWC")) + b1
    y = jnp.maximum(y, 0.0)
    y = lax.conv_general_dilated(
        y, w2.reshape(1, 1, w2.shape[0], w2.shape[1]),
        window_strides=(1, 1), padding=((0, 0), (0, 0)),
        dimension_numbers=("NHWC", "HWIO", "NHWC")) + b2
    return jnp.transpose(x + y, (0, 3, 1, 2))


if __name__ == "__main__":
    B, C, H, W = 2, 4, 16, 16

    key = jax.random.PRNGKey(0)
    kx, k1, kb1, k2, kb2 = jax.random.split(key, 5)

    # Shapes from nn.Conv2d(C, C, 3, padding=1) / nn.Conv2d(C, C, 1).
    x = jax.random.normal(kx, (B, C, H, W), dtype=jnp.float32)
    w1 = jax.random.normal(k1, (3, 3, C, C), dtype=jnp.float32) * 0.1   # HWIO
    b1 = jax.random.normal(kb1, (C,), dtype=jnp.float32) * 0.1
    w2 = jax.random.normal(k2, (C, C), dtype=jnp.float32) * 0.1         # 1x1
    b2 = jax.random.normal(kb2, (C,), dtype=jnp.float32) * 0.1

    ref = jax.block_until_ready(_reference_nchw(x, w1, b1, w2, b2))

    # 1) f32 MXU operands, tile_h=8: exercises halo handling; tight check.
    out_f32 = jax.block_until_ready(
        residual_block_nchw(x, w1, b1, w2, b2, tile_h=8,
                            compute_dtype=jnp.float32))
    assert out_f32.shape == (B, C, H, W)
    assert jnp.allclose(out_f32, ref, atol=1e-4, rtol=1e-4), (
        float(jnp.max(jnp.abs(out_f32 - ref))))

    # 2) Default path: bf16 MXU operands, auto tile / per-chip VMEM budget.
    out_def = jax.block_until_ready(residual_block_nchw(x, w1, b1, w2, b2))
    assert jnp.allclose(out_def, ref, atol=7.5e-2, rtol=5e-2), (
        float(jnp.max(jnp.abs(out_def - ref))))

    # 3) B == 1 path (H-tile-major grid keeps a parallel axis of extent > 1).
    out_b1 = jax.block_until_ready(
        residual_block_nchw(x[:1], w1, b1, w2, b2, tile_h=4,
                            compute_dtype=jnp.float32))
    assert jnp.allclose(out_b1, ref[:1], atol=1e-4, rtol=1e-4), (
        float(jnp.max(jnp.abs(out_b1 - ref[:1]))))

    print("KERNEL_OK")
</pallas_src>

<mosaic_0001>
module attributes {stable_mosaic.version = 11 : i64} {
  func.func @_residual_block_kernel(%arg0: i32, %arg1: i32, %arg2: memref<1x8x16x4xf32, #tpu.memory_space<vmem>>, %arg3: memref<1x1x16x4xf32, #tpu.memory_space<vmem>>, %arg4: memref<1x1x16x4xf32, #tpu.memory_space<vmem>>, %arg5: memref<36x4xf32, #tpu.memory_space<vmem>>, %arg6: memref<1x4xf32, #tpu.memory_space<vmem>>, %arg7: memref<4x4xf32, #tpu.memory_space<vmem>>, %arg8: memref<1x4xf32, #tpu.memory_space<vmem>>, %arg9: memref<1x8x16x4xf32, #tpu.memory_space<vmem>>, %arg10: memref<10x18x4xf32, #tpu.memory_space<vmem>>) attributes {dimension_semantics = [#tpu.dimension_semantics<parallel>, #tpu.dimension_semantics<parallel>], iteration_bounds = array<i64: 2, 2>, scalar_prefetch = 0 : i64, scratch_operands = 1 : i64, tpu.core_type = #tpu.core_type<tc>, window_params = [{transform_indices = @transform_0, window_bounds = array<i64: 1, 8, 16, 4>}, {transform_indices = @transform_1, window_bounds = array<i64: 1, 1, 16, 4>}, {transform_indices = @transform_2, window_bounds = array<i64: 1, 1, 16, 4>}, {pipeline_mode = #tpu.pipeline_mode<synchronous>, transform_indices = @transform_3, window_bounds = array<i64: 36, 4>}, {pipeline_mode = #tpu.pipeline_mode<synchronous>, transform_indices = @transform_4, window_bounds = array<i64: 1, 4>}, {pipeline_mode = #tpu.pipeline_mode<synchronous>, transform_indices = @transform_5, window_bounds = array<i64: 4, 4>}, {pipeline_mode = #tpu.pipeline_mode<synchronous>, transform_indices = @transform_6, window_bounds = array<i64: 1, 4>}, {transform_indices = @transform_7, window_bounds = array<i64: 1, 8, 16, 4>}]} {
    %c0 = arith.constant 0 : index
    %c0_0 = arith.constant 0 : index
    %c0_1 = arith.constant 0 : index
    %c0_2 = arith.constant 0 : index
    %0 = vector.load %arg2[%c0, %c0_0, %c0_1, %c0_2] : memref<1x8x16x4xf32, #tpu.memory_space<vmem>>, vector<1x8x16x4xf32>
    %1 = vector.shape_cast %0 : vector<1x8x16x4xf32> to vector<8x16x4xf32>
    %cst = arith.constant 0.000000e+00 : f32
    %2 = vector.broadcast %cst : f32 to vector<8x16x4xf32>
    %3 = arith.maximumf %1, %2 : vector<8x16x4xf32>
    %c1 = arith.constant 1 : index
    %c1_3 = arith.constant 1 : index
    %c0_4 = arith.constant 0 : index
    %4 = vector.load %arg10[%c1, %c1_3, %c0_4] : memref<10x18x4xf32, #tpu.memory_space<vmem>>, vector<8x16x4xf32>
    tpu.vector_store %arg10[%c1, %c1_3, %c0_4], %3 {strides = array<i32>} : memref<10x18x4xf32, #tpu.memory_space<vmem>>, vector<8x16x4xf32>,
    %cst_5 = arith.constant 0.000000e+00 : f32
    %5 = vector.broadcast %cst_5 : f32 to vector<10x1x4xf32>
    %c0_6 = arith.constant 0 : index
    %c0_7 = arith.constant 0 : index
    %c0_8 = arith.constant 0 : index
    %6 = vector.load %arg10[%c0_6, %c0_7, %c0_8] : memref<10x18x4xf32, #tpu.memory_space<vmem>>, vector<10x1x4xf32>
    tpu.vector_store %arg10[%c0_6, %c0_7, %c0_8], %5 {strides = array<i32>} : memref<10x18x4xf32, #tpu.memory_space<vmem>>, vector<10x1x4xf32>,
    %cst_9 = arith.constant 0.000000e+00 : f32
    %7 = vector.broadcast %cst_9 : f32 to vector<10x1x4xf32>
    %c0_10 = arith.constant 0 : index
    %c17 = arith.constant 17 : index
    %c0_11 = arith.constant 0 : index
    %8 = vector.load %arg10[%c0_10, %c17, %c0_11] : memref<10x18x4xf32, #tpu.memory_space<vmem>>, vector<10x1x4xf32>
    tpu.vector_store %arg10[%c0_10, %c17, %c0_11], %7 {strides = array<i32>} : memref<10x18x4xf32, #tpu.memory_space<vmem>>, vector<10x1x4xf32>,
    %c0_i32 = arith.constant 0 : i32
    %9 = arith.cmpi sgt, %arg1, %c0_i32 : i32
    %10 = arith.extui %9 : i1 to i32
    %c0_i32_12 = arith.constant 0 : i32
    %11 = arith.cmpi ne, %10, %c0_i32_12 : i32
    scf.if %11 {
      %c0_80 = arith.constant 0 : index
      %c0_81 = arith.constant 0 : index
      %c0_82 = arith.constant 0 : index
      %c0_83 = arith.constant 0 : index
      %83 = vector.load %arg3[%c0_80, %c0_81, %c0_82, %c0_83] : memref<1x1x16x4xf32, #tpu.memory_space<vmem>>, vector<1x1x16x4xf32>
      %84 = vector.shape_cast %83 : vector<1x1x16x4xf32> to vector<16x4xf32>
      %cst_84 = arith.constant 0.000000e+00 : f32
      %85 = vector.broadcast %cst_84 : f32 to vector<16x4xf32>
      %86 = arith.maximumf %84, %85 : vector<16x4xf32>
      %c0_85 = arith.constant 0 : index
      %c1_86 = arith.constant 1 : index
      %c0_87 = arith.constant 0 : index
      %87 = vector.load %arg10[%c0_85, %c1_86, %c0_87] : memref<10x18x4xf32, #tpu.memory_space<vmem>>, vector<1x16x4xf32>
      %88 = vector.shape_cast %87 : vector<1x16x4xf32> to vector<16x4xf32>
      %89 = vector.shape_cast %86 : vector<16x4xf32> to vector<1x16x4xf32>
      tpu.vector_store %arg10[%c0_85, %c1_86, %c0_87], %89 {strides = array<i32>} : memref<10x18x4xf32, #tpu.memory_space<vmem>>, vector<1x16x4xf32>,
    } else {
    }
    %c0_i32_13 = arith.constant 0 : i32
    %12 = arith.cmpi eq, %arg1, %c0_i32_13 : i32
    %13 = arith.extui %12 : i1 to i32
    %c0_i32_14 = arith.constant 0 : i32
    %14 = arith.cmpi ne, %13, %c0_i32_14 : i32
    scf.if %14 {
      %cst_80 = arith.constant 0.000000e+00 : f32
      %83 = vector.broadcast %cst_80 : f32 to vector<16x4xf32>
      %c0_81 = arith.constant 0 : index
      %c1_82 = arith.constant 1 : index
      %c0_83 = arith.constant 0 : index
      %84 = vector.load %arg10[%c0_81, %c1_82, %c0_83] : memref<10x18x4xf32, #tpu.memory_space<vmem>>, vector<1x16x4xf32>
      %85 = vector.shape_cast %84 : vector<1x16x4xf32> to vector<16x4xf32>
      %86 = vector.shape_cast %83 : vector<16x4xf32> to vector<1x16x4xf32>
      tpu.vector_store %arg10[%c0_81, %c1_82, %c0_83], %86 {strides = array<i32>} : memref<10x18x4xf32, #tpu.memory_space<vmem>>, vector<1x16x4xf32>,
    } else {
    }
    %c1_i32 = arith.constant 1 : i32
    %15 = arith.cmpi slt, %arg1, %c1_i32 : i32
    %16 = arith.extui %15 : i1 to i32
    %c0_i32_15 = arith.constant 0 : i32
    %17 = arith.cmpi ne, %16, %c0_i32_15 : i32
    scf.if %17 {
      %c0_80 = arith.constant 0 : index
      %c0_81 = arith.constant 0 : index
      %c0_82 = arith.constant 0 : index
      %c0_83 = arith.constant 0 : index
      %83 = vector.load %arg4[%c0_80, %c0_81, %c0_82, %c0_83] : memref<1x1x16x4xf32, #tpu.memory_space<vmem>>, vector<1x1x16x4xf32>
      %84 = vector.shape_cast %83 : vector<1x1x16x4xf32> to vector<16x4xf32>
      %cst_84 = arith.constant 0.000000e+00 : f32
      %85 = vector.broadcast %cst_84 : f32 to vector<16x4xf32>
      %86 = arith.maximumf %84, %85 : vector<16x4xf32>
      %c9 = arith.constant 9 : index
      %c1_85 = arith.constant 1 : index
      %c0_86 = arith.constant 0 : index
      %87 = vector.load %arg10[%c9, %c1_85, %c0_86] : memref<10x18x4xf32, #tpu.memory_space<vmem>>, vector<1x16x4xf32>
      %88 = vector.shape_cast %87 : vector<1x16x4xf32> to vector<16x4xf32>
      %89 = vector.shape_cast %86 : vector<16x4xf32> to vector<1x16x4xf32>
      tpu.vector_store %arg10[%c9, %c1_85, %c0_86], %89 {strides = array<i32>} : memref<10x18x4xf32, #tpu.memory_space<vmem>>, vector<1x16x4xf32>,
    } else {
    }
    %c1_i32_16 = arith.constant 1 : i32
    %18 = arith.cmpi eq, %arg1, %c1_i32_16 : i32
    %19 = arith.extui %18 : i1 to i32
    %c0_i32_17 = arith.constant 0 : i32
    %20 = arith.cmpi ne, %19, %c0_i32_17 : i32
    scf.if %20 {
      %cst_80 = arith.constant 0.000000e+00 : f32
      %83 = vector.broadcast %cst_80 : f32 to vector<16x4xf32>
      %c9 = arith.constant 9 : index
      %c1_81 = arith.constant 1 : index
      %c0_82 = arith.constant 0 : index
      %84 = vector.load %arg10[%c9, %c1_81, %c0_82] : memref<10x18x4xf32, #tpu.memory_space<vmem>>, vector<1x16x4xf32>
      %85 = vector.shape_cast %84 : vector<1x16x4xf32> to vector<16x4xf32>
      %86 = vector.shape_cast %83 : vector<16x4xf32> to vector<1x16x4xf32>
      tpu.vector_store %arg10[%c9, %c1_81, %c0_82], %86 {strides = array<i32>} : memref<10x18x4xf32, #tpu.memory_space<vmem>>, vector<1x16x4xf32>,
    } else {
    }
    %cst_18 = arith.constant 0.000000e+00 : f32
    %21 = vector.broadcast %cst_18 : f32 to vector<128x4xf32>
    %c0_19 = arith.constant 0 : index
    %c0_20 = arith.constant 0 : index
    %c0_21 = arith.constant 0 : index
    %22 = vector.load %arg10[%c0_19, %c0_20, %c0_21] : memref<10x18x4xf32, #tpu.memory_space<vmem>>, vector<8x16x4xf32>
    %23 = vector.shape_cast %22 : vector<8x16x4xf32> to vector<128x4xf32>
    %c0_22 = arith.constant 0 : index
    %c0_23 = arith.constant 0 : index
    %24 = vector.load %arg5[%c0_22, %c0_23] : memref<36x4xf32, #tpu.memory_space<vmem>>, vector<4x4xf32>
    %cst_24 = arith.constant dense<0.000000e+00> : vector<128x4xf32>
    %25 = tpu.matmul %23, %24, %cst_24 {dimension_numbers = #tpu.dot_dimension_numbers<[1], [0], [0], [1], [0, 0, 1, 1], [], []>} : vector<128x4xf32>, vector<4x4xf32>, vector<128x4xf32> -> vector<128x4xf32>
    %26 = arith.addf %21, %25 : vector<128x4xf32>
    %c0_25 = arith.constant 0 : index
    %c1_26 = arith.constant 1 : index
    %c0_27 = arith.constant 0 : index
    %27 = vector.load %arg10[%c0_25, %c1_26, %c0_27] : memref<10x18x4xf32, #tpu.memory_space<vmem>>, vector<8x16x4xf32>
    %28 = vector.shape_cast %27 : vector<8x16x4xf32> to vector<128x4xf32>
    %c4 = arith.constant 4 : index
    %c0_28 = arith.constant 0 : index
    %29 = vector.load %arg5[%c4, %c0_28] : memref<36x4xf32, #tpu.memory_space<vmem>>, vector<4x4xf32>
    %cst_29 = arith.constant dense<0.000000e+00> : vector<128x4xf32>
    %30 = tpu.matmul %28, %29, %cst_29 {dimension_numbers = #tpu.dot_dimension_numbers<[1], [0], [0], [1], [0, 0, 1, 1], [], []>} : vector<128x4xf32>, vector<4x4xf32>, vector<128x4xf32> -> vector<128x4xf32>
    %31 = arith.addf %26, %30 : vector<128x4xf32>
    %c0_30 = arith.constant 0 : index
    %c2 = arith.constant 2 : index
    %c0_31 = arith.constant 0 : index
    %32 = vector.load %arg10[%c0_30, %c2, %c0_31] : memref<10x18x4xf32, #tpu.memory_space<vmem>>, vector<8x16x4xf32>
    %33 = vector.shape_cast %32 : vector<8x16x4xf32> to vector<128x4xf32>
    %c8 = arith.constant 8 : index
    %c0_32 = arith.constant 0 : index
    %34 = vector.load %arg5[%c8, %c0_32] : memref<36x4xf32, #tpu.memory_space<vmem>>, vector<4x4xf32>
    %cst_33 = arith.constant dense<0.000000e+00> : vector<128x4xf32>
    %35 = tpu.matmul %33, %34, %cst_33 {dimension_numbers = #tpu.dot_dimension_numbers<[1], [0], [0], [1], [0, 0, 1, 1], [], []>} : vector<128x4xf32>, vector<4x4xf32>, vector<128x4xf32> -> vector<128x4xf32>
    %36 = arith.addf %31, %35 : vector<128x4xf32>
    %c1_34 = arith.constant 1 : index
    %c0_35 = arith.constant 0 : index
    %c0_36 = arith.constant 0 : index
    %37 = vector.load %arg10[%c1_34, %c0_35, %c0_36] : memref<10x18x4xf32, #tpu.memory_space<vmem>>, vector<8x16x4xf32>
    %38 = vector.shape_cast %37 : vector<8x16x4xf32> to vector<128x4xf32>
    %c12 = arith.constant 12 : index
    %c0_37 = arith.constant 0 : index
    %39 = vector.load %arg5[%c12, %c0_37] : memref<36x4xf32, #tpu.memory_space<vmem>>, vector<4x4xf32>
    %cst_38 = arith.constant dense<0.000000e+00> : vector<128x4xf32>
    %40 = tpu.matmul %38, %39, %cst_38 {dimension_numbers = #tpu.dot_dimension_numbers<[1], [0], [0], [1], [0, 0, 1, 1], [], []>} : vector<128x4xf32>, vector<4x4xf32>, vector<128x4xf32> -> vector<128x4xf32>
    %41 = arith.addf %36, %40 : vector<128x4xf32>
    %c1_39 = arith.constant 1 : index
    %c1_40 = arith.constant 1 : index
    %c0_41 = arith.constant 0 : index
    %42 = vector.load %arg10[%c1_39, %c1_40, %c0_41] : memref<10x18x4xf32, #tpu.memory_space<vmem>>, vector<8x16x4xf32>
    %43 = vector.shape_cast %42 : vector<8x16x4xf32> to vector<128x4xf32>
    %c16 = arith.constant 16 : index
    %c0_42 = arith.constant 0 : index
    %44 = vector.load %arg5[%c16, %c0_42] : memref<36x4xf32, #tpu.memory_space<vmem>>, vector<4x4xf32>
    %cst_43 = arith.constant dense<0.000000e+00> : vector<128x4xf32>
    %45 = tpu.matmul %43, %44, %cst_43 {dimension_numbers = #tpu.dot_dimension_numbers<[1], [0], [0], [1], [0, 0, 1, 1], [], []>} : vector<128x4xf32>, vector<4x4xf32>, vector<128x4xf32> -> vector<128x4xf32>
    %46 = arith.addf %41, %45 : vector<128x4xf32>
    %c1_44 = arith.constant 1 : index
    %c2_45 = arith.constant 2 : index
    %c0_46 = arith.constant 0 : index
    %47 = vector.load %arg10[%c1_44, %c2_45, %c0_46] : memref<10x18x4xf32, #tpu.memory_space<vmem>>, vector<8x16x4xf32>
    %48 = vector.shape_cast %47 : vector<8x16x4xf32> to vector<128x4xf32>
    %c20 = arith.constant 20 : index
    %c0_47 = arith.constant 0 : index
    %49 = vector.load %arg5[%c20, %c0_47] : memref<36x4xf32, #tpu.memory_space<vmem>>, vector<4x4xf32>
    %cst_48 = arith.constant dense<0.000000e+00> : vector<128x4xf32>
    %50 = tpu.matmul %48, %49, %cst_48 {dimension_numbers = #tpu.dot_dimension_numbers<[1], [0], [0], [1], [0, 0, 1, 1], [], []>} : vector<128x4xf32>, vector<4x4xf32>, vector<128x4xf32> -> vector<128x4xf32>
    %51 = arith.addf %46, %50 : vector<128x4xf32>
    %c2_49 = arith.constant 2 : index
    %c0_50 = arith.constant 0 : index
    %c0_51 = arith.constant 0 : index
    %52 = vector.load %arg10[%c2_49, %c0_50, %c0_51] : memref<10x18x4xf32, #tpu.memory_space<vmem>>, vector<8x16x4xf32>
    %53 = vector.shape_cast %52 : vector<8x16x4xf32> to vector<128x4xf32>
    %c24 = arith.constant 24 : index
    %c0_52 = arith.constant 0 : index
    %54 = vector.load %arg5[%c24, %c0_52] : memref<36x4xf32, #tpu.memory_space<vmem>>, vector<4x4xf32>
    %cst_53 = arith.constant dense<0.000000e+00> : vector<128x4xf32>
    %55 = tpu.matmul %53, %54, %cst_53 {dimension_numbers = #tpu.dot_dimension_numbers<[1], [0], [0], [1], [0, 0, 1, 1], [], []>} : vector<128x4xf32>, vector<4x4xf32>, vector<128x4xf32> -> vector<128x4xf32>
    %56 = arith.addf %51, %55 : vector<128x4xf32>
    %c2_54 = arith.constant 2 : index
    %c1_55 = arith.constant 1 : index
    %c0_56 = arith.constant 0 : index
    %57 = vector.load %arg10[%c2_54, %c1_55, %c0_56] : memref<10x18x4xf32, #tpu.memory_space<vmem>>, vector<8x16x4xf32>
    %58 = vector.shape_cast %57 : vector<8x16x4xf32> to vector<128x4xf32>
    %c28 = arith.constant 28 : index
    %c0_57 = arith.constant 0 : index
    %59 = vector.load %arg5[%c28, %c0_57] : memref<36x4xf32, #tpu.memory_space<vmem>>, vector<4x4xf32>
    %cst_58 = arith.constant dense<0.000000e+00> : vector<128x4xf32>
    %60 = tpu.matmul %58, %59, %cst_58 {dimension_numbers = #tpu.dot_dimension_numbers<[1], [0], [0], [1], [0, 0, 1, 1], [], []>} : vector<128x4xf32>, vector<4x4xf32>, vector<128x4xf32> -> vector<128x4xf32>
    %61 = arith.addf %56, %60 : vector<128x4xf32>
    %c2_59 = arith.constant 2 : index
    %c2_60 = arith.constant 2 : index
    %c0_61 = arith.constant 0 : index
    %62 = vector.load %arg10[%c2_59, %c2_60, %c0_61] : memref<10x18x4xf32, #tpu.memory_space<vmem>>, vector<8x16x4xf32>
    %63 = vector.shape_cast %62 : vector<8x16x4xf32> to vector<128x4xf32>
    %c32 = arith.constant 32 : index
    %c0_62 = arith.constant 0 : index
    %64 = vector.load %arg5[%c32, %c0_62] : memref<36x4xf32, #tpu.memory_space<vmem>>, vector<4x4xf32>
    %cst_63 = arith.constant dense<0.000000e+00> : vector<128x4xf32>
    %65 = tpu.matmul %63, %64, %cst_63 {dimension_numbers = #tpu.dot_dimension_numbers<[1], [0], [0], [1], [0, 0, 1, 1], [], []>} : vector<128x4xf32>, vector<4x4xf32>, vector<128x4xf32> -> vector<128x4xf32>
    %66 = arith.addf %61, %65 : vector<128x4xf32>
    %c0_64 = arith.constant 0 : index
    %c0_65 = arith.constant 0 : index
    %67 = vector.load %arg6[%c0_64, %c0_65] : memref<1x4xf32, #tpu.memory_space<vmem>>, vector<1x4xf32>
    %68 = vector.broadcast %67 : vector<1x4xf32> to vector<128x4xf32>
    %69 = arith.addf %66, %68 : vector<128x4xf32>
    %cst_66 = arith.constant 0.000000e+00 : f32
    %70 = vector.broadcast %cst_66 : f32 to vector<128x4xf32>
    %71 = arith.maximumf %69, %70 : vector<128x4xf32>
    %c0_67 = arith.constant 0 : index
    %c0_68 = arith.constant 0 : index
    %72 = vector.load %arg7[%c0_67, %c0_68] : memref<4x4xf32, #tpu.memory_space<vmem>>, vector<4x4xf32>
    %cst_69 = arith.constant dense<0.000000e+00> : vector<128x4xf32>
    %73 = tpu.matmul %71, %72, %cst_69 {dimension_numbers = #tpu.dot_dimension_numbers<[1], [0], [0], [1], [0, 0, 1, 1], [], []>} : vector<128x4xf32>, vector<4x4xf32>, vector<128x4xf32> -> vector<128x4xf32>
    %c0_70 = arith.constant 0 : index
    %c0_71 = arith.constant 0 : index
    %74 = vector.load %arg8[%c0_70, %c0_71] : memref<1x4xf32, #tpu.memory_space<vmem>>, vector<1x4xf32>
    %75 = vector.broadcast %74 : vector<1x4xf32> to vector<128x4xf32>
    %76 = arith.addf %73, %75 : vector<128x4xf32>
    %c0_72 = arith.constant 0 : index
    %c0_73 = arith.constant 0 : index
    %c0_74 = arith.constant 0 : index
    %c0_75 = arith.constant 0 : index
    %77 = vector.load %arg2[%c0_72, %c0_73, %c0_74, %c0_75] : memref<1x8x16x4xf32, #tpu.memory_space<vmem>>, vector<1x8x16x4xf32>
    %78 = vector.shape_cast %77 : vector<1x8x16x4xf32> to vector<8x16x4xf32>
    %79 = vector.shape_cast %78 : vector<8x16x4xf32> to vector<128x4xf32>
    %80 = arith.addf %79, %76 : vector<128x4xf32>
    %81 = vector.shape_cast %80 : vector<128x4xf32> to vector<1x8x16x4xf32>
    %c0_76 = arith.constant 0 : index
    %c0_77 = arith.constant 0 : index
    %c0_78 = arith.constant 0 : index
    %c0_79 = arith.constant 0 : index
    %82 = vector.load %arg9[%c0_76, %c0_77, %c0_78, %c0_79] : memref<1x8x16x4xf32, #tpu.memory_space<vmem>>, vector<1x8x16x4xf32>
    tpu.vector_store %arg9[%c0_76, %c0_77, %c0_78, %c0_79], %81 {strides = array<i32>} : memref<1x8x16x4xf32, #tpu.memory_space<vmem>>, vector<1x8x16x4xf32>,
    return
  }
  func.func @transform_0(%arg0: i32, %arg1: i32) -> (i32, i32, i32, i32) {
    %c0_i32 = arith.constant 0 : i32
    %c0_i32_0 = arith.constant 0 : i32
    %c0_i32_1 = arith.constant 0 : i32
    return %arg0, %arg1, %c0_i32, %c0_i32_0 : i32, i32, i32, i32
  }
  func.func @transform_1(%arg0: i32, %arg1: i32) -> (i32, i32, i32, i32) {
    %c8_i32 = arith.constant 8 : i32
    %0 = arith.muli %arg1, %c8_i32 : i32
    %c1_i32 = arith.constant 1 : i32
    %1 = arith.subi %0, %c1_i32 : i32
    %c0_i32 = arith.constant 0 : i32
    %2 = arith.maxsi %1, %c0_i32 : i32
    %c0_i32_0 = arith.constant 0 : i32
    %c0_i32_1 = arith.constant 0 : i32
    %c0_i32_2 = arith.constant 0 : i32
    return %arg0, %2, %c0_i32_0, %c0_i32_1 : i32, i32, i32, i32
  }
  func.func @transform_2(%arg0: i32, %arg1: i32) -> (i32, i32, i32, i32) {
    %c1_i32 = arith.constant 1 : i32
    %0 = arith.addi %arg1, %c1_i32 : i32
    %c8_i32 = arith.constant 8 : i32
    %1 = arith.muli %0, %c8_i32 : i32
    %c15_i32 = arith.constant 15 : i32
    %2 = arith.minsi %1, %c15_i32 : i32
    %c0_i32 = arith.constant 0 : i32
    %c0_i32_0 = arith.constant 0 : i32
    %c0_i32_1 = arith.constant 0 : i32
    return %arg0, %2, %c0_i32, %c0_i32_0 : i32, i32, i32, i32
  }
  func.func @transform_3(%arg0: i32, %arg1: i32) -> (i32, i32) {
    %c0_i32 = arith.constant 0 : i32
    %c0_i32_0 = arith.constant 0 : i32
    %c0_i32_1 = arith.constant 0 : i32
    return %c0_i32, %c0_i32_0 : i32, i32
  }
  func.func @transform_4(%arg0: i32, %arg1: i32) -> (i32, i32) {
    %c0_i32 = arith.constant 0 : i32
    %c0_i32_0 = arith.constant 0 : i32
    %c0_i32_1 = arith.constant 0 : i32
    return %c0_i32, %c0_i32_0 : i32, i32
  }
  func.func @transform_5(%arg0: i32, %arg1: i32) -> (i32, i32) {
    %c0_i32 = arith.constant 0 : i32
    %c0_i32_0 = arith.constant 0 : i32
    %c0_i32_1 = arith.constant 0 : i32
    return %c0_i32, %c0_i32_0 : i32, i32
  }
  func.func @transform_6(%arg0: i32, %arg1: i32) -> (i32, i32) {
    %c0_i32 = arith.constant 0 : i32
    %c0_i32_0 = arith.constant 0 : i32
    %c0_i32_1 = arith.constant 0 : i32
    return %c0_i32, %c0_i32_0 : i32, i32
  }
  func.func @transform_7(%arg0: i32, %arg1: i32) -> (i32, i32, i32, i32) {
    %c0_i32 = arith.constant 0 : i32
    %c0_i32_0 = arith.constant 0 : i32
    %c0_i32_1 = arith.constant 0 : i32
    return %arg0, %arg1, %c0_i32, %c0_i32_0 : i32, i32, i32, i32
  }
}

</mosaic_0001>

<llo_original>
// kernel: tpu_custom_call.1
$region0: #{tpu_custom_call.1}
  #allocation0 [shape = 'u32[]', space=smem, size = 0x4, offset = 0x4, fixed_abs, tag = 'smem constant byte address 0x4 - core index']
  #allocation1 [shape = 'u32[144,128]{1,0:T(1,128)}', space=vmem, size = 0x12000, scoped, tag = 'internal scratch']
  #allocation2 [shape = 'f32[10,18,4]{2,1,0:T(8,128)}', space=vmem, size = 0x1e000, scoped, tag = 'scratch operand']
  %s0 = inlined_call_operand.vmem [shape: f32[2,16,16,4], index: 0, kind: input, shape index: {}]
  %s1 = inlined_call_operand.vmem [shape: f32[2,16,16,4], index: 1, kind: input, shape index: {}]
  %s2 = inlined_call_operand.vmem [shape: f32[2,16,16,4], index: 2, kind: input, shape index: {}]
  %s3 = inlined_call_operand.vmem [shape: f32[36,4], index: 3, kind: input, shape index: {}]
  %s4 = inlined_call_operand.vmem [shape: f32[1,4], index: 4, kind: input, shape index: {}]
  %s5 = inlined_call_operand.vmem [shape: f32[4,4], index: 5, kind: input, shape index: {}]
  %s6 = inlined_call_operand.vmem [shape: f32[1,4], index: 6, kind: input, shape index: {}]
  %s7 = inlined_call_operand.vmem [shape: f32[2,16,16,4], index: 7, kind: output, shape index: {}]
  %s8 = sld [smem:[#allocation0]]
  $region77: #{tpu_custom_call.1} parent=0
    _
  %s10 = ssub.s32 1, %s8
  %s11 = scalar_select 0, %s10, %s8
  loop: start=0, step=1, limit=6
  $region2: #{tpu_custom_call.1} parent=0 // loop_pre_header
    _
  $region3: #{tpu_custom_call.1} parent=0 // loop_header
    %s13 = sphi 0, %s17
    %p14 = scmp.ge.s32.totalorder %s13, 6
    %s20 = sphi 0, %s32
    %s21 = sphi 0, %s28
    %s22 = sphi 0, %s20
    %s23 = sphi 0, %s21
    %s24 = sphi 0, %s22
    %s25 = sphi 0, %s23
    %s37 = sphi 0, %s39
    %s40 = sphi 0, %s37
    %s41 = sphi 0, %s40
    %s57 = sphi 0, %s41
    %s73 = sphi 0, %s75
    %s76 = sphi 0, %s73
    %s77 = sphi 0, %s76
    %s93 = sphi 0, %s77
    %s109 = sphi 0, %s111
    %s112 = sphi 0, %s109
    %s113 = sphi 0, %s112
    %s129 = sphi 0, %s113
    %s133 = sphi 0, %s133
    %s135 = sphi 0, %s133
    %s136 = sphi 0, %s135
    %s150 = sphi 0, %s136
    %s154 = sphi 0, %s154
    %s156 = sphi 0, %s154
    %s157 = sphi 0, %s156
    %s171 = sphi 0, %s157
    %s175 = sphi 0, %s175
    %s177 = sphi 0, %s175
    %s178 = sphi 0, %s177
    %s192 = sphi 0, %s178
    %s196 = sphi 0, %s196
    %s198 = sphi 0, %s196
    %s199 = sphi 0, %s198
    %s213 = sphi 0, %s199
    %s221 = sphi 0, %s223
    %s224 = sphi 0, %s221
    %s225 = sphi 0, %s224
    %s241 = sphi 0, %s225
  $region4: #{tpu_custom_call.1} parent=0 // loop_header_branch
    %16 = sbr.rel (%p14) target = $region8
  $region5: #{tpu_custom_call.1} parent=0 // loop_body
    %s18 = ssub.s32 %s13, 1
    %s19 = ssub.s32 %s13, 2
    %s26 = sadd.s32 1, %s21
    %p27 = scmp.ge.s32.totalorder %s26, 2
    %s28 = scalar_select %p27, 0, %s26
    %s29 = sadd.s32 1, %s20
    %s30 = scalar_select %p27, %s29, %s20
    %p31 = scmp.ge.s32.totalorder %s30, 2
    %s32 = scalar_select %p31, 0, %s30
    %s33 = ssub.s32 %s20, %s32
    %s34 = ssub.s32 %s21, %s28
    %s35 = sor.u32 %s33, %s34
    %p36 = scmp.eq.s32.totalorder %s35, 0
    %s38 = sadd.s32 %s37, 1
    %s39 = scalar_select %p36, %s37, %s38
    %p42 = pneg %p36
    %p43 = scmp.eq.s32.totalorder %s13, 3
    %p44 = por %p42, %p43
    %p45 = scmp.ne.s32.totalorder %s37, %s40
    %p46 = scmp.eq.s32.totalorder %s13, 0
    %p47 = por %p45, %p46
    %p48 = scmp.ne.s32.totalorder %s37, %s40
    %p49 = scmp.eq.s32.totalorder %s18, 3
    %p50 = por %p48, %p49
    %p51 = scmp.ne.s32.totalorder %s40, %s41
    %p52 = scmp.eq.s32.totalorder %s18, 0
    %p53 = por %p51, %p52
    %p54 = scmp.ne.s32.totalorder %s40, %s41
    %p55 = scmp.eq.s32.totalorder %s19, 3
    %p56 = por %p54, %p55
    %p58 = scmp.ne.s32.totalorder %s41, %s57
    %p59 = scmp.eq.s32.totalorder %s19, 0
    %p60 = por %p58, %p59
    %s61 = smul.u32 %s21, 8
    %s62 = ssub.s32 %s61, 1
    %p63 = scmp.gt.s32.totalorder %s62, 0
    %s64 = scalar_select %p63, %s62, 0
    %s65 = smul.u32 %s28, 8
    %s66 = ssub.s32 %s65, 1
    %p67 = scmp.gt.s32.totalorder %s66, 0
    %s68 = scalar_select %p67, %s66, 0
    %s69 = ssub.s32 %s20, %s32
    %s70 = ssub.s32 %s64, %s68
    %s71 = sor.u32 %s69, %s70
    %p72 = scmp.eq.s32.totalorder %s71, 0
    %s74 = sadd.s32 %s73, 1
    %s75 = scalar_select %p72, %s73, %s74
    %p78 = pneg %p72
    %p79 = scmp.eq.s32.totalorder %s13, 3
    %p80 = por %p78, %p79
    %p81 = scmp.ne.s32.totalorder %s73, %s76
    %p82 = scmp.eq.s32.totalorder %s13, 0
    %p83 = por %p81, %p82
    %p84 = scmp.ne.s32.totalorder %s73, %s76
    %p85 = scmp.eq.s32.totalorder %s18, 3
    %p86 = por %p84, %p85
    %p87 = scmp.ne.s32.totalorder %s76, %s77
    %p88 = scmp.eq.s32.totalorder %s18, 0
    %p89 = por %p87, %p88
    %p90 = scmp.ne.s32.totalorder %s76, %s77
    %p91 = scmp.eq.s32.totalorder %s19, 3
    %p92 = por %p90, %p91
    %p94 = scmp.ne.s32.totalorder %s77, %s93
    %p95 = scmp.eq.s32.totalorder %s19, 0
    %p96 = por %p94, %p95
    %s97 = sadd.s32 %s21, 1
    %s98 = smul.u32 %s97, 8
    %p99 = scmp.lt.s32.totalorder %s98, 15
    %s100 = scalar_select %p99, %s98, 15
    %s101 = sadd.s32 %s28, 1
    %s102 = smul.u32 %s101, 8
    %p103 = scmp.lt.s32.totalorder %s102, 15
    %s104 = scalar_select %p103, %s102, 15
    %s105 = ssub.s32 %s20, %s32
    %s106 = ssub.s32 %s100, %s104
    %s107 = sor.u32 %s105, %s106
    %p108 = scmp.eq.s32.totalorder %s107, 0
    %s110 = sadd.s32 %s109, 1
    %s111 = scalar_select %p108, %s109, %s110
    %p114 = pneg %p108
    %p115 = scmp.eq.s32.totalorder %s13, 3
    %p116 = por %p114, %p115
    %p117 = scmp.ne.s32.totalorder %s109, %s112
    %p118 = scmp.eq.s32.totalorder %s13, 0
    %p119 = por %p117, %p118
    %p120 = scmp.ne.s32.totalorder %s109, %s112
    %p121 = scmp.eq.s32.totalorder %s18, 3
    %p122 = por %p120, %p121
    %p123 = scmp.ne.s32.totalorder %s112, %s113
    %p124 = scmp.eq.s32.totalorder %s18, 0
    %p125 = por %p123, %p124
    %p126 = scmp.ne.s32.totalorder %s112, %s113
    %p127 = scmp.eq.s32.totalorder %s19, 3
    %p128 = por %p126, %p127
    %p130 = scmp.ne.s32.totalorder %s113, %s129
    %p131 = scmp.eq.s32.totalorder %s19, 0
    %p132 = por %p130, %p131
    %s134 = sadd.s32 %s133, 1
    %p137 = scmp.eq.s32.totalorder %s13, 3
    %p138 = scmp.ne.s32.totalorder %s133, %s135
    %p139 = scmp.eq.s32.totalorder %s13, 0
    %p140 = por %p138, %p139
    %p141 = scmp.ne.s32.totalorder %s133, %s135
    %p142 = scmp.eq.s32.totalorder %s18, 3
    %p143 = por %p141, %p142
    %p144 = scmp.ne.s32.totalorder %s135, %s136
    %p145 = scmp.eq.s32.totalorder %s18, 0
    %p146 = por %p144, %p145
    %p147 = scmp.ne.s32.totalorder %s135, %s136
    %p148 = scmp.eq.s32.totalorder %s19, 3
    %p149 = por %p147, %p148
    %p151 = scmp.ne.s32.totalorder %s136, %s150
    %p152 = scmp.eq.s32.totalorder %s19, 0
    %p153 = por %p151, %p152
    %s155 = sadd.s32 %s154, 1
    %p158 = scmp.eq.s32.totalorder %s13, 3
    %p159 = scmp.ne.s32.totalorder %s154, %s156
    %p160 = scmp.eq.s32.totalorder %s13, 0
    %p161 = por %p159, %p160
    %p162 = scmp.ne.s32.totalorder %s154, %s156
    %p163 = scmp.eq.s32.totalorder %s18, 3
    %p164 = por %p162, %p163
    %p165 = scmp.ne.s32.totalorder %s156, %s157
    %p166 = scmp.eq.s32.totalorder %s18, 0
    %p167 = por %p165, %p166
    %p168 = scmp.ne.s32.totalorder %s156, %s157
    %p169 = scmp.eq.s32.totalorder %s19, 3
    %p170 = por %p168, %p169
    %p172 = scmp.ne.s32.totalorder %s157, %s171
    %p173 = scmp.eq.s32.totalorder %s19, 0
    %p174 = por %p172, %p173
    %s176 = sadd.s32 %s175, 1
    %p179 = scmp.eq.s32.totalorder %s13, 3
    %p180 = scmp.ne.s32.totalorder %s175, %s177
    %p181 = scmp.eq.s32.totalorder %s13, 0
    %p182 = por %p180, %p181
    %p183 = scmp.ne.s32.totalorder %s175, %s177
    %p184 = scmp.eq.s32.totalorder %s18, 3
    %p185 = por %p183, %p184
    %p186 = scmp.ne.s32.totalorder %s177, %s178
    %p187 = scmp.eq.s32.totalorder %s18, 0
    %p188 = por %p186, %p187
    %p189 = scmp.ne.s32.totalorder %s177, %s178
    %p190 = scmp.eq.s32.totalorder %s19, 3
    %p191 = por %p189, %p190
    %p193 = scmp.ne.s32.totalorder %s178, %s192
    %p194 = scmp.eq.s32.totalorder %s19, 0
    %p195 = por %p193, %p194
    %s197 = sadd.s32 %s196, 1
    %p200 = scmp.eq.s32.totalorder %s13, 3
    %p201 = scmp.ne.s32.totalorder %s196, %s198
    %p202 = scmp.eq.s32.totalorder %s13, 0
    %p203 = por %p201, %p202
    %p204 = scmp.ne.s32.totalorder %s196, %s198
    %p205 = scmp.eq.s32.totalorder %s18, 3
    %p206 = por %p204, %p205
    %p207 = scmp.ne.s32.totalorder %s198, %s199
    %p208 = scmp.eq.s32.totalorder %s18, 0
    %p209 = por %p207, %p208
    %p210 = scmp.ne.s32.totalorder %s198, %s199
    %p211 = scmp.eq.s32.totalorder %s19, 3
    %p212 = por %p210, %p211
    %p214 = scmp.ne.s32.totalorder %s199, %s213
    %p215 = scmp.eq.s32.totalorder %s19, 0
    %p216 = por %p214, %p215
    %s217 = ssub.s32 %s20, %s32
    %s218 = ssub.s32 %s21, %s28
    %s219 = sor.u32 %s217, %s218
    %p220 = scmp.eq.s32.totalorder %s219, 0
    %s222 = sadd.s32 %s221, 1
    %s223 = scalar_select %p220, %s221, %s222
    %p226 = pneg %p220
    %p227 = scmp.eq.s32.totalorder %s13, 3
    %p228 = por %p226, %p227
    %p229 = scmp.ne.s32.totalorder %s221, %s224
    %p230 = scmp.eq.s32.totalorder %s13, 0
    %p231 = por %p229, %p230
    %p232 = scmp.ne.s32.totalorder %s221, %s224
    %p233 = scmp.eq.s32.totalorder %s18, 3
    %p234 = por %p232, %p233
    %p235 = scmp.ne.s32.totalorder %s224, %s225
    %p236 = scmp.eq.s32.totalorder %s18, 0
    %p237 = por %p235, %p236
    %p238 = scmp.ne.s32.totalorder %s224, %s225
    %p239 = scmp.eq.s32.totalorder %s19, 3
    %p240 = por %p238, %p239
    %p242 = scmp.ne.s32.totalorder %s225, %s241
    %p243 = scmp.eq.s32.totalorder %s19, 0
    %p244 = por %p242, %p243
    %p245 = scmp.le.s32.totalorder 1, %s13
    %p246 = scmp.lt.s32.totalorder %s13, 5
    %p247 = pnand %p245, %p246
    %p248 = pneg %p247
    // Predicated region
    $region9: #{tpu_custom_call.1} parent=5 // pred_check
      _
    $region10: #{tpu_custom_call.1} parent=5 // pred_check_branch
      %250 = sbr.rel (%p247) target = $region12
    $region11: #{tpu_custom_call.1} parent=5 // pred_region
      %s251 = ssub.s32 %s13, 1
      // Predicated region
      $region13: #{tpu_custom_call.1} parent=11 // pred_check
        %p252 = pneg %p146
      $region14: #{tpu_custom_call.1} parent=11 // pred_check_branch
        %254 = sbr.rel (%p252) target = $region16
      $region15: #{tpu_custom_call.1} parent=11 // pred_region
        _
      $region16: #{tpu_custom_call.1} parent=11 // pred_fallthru
        _
      // Predicated region
      $region17: #{tpu_custom_call.1} parent=11 // pred_check
        %p255 = pneg %p167
      $region18: #{tpu_custom_call.1} parent=11 // pred_check_branch
        %257 = sbr.rel (%p255) target = $region20
      $region19: #{tpu_custom_call.1} parent=11 // pred_region
        _
      $region20: #{tpu_custom_call.1} parent=11 // pred_fallthru
        _
      // Predicated region
      $region21: #{tpu_custom_call.1} parent=11 // pred_check
        %p258 = pneg %p188
      $region22: #{tpu_custom_call.1} parent=11 // pred_check_branch
        %260 = sbr.rel (%p258) target = $region24
      $region23: #{tpu_custom_call.1} parent=11 // pred_region
        _
      $region24: #{tpu_custom_call.1} parent=11 // pred_fallthru
        _
      // Predicated region
      $region25: #{tpu_custom_call.1} parent=11 // pred_check
        %p261 = pneg %p209
      $region26: #{tpu_custom_call.1} parent=11 // pred_check_branch
        %263 = sbr.rel (%p261) target = $region28
      $region27: #{tpu_custom_call.1} parent=11 // pred_region
        _
      $region28: #{tpu_custom_call.1} parent=11 // pred_fallthru
        _
    $region12: #{tpu_custom_call.1} parent=5 // pred_fallthru
      _
    %p264 = scmp.lt.s32.totalorder %s13, 4
    // Predicated region
    $region29: #{tpu_custom_call.1} parent=5 // pred_check
      %p265 = pneg %p264
    $region30: #{tpu_custom_call.1} parent=5 // pred_check_branch
      %267 = sbr.rel (%p265) target = $region32
    $region31: #{tpu_custom_call.1} parent=5 // pred_region
      // Predicated region
      $region33: #{tpu_custom_call.1} parent=31 // pred_check
        %p268 = pneg %p47
      $region34: #{tpu_custom_call.1} parent=31 // pred_check_branch
        %270 = sbr.rel (%p268) target = $region36
      $region35: #{tpu_custom_call.1} parent=31 // pred_region
        %s271 = smul.u32 8, %s21
        %p272 = scmp.lt.s32.totalorder %s20, 1
        %s273 = scalar_select %p272, %s20, 1
        %p274 = scmp.lt.s32.totalorder %s271, 15
        %s275 = scalar_select %p274, %s271, 15
        %s276 = smul.addr %s275, 2
        %s277 = smul.addr %s273, 32
        %s278 = sadd.s32 %s276, %s277
        %s279 = smul.addr %s278, 8
        %s280 = scalar_lea.vmem %s0, %s279
        %s281 = smul.u32 8, %s21
      $region36: #{tpu_custom_call.1} parent=31 // pred_fallthru
        _
      // Predicated region
      $region37: #{tpu_custom_call.1} parent=31 // pred_check
        %p282 = pneg %p83
      $region38: #{tpu_custom_call.1} parent=31 // pred_check_branch
        %284 = sbr.rel (%p282) target = $region40
      $region39: #{tpu_custom_call.1} parent=31 // pred_region
        %s285 = smul.u32 %s21, 8
        %s286 = ssub.s32 %s285, 1
        %p287 = scmp.gt.s32.totalorder %s286, 0
        %s288 = scalar_select %p287, %s286, 0
        %p289 = scmp.lt.s32.totalorder %s20, 1
        %s290 = scalar_select %p289, %s20, 1
        %p291 = scmp.lt.s32.totalorder %s288, 15
        %s292 = scalar_select %p291, %s288, 15
        %s293 = smul.addr %s292, 2
        %s294 = smul.addr %s290, 32
        %s295 = sadd.s32 %s293, %s294
        %s296 = smul.addr %s295, 8
        %s297 = scalar_lea.vmem %s1, %s296
        %s298 = smul.u32 %s21, 8
        %s299 = ssub.s32 %s298, 1
        %p300 = scmp.gt.s32.totalorder %s299, 0
        %s301 = scalar_select %p300, %s299, 0
      $region40: #{tpu_custom_call.1} parent=31 // pred_fallthru
        _
      // Predicated region
      $region41: #{tpu_custom_call.1} parent=31 // pred_check
        %p302 = pneg %p119
      $region42: #{tpu_custom_call.1} parent=31 // pred_check_branch
        %304 = sbr.rel (%p302) target = $region44
      $region43: #{tpu_custom_call.1} parent=31 // pred_region
        %s305 = sadd.s32 %s21, 1
        %s306 = smul.u32 %s305, 8
        %p307 = scmp.lt.s32.totalorder %s306, 15
        %s308 = scalar_select %p307, %s306, 15
        %p309 = scmp.lt.s32.totalorder %s20, 1
        %s310 = scalar_select %p309, %s20, 1
        %p311 = scmp.lt.s32.totalorder %s308, 15
        %s312 = scalar_select %p311, %s308, 15
        %s313 = smul.addr %s312, 2
        %s314 = smul.addr %s310, 32
        %s315 = sadd.s32 %s313, %s314
        %s316 = smul.addr %s315, 8
        %s317 = scalar_lea.vmem %s2, %s316
        %s318 = sadd.s32 %s21, 1
        %s319 = smul.u32 %s318, 8
        %p320 = scmp.lt.s32.totalorder %s319, 15
        %s321 = scalar_select %p320, %s319, 15
      $region44: #{tpu_custom_call.1} parent=31 // pred_fallthru
        _
    $region32: #{tpu_custom_call.1} parent=5 // pred_fallthru
      _
    %p322 = scmp.le.s32.totalorder 1, %s13
    %p323 = scmp.lt.s32.totalorder %s13, 5
    %p324 = pnand %p322, %p323
    %p325 = pneg %p324
    // Predicated region
    $region45: #{tpu_custom_call.1} parent=5 // pred_check
      _
    $region46: #{tpu_custom_call.1} parent=5 // pred_check_branch
      %327 = sbr.rel (%p324) target = $region48
    $region47: #{tpu_custom_call.1} parent=5 // pred_region
      %s328 = ssub.s32 %s13, 1
      %s329 = smul.u32 8, %s23
      %p330 = scmp.lt.s32.totalorder %s22, 1
      %s331 = scalar_select %p330, %s22, 1
      %p332 = scmp.lt.s32.totalorder %s329, 15
      %s333 = scalar_select %p332, %s329, 15
      %s334 = smul.addr %s333, 2
      %s335 = smul.addr %s331, 32
      %s336 = sadd.s32 %s334, %s335
      %s337 = smul.addr %s336, 8
      %s338 = scalar_lea.vmem %s0, %s337
      %p339 = pneg %p53
      %p340 = pneg %p50
      %s341 = smul.u32 %s23, 8
      %s342 = ssub.s32 %s341, 1
      %p343 = scmp.gt.s32.totalorder %s342, 0
      %s344 = scalar_select %p343, %s342, 0
      %p345 = scmp.lt.s32.totalorder %s22, 1
      %s346 = scalar_select %p345, %s22, 1
      %p347 = scmp.lt.s32.totalorder %s344, 15
      %s348 = scalar_select %p347, %s344, 15
      %s349 = smul.addr %s348, 2
      %s350 = smul.addr %s346, 32
      %s351 = sadd.s32 %s349, %s350
      %s352 = smul.addr %s351, 8
      %s353 = scalar_lea.vmem %s1, %s352
      %p354 = pneg %p89
      %p355 = pneg %p86
      %s356 = sadd.s32 %s23, 1
      %s357 = smul.u32 %s356, 8
      %p358 = scmp.lt.s32.totalorder %s357, 15
      %s359 = scalar_select %p358, %s357, 15
      %p360 = scmp.lt.s32.totalorder %s22, 1
      %s361 = scalar_select %p360, %s22, 1
      %p362 = scmp.lt.s32.totalorder %s359, 15
      %s363 = scalar_select %p362, %s359, 15
      %s364 = smul.addr %s363, 2
      %s365 = smul.addr %s361, 32
      %s366 = sadd.s32 %s364, %s365
      %s367 = smul.addr %s366, 8
      %s368 = scalar_lea.vmem %s2, %s367
      %p369 = pneg %p125
      %p370 = pneg %p122
      %p371 = pneg %p146
      %p372 = pneg %p143
      %p373 = pneg %p167
      %p374 = pneg %p164
      %p375 = pneg %p188
      %p376 = pneg %p185
      %p377 = pneg %p209
      %p378 = pneg %p206
      %p379 = pneg %p237
      %p380 = pneg %p234
      %s381 = smul.u32 8, %s23
      %p382 = scmp.lt.s32.totalorder %s22, 1
      %s383 = scalar_select %p382, %s22, 1
      %p384 = scmp.lt.s32.totalorder %s381, 15
      %s385 = scalar_select %p384, %s381, 15
      %s386 = smul.addr %s385, 2
      %s387 = smul.addr %s383, 32
      %s388 = sadd.s32 %s386, %s387
      %s389 = smul.addr %s388, 8
      %s390 = scalar_lea.vmem %s7, %s389
      %s391 = smul.u32 8, %s23
      %p392 = scmp.lt.s32.totalorder %s22, 1
      %s393 = scalar_select %p392, %s22, 1
      %p394 = scmp.lt.s32.totalorder %s391, 15
      %s395 = scalar_select %p394, %s391, 15
      %s396 = smul.addr %s395, 2
      %s397 = smul.addr %s393, 32
      %s398 = sadd.s32 %s396, %s397
      %s399 = smul.addr %s398, 8
      %s400 = scalar_lea.vmem %s0, %s399
      %s401 = smul.u32 8, %s23
      %s402 = smul.u32 %s23, 8
      %s403 = ssub.s32 %s402, 1
      %p404 = scmp.gt.s32.totalorder %s403, 0
      %s405 = scalar_select %p404, %s403, 0
      %p406 = scmp.lt.s32.totalorder %s22, 1
      %s407 = scalar_select %p406, %s22, 1
      %p408 = scmp.lt.s32.totalorder %s405, 15
      %s409 = scalar_select %p408, %s405, 15
      %s410 = smul.addr %s409, 2
      %s411 = smul.addr %s407, 32
      %s412 = sadd.s32 %s410, %s411
      %s413 = smul.addr %s412, 8
      %s414 = scalar_lea.vmem %s1, %s413
      %s415 = smul.u32 %s23, 8
      %s416 = ssub.s32 %s415, 1
      %p417 = scmp.gt.s32.totalorder %s416, 0
      %s418 = scalar_select %p417, %s416, 0
      %s419 = sadd.s32 %s23, 1
      %s420 = smul.u32 %s419, 8
      %p421 = scmp.lt.s32.totalorder %s420, 15
      %s422 = scalar_select %p421, %s420, 15
      %p423 = scmp.lt.s32.totalorder %s22, 1
      %s424 = scalar_select %p423, %s22, 1
      %p425 = scmp.lt.s32.totalorder %s422, 15
      %s426 = scalar_select %p425, %s422, 15
      %s427 = smul.addr %s426, 2
      %s428 = smul.addr %s424, 32
      %s429 = sadd.s32 %s427, %s428
      %s430 = smul.addr %s429, 8
      %s431 = scalar_lea.vmem %s2, %s430
      %s432 = sadd.s32 %s23, 1
      %s433 = smul.u32 %s432, 8
      %p434 = scmp.lt.s32.totalorder %s433, 15
      %s435 = scalar_select %p434, %s433, 15
      %s436 = smul.u32 8, %s23
      %p437 = scmp.lt.s32.totalorder %s22, 1
      %s438 = scalar_select %p437, %s22, 1
      %p439 = scmp.lt.s32.totalorder %s436, 15
      %s440 = scalar_select %p439, %s436, 15
      %s441 = smul.addr %s440, 2
      %s442 = smul.addr %s438, 32
      %s443 = sadd.s32 %s441, %s442
      %s444 = smul.addr %s443, 8
      %s445 = scalar_lea.vmem %s7, %s444
      %s446 = smul.u32 8, %s23
      %v447 = vld [vmem:[%s400] sm:$0xff]
      %v448 = vld [vmem:[%s400 + $0x8] sm:$0xff]
      %v449 = vld [vmem:[%s400 + $0x10] sm:$0xff]
      %v450 = vld [vmem:[%s400 + $0x18] sm:$0xff]
      %v451 = vld [vmem:[%s400 + $0x20] sm:$0xff]
      %v452 = vld [vmem:[%s400 + $0x28] sm:$0xff]
      %v453 = vld [vmem:[%s400 + $0x30] sm:$0xff]
      %v454 = vld [vmem:[%s400 + $0x38] sm:$0xff]
      %v455 = vld [vmem:[%s400 + $0x40] sm:$0xff]
      %v456 = vld [vmem:[%s400 + $0x48] sm:$0xff]
      %v457 = vld [vmem:[%s400 + $0x50] sm:$0xff]
      %v458 = vld [vmem:[%s400 + $0x58] sm:$0xff]
      %v459 = vld [vmem:[%s400 + $0x60] sm:$0xff]
      %v460 = vld [vmem:[%s400 + $0x68] sm:$0xff]
      %v461 = vld [vmem:[%s400 + $0x70] sm:$0xff]
      %v462 = vld [vmem:[%s400 + $0x78] sm:$0xff]
      %v463 = vmax.f32 %v447, 0.0
      %v464 = vmax.f32 %v448, 0.0
      %v465 = vmax.f32 %v449, 0.0
      %v466 = vmax.f32 %v450, 0.0
      %v467 = vmax.f32 %v451, 0.0
      %v468 = vmax.f32 %v452, 0.0
      %v469 = vmax.f32 %v453, 0.0
      %v470 = vmax.f32 %v454, 0.0
      %v471 = vmax.f32 %v455, 0.0
      %v472 = vmax.f32 %v456, 0.0
      %v473 = vmax.f32 %v457, 0.0
      %v474 = vmax.f32 %v458, 0.0
      %v475 = vmax.f32 %v459, 0.0
      %v476 = vmax.f32 %v460, 0.0
      %v477 = vmax.f32 %v461, 0.0
      %v478 = vmax.f32 %v462, 0.0
      %s479 = scalar_lea.vmem [#allocation2], 24
      %vm480 = vcmask 31744
      %481 = vst.msk [vmem:[%s479 + $0x1] sm:$0xff] %vm480, %v463
      %482 = vst.msk [vmem:[%s479 + $0x9] sm:$0xff] %vm480, %v464
      %483 = vst.msk [vmem:[%s479 + $0x19] sm:$0xff] %vm480, %v465
      %484 = vst.msk [vmem:[%s479 + $0x21] sm:$0xff] %vm480, %v466
      %485 = vst.msk [vmem:[%s479 + $0x31] sm:$0xff] %vm480, %v467
      %486 = vst.msk [vmem:[%s479 + $0x39] sm:$0xff] %vm480, %v468
      %487 = vst.msk [vmem:[%s479 + $0x49] sm:$0xff] %vm480, %v469
      %488 = vst.msk [vmem:[%s479 + $0x51] sm:$0xff] %vm480, %v470
      %489 = vst.msk [vmem:[%s479 + $0x61] sm:$0xff] %vm480, %v471
      %490 = vst.msk [vmem:[%s479 + $0x69] sm:$0xff] %vm480, %v472
      %491 = vst.msk [vmem:[%s479 + $0x79] sm:$0xff] %vm480, %v473
      %492 = vst.msk [vmem:[%s479 + $0x81] sm:$0xff] %vm480, %v474
      %493 = vst.msk [vmem:[%s479 + $0x91] sm:$0xff] %vm480, %v475
      %494 = vst.msk [vmem:[%s479 + $0x99] sm:$0xff] %vm480, %v476
      %495 = vst.msk [vmem:[%s479 + $0xa9] sm:$0xff] %vm480, %v477
      %496 = vst.msk [vmem:[%s479 + $0xb1] sm:$0xff] %vm480, %v478
      %vm497 = vcmask 24576
      %498 = vst.msk [vmem:[#allocation2] sm:$0x1] %vm497, 0.0
      %499 = vst.msk [vmem:[#allocation2 + $0x18] sm:$0x1] %vm497, 0.0
      %500 = vst.msk [vmem:[#allocation2 + $0x30] sm:$0x1] %vm497, 0.0
      %501 = vst.msk [vmem:[#allocation2 + $0x48] sm:$0x1] %vm497, 0.0
      %502 = vst.msk [vmem:[#allocation2 + $0x60] sm:$0x1] %vm497, 0.0
      %503 = vst.msk [vmem:[#allocation2 + $0x78] sm:$0x1] %vm497, 0.0
      %504 = vst.msk [vmem:[#allocation2 + $0x90] sm:$0x1] %vm497, 0.0
      %505 = vst.msk [vmem:[#allocation2 + $0xa8] sm:$0x1] %vm497, 0.0
      %506 = vst.msk [vmem:[#allocation2 + $0xc0] sm:$0x1] %vm497, 0.0
      %507 = vst.msk [vmem:[#allocation2 + $0xd8] sm:$0x1] %vm497, 0.0
      %508 = vst.msk [vmem:[#allocation2 + $0x11] sm:$0x1] %vm497, 0.0
      %509 = vst.msk [vmem:[#allocation2 + $0x29] sm:$0x1] %vm497, 0.0
      %510 = vst.msk [vmem:[#allocation2 + $0x41] sm:$0x1] %vm497, 0.0
      %511 = vst.msk [vmem:[#allocation2 + $0x59] sm:$0x1] %vm497, 0.0
      %512 = vst.msk [vmem:[#allocation2 + $0x71] sm:$0x1] %vm497, 0.0
      %513 = vst.msk [vmem:[#allocation2 + $0x89] sm:$0x1] %vm497, 0.0
      %514 = vst.msk [vmem:[#allocation2 + $0xa1] sm:$0x1] %vm497, 0.0
      %515 = vst.msk [vmem:[#allocation2 + $0xb9] sm:$0x1] %vm497, 0.0
      %516 = vst.msk [vmem:[#allocation2 + $0xd1] sm:$0x1] %vm497, 0.0
      %517 = vst.msk [vmem:[#allocation2 + $0xe9] sm:$0x1] %vm497, 0.0
      %p518 = scmp.gt.s32.totalorder %s23, 0
      // Predicated region
      $region49: #{tpu_custom_call.1} parent=47 // pred_check
        %p519 = pneg %p518
      $region50: #{tpu_custom_call.1} parent=47 // pred_check_branch
        %521 = sbr.rel (%p519) target = $region52
      $region51: #{tpu_custom_call.1} parent=47 // pred_region
        %v522 = vld [vmem:[%s414] sm:$0xff]
        %v523 = vld [vmem:[%s414 + $0x8] sm:$0xff]
        %v524 = vmax.f32 %v522, 0.0
        %v525 = vmax.f32 %v523, 0.0
        %526 = vst.msk [vmem:[#allocation2 + $0x1] sm:$0xff] %vm480, %v524
        %527 = vst.msk [vmem:[#allocation2 + $0x9] sm:$0xff] %vm480, %v525
      $region52: #{tpu_custom_call.1} parent=47 // pred_fallthru
        _
      %p528 = scmp.eq.s32.totalorder %s23, 0
      // Predicated region
      $region53: #{tpu_custom_call.1} parent=47 // pred_check
        %p529 = pneg %p528
      $region54: #{tpu_custom_call.1} parent=47 // pred_check_branch
        %531 = sbr.rel (%p529) target = $region56
      $region55: #{tpu_custom_call.1} parent=47 // pred_region
        %532 = vst.msk [vmem:[#allocation2 + $0x1] sm:$0xff] %vm480, 0.0
        %533 = vst.msk [vmem:[#allocation2 + $0x9] sm:$0xff] %vm480, 0.0
      $region56: #{tpu_custom_call.1} parent=47 // pred_fallthru
        _
      %p534 = scmp.lt.s32.totalorder %s23, 1
      // Predicated region
      $region57: #{tpu_custom_call.1} parent=47 // pred_check
        %p535 = pneg %p534
      $region58: #{tpu_custom_call.1} parent=47 // pred_check_branch
        %537 = sbr.rel (%p535) target = $region60
      $region59: #{tpu_custom_call.1} parent=47 // pred_region
        %v538 = vld [vmem:[%s431] sm:$0xff]
        %v539 = vld [vmem:[%s431 + $0x8] sm:$0xff]
        %v540 = vmax.f32 %v538, 0.0
        %v541 = vmax.f32 %v539, 0.0
        %s542 = scalar_lea.vmem [#allocation2], 216
        %543 = vst.msk [vmem:[%s542 + $0x1] sm:$0xff] %vm480, %v540
        %544 = vst.msk [vmem:[%s542 + $0x9] sm:$0xff] %vm480, %v541
      $region60: #{tpu_custom_call.1} parent=47 // pred_fallthru
        _
      %p545 = scmp.eq.s32.totalorder %s23, 1
      // Predicated region
      $region61: #{tpu_custom_call.1} parent=47 // pred_check
        %p546 = pneg %p545
      $region62: #{tpu_custom_call.1} parent=47 // pred_check_branch
        %548 = sbr.rel (%p546) target = $region64
      $region63: #{tpu_custom_call.1} parent=47 // pred_region
        %s549 = scalar_lea.vmem [#allocation2], 216
        %550 = vst.msk [vmem:[%s549 + $0x1] sm:$0xff] %vm480, 0.0
        %551 = vst.msk [vmem:[%s549 + $0x9] sm:$0xff] %vm480, 0.0
      $region64: #{tpu_custom_call.1} parent=47 // pred_fallthru
        _
      %v552 = vld [vmem:[#allocation2] sm:$0xff]
      %v553 = vld [vmem:[#allocation2 + $0x8] sm:$0xff]
      %v554 = vld [vmem:[#allocation2 + $0x18] sm:$0xff]
      %v555 = vld [vmem:[#allocation2 + $0x20] sm:$0xff]
      %v556 = vld [vmem:[#allocation2 + $0x30] sm:$0xff]
      %v557 = vld [vmem:[#allocation2 + $0x38] sm:$0xff]
      %v558 = vld [vmem:[#allocation2 + $0x48] sm:$0xff]
      %v559 = vld [vmem:[#allocation2 + $0x50] sm:$0xff]
      %v560 = vld [vmem:[#allocation2 + $0x60] sm:$0xff]
      %v561 = vld [vmem:[#allocation2 + $0x68] sm:$0xff]
      %v562 = vld [vmem:[#allocation2 + $0x78] sm:$0xff]
      %v563 = vld [vmem:[#allocation2 + $0x80] sm:$0xff]
      %v564 = vld [vmem:[#allocation2 + $0x90] sm:$0xff]
      %v565 = vld [vmem:[#allocation2 + $0x98] sm:$0xff]
      %v566 = vld [vmem:[#allocation2 + $0xa8] sm:$0xff]
      %v567 = vld [vmem:[#allocation2 + $0xb0] sm:$0xff]
      %v568 = vld [vmem:[%s3] sm:$0xf]
      %v569 = vld [vmem:[#allocation2 + $0x1] sm:$0xff]
      %v570 = vld [vmem:[#allocation2 + $0x9] sm:$0xff]
      %v571 = vld [vmem:[#allocation2 + $0x19] sm:$0xff]
      %v572 = vld [vmem:[#allocation2 + $0x21] sm:$0xff]
      %v573 = vld [vmem:[#allocation2 + $0x31] sm:$0xff]
      %v574 = vld [vmem:[#allocation2 + $0x39] sm:$0xff]
      %v575 = vld [vmem:[#allocation2 + $0x49] sm:$0xff]
      %v576 = vld [vmem:[#allocation2 + $0x51] sm:$0xff]
      %v577 = vld [vmem:[#allocation2 + $0x61] sm:$0xff]
      %v578 = vld [vmem:[#allocation2 + $0x69] sm:$0xff]
      %v579 = vld [vmem:[#allocation2 + $0x79] sm:$0xff]
      %v580 = vld [vmem:[#allocation2 + $0x81] sm:$0xff]
      %v581 = vld [vmem:[#allocation2 + $0x91] sm:$0xff]
      %v582 = vld [vmem:[#allocation2 + $0x99] sm:$0xff]
      %v583 = vld [vmem:[#allocation2 + $0xa9] sm:$0xff]
      %v584 = vld [vmem:[#allocation2 + $0xb1] sm:$0xff]
      %v585 = vld [vmem:[%s3 + $0x4] sm:$0xf]
      %v587 = vsel %vm480, %v569, 0
      %v590 = vsel %vm480, %v570, 0
      %v593 = vsel %vm480, %v571, 0
      %v596 = vsel %vm480, %v572, 0
      %v599 = vsel %vm480, %v573, 0
      %v602 = vsel %vm480, %v574, 0
      %v605 = vsel %vm480, %v575, 0
      %v608 = vsel %vm480, %v576, 0
      %v611 = vsel %vm480, %v577, 0
      %v614 = vsel %vm480, %v578, 0
      %v617 = vsel %vm480, %v579, 0
      %v620 = vsel %vm480, %v580, 0
      %v623 = vsel %vm480, %v581, 0
      %v626 = vsel %vm480, %v582, 0
      %v629 = vsel %vm480, %v583, 0
      %v632 = vsel %vm480, %v584, 0
      %vm634 = vcmask 1043456
      %v636 = vsel %vm634, %v585, 0
      %638 = vmatprep.subr.mxu0 0.0
      %639 = vmatpush1.msra.mxu0 %v636
      %640 = vmatprep.subr.mxu0 0.0
      %641 = vmatpush1.msra.mxu0 0.0
      %642 = vmatprep.subr.mxu0 0.0
      %643 = vmatpush1.msra.mxu0 0.0
      %644 = vmatprep.subr.mxu0 0.0
      %645 = vmatpush1.msra.mxu0 0.0
      %646 = vmatprep.subr.mxu0 0.0
      %647 = vmatpush1.msra.mxu0 0.0
      %648 = vmatprep.subr.mxu0 0.0
      %649 = vmatpush1.msra.mxu0 0.0
      %650 = vmatprep.subr.mxu0 0.0
      %651 = vmatpush1.msra.mxu0 0.0
      %652 = vmatprep.subr.mxu0 0.0
      %653 = vmatpush1.msra.mxu0 0.0
      %654 = vmatprep.subr.mxu0 0.0
      %655 = vmatpush1.msra.mxu0 0.0
      %656 = vmatprep.subr.mxu0 0.0
      %657 = vmatpush1.msra.mxu0 0.0
      %658 = vmatprep.subr.mxu0 0.0
      %659 = vmatpush1.msra.mxu0 0.0
      %660 = vmatprep.subr.mxu0 0.0
      %661 = vmatpush1.msra.mxu0 0.0
      %662 = vmatprep.subr.mxu0 0.0
      %663 = vmatpush1.msra.mxu0 0.0
      %664 = vmatprep.subr.mxu0 0.0
      %665 = vmatpush1.msra.mxu0 0.0
      %666 = vmatprep.subr.mxu0 0.0
      %667 = vmatpush1.msra.mxu0 0.0
      %668 = vmatprep.subr.mxu0 0.0
      %669 = vmatpush1.msra.mxu0 0.0
      %670 = vmatprep.subr.mxu0 0.0
      %671 = vmatpush1.msra.mxu0 0.0
      %672 = vmatprep.subr.mxu0 0.0
      %673 = vmatpush1.msra.mxu0 0.0
      %674 = vmatprep.subr.mxu0 0.0
      %675 = vmatpush1.msra.mxu0 0.0
      %676 = vmatprep.subr.mxu0 0.0
      %677 = vmatpush1.msra.mxu0 0.0
      %678 = vmatprep.subr.mxu0 0.0
      %679 = vmatpush1.msra.mxu0 0.0
      %680 = vmatprep.subr.mxu0 0.0
      %681 = vmatpush1.msra.mxu0 0.0
      %682 = vmatprep.subr.mxu0 0.0
      %683 = vmatpush1.msra.mxu0 0.0
      %684 = vmatprep.subr.mxu0 0.0
      %685 = vmatpush1.msra.mxu0 0.0
      %686 = vmatprep.subr.mxu0 0.0
      %687 = vmatpush1.msra.mxu0 0.0
      %688 = vmatprep.subr.mxu0 0.0
      %689 = vmatpush1.msra.mxu0 0.0
      %690 = vmatprep.subr.mxu0 0.0
      %691 = vmatpush1.msra.mxu0 0.0
      %692 = vmatprep.subr.mxu0 0.0
      %693 = vmatpush1.msra.mxu0 0.0
      %694 = vmatprep.subr.mxu0 0.0
      %695 = vmatpush1.msra.mxu0 0.0
      %696 = vmatprep.subr.mxu0 0.0
      %697 = vmatpush1.msra.mxu0 0.0
      %698 = vmatprep.subr.mxu0 0.0
      %699 = vmatpush1.msra.mxu0 0.0
      %700 = vmatprep.subr.mxu0 0.0
      %701 = vmatpush1.msra.mxu0 0.0
      %702 = vmatprep.mubr.f32.mxu0 0.0
      %703 = vmatmul.mubr.f32.gmra.mrb[0].mxu0 %v587
      %v704 = vpop.f32.mrb[0].mxu0
      %v705 = vadd.f32 0.0, %v704
      %v706 = vpop.f32.mrb[0].mxu0
      %707 = vmatprep.mubr.f32.mxu0 0.0
      %708 = vmatmul.mubr.f32.gmra.mrb[0].mxu0 %v590
      %v709 = vpop.f32.mrb[0].mxu0
      %v710 = vadd.f32 0.0, %v709
      %v711 = vpop.f32.mrb[0].mxu0
      %712 = vmatprep.mubr.f32.mxu0 0.0
      %713 = vmatmul.mubr.f32.gmra.mrb[0].mxu0 %v593
      %v714 = vpop.f32.mrb[0].mxu0
      %v715 = vadd.f32 0.0, %v714
      %v716 = vpop.f32.mrb[0].mxu0
      %717 = vmatprep.mubr.f32.mxu0 0.0
      %718 = vmatmul.mubr.f32.gmra.mrb[0].mxu0 %v596
      %v719 = vpop.f32.mrb[0].mxu0
      %v720 = vadd.f32 0.0, %v719
      %v721 = vpop.f32.mrb[0].mxu0
      %722 = vmatprep.mubr.f32.mxu0 0.0
      %723 = vmatmul.mubr.f32.gmra.mrb[0].mxu0 %v599
      %v724 = vpop.f32.mrb[0].mxu0
      %v725 = vadd.f32 0.0, %v724
      %v726 = vpop.f32.mrb[0].mxu0
      %727 = vmatprep.mubr.f32.mxu0 0.0
      %728 = vmatmul.mubr.f32.gmra.mrb[0].mxu0 %v602
      %v729 = vpop.f32.mrb[0].mxu0
      %v730 = vadd.f32 0.0, %v729
      %v731 = vpop.f32.mrb[0].mxu0
      %732 = vmatprep.mubr.f32.mxu0 0.0
      %733 = vmatmul.mubr.f32.gmra.mrb[0].mxu0 %v605
      %v734 = vpop.f32.mrb[0].mxu0
      %v735 = vadd.f32 0.0, %v734
      %v736 = vpop.f32.mrb[0].mxu0
      %737 = vmatprep.mubr.f32.mxu0 0.0
      %738 = vmatmul.mubr.f32.gmra.mrb[0].mxu0 %v608
      %v739 = vpop.f32.mrb[0].mxu0
      %v740 = vadd.f32 0.0, %v739
      %v741 = vpop.f32.mrb[0].mxu0
      %742 = vmatprep.mubr.f32.mxu0 0.0
      %743 = vmatmul.mubr.f32.gmra.mrb[0].mxu0 %v611
      %v744 = vpop.f32.mrb[0].mxu0
      %v745 = vadd.f32 0.0, %v744
      %v746 = vpop.f32.mrb[0].mxu0
      %747 = vmatprep.mubr.f32.mxu0 0.0
      %748 = vmatmul.mubr.f32.gmra.mrb[0].mxu0 %v614
      %v749 = vpop.f32.mrb[0].mxu0
      %v750 = vadd.f32 0.0, %v749
      %v751 = vpop.f32.mrb[0].mxu0
      %752 = vmatprep.mubr.f32.mxu0 0.0
      %753 = vmatmul.mubr.f32.gmra.mrb[0].mxu0 %v617
      %v754 = vpop.f32.mrb[0].mxu0
      %v755 = vadd.f32 0.0, %v754
      %v756 = vpop.f32.mrb[0].mxu0
      %757 = vmatprep.mubr.f32.mxu0 0.0
      %758 = vmatmul.mubr.f32.gmra.mrb[0].mxu0 %v620
      %v759 = vpop.f32.mrb[0].mxu0
      %v760 = vadd.f32 0.0, %v759
      %v761 = vpop.f32.mrb[0].mxu0
      %762 = vmatprep.mubr.f32.mxu0 0.0
      %763 = vmatmul.mubr.f32.gmra.mrb[0].mxu0 %v623
      %v764 = vpop.f32.mrb[0].mxu0
      %v765 = vadd.f32 0.0, %v764
      %v766 = vpop.f32.mrb[0].mxu0
      %767 = vmatprep.mubr.f32.mxu0 0.0
      %768 = vmatmul.mubr.f32.gmra.mrb[0].mxu0 %v626
      %v769 = vpop.f32.mrb[0].mxu0
      %v770 = vadd.f32 0.0, %v769
      %v771 = vpop.f32.mrb[0].mxu0
      %772 = vmatprep.mubr.f32.mxu0 0.0
      %773 = vmatmul.mubr.f32.gmra.mrb[0].mxu0 %v629
      %v774 = vpop.f32.mrb[0].mxu0
      %v775 = vadd.f32 0.0, %v774
      %v776 = vpop.f32.mrb[0].mxu0
      %777 = vmatprep.mubr.f32.mxu0 0.0
      %778 = vmatmul.mubr.f32.gmra.mrb[0].mxu0 %v632
      %v779 = vpop.f32.mrb[0].mxu0
      %v780 = vadd.f32 0.0, %v779
      %v781 = vpop.f32.mrb[0].mxu0
      %782 = vdwg.mxu0
      %v784 = vsel %vm480, %v552, 0
      %v787 = vsel %vm480, %v553, 0
      %v790 = vsel %vm480, %v554, 0
      %v793 = vsel %vm480, %v555, 0
      %v796 = vsel %vm480, %v556, 0
      %v799 = vsel %vm480, %v557, 0
      %v802 = vsel %vm480, %v558, 0
      %v805 = vsel %vm480, %v559, 0
      %v808 = vsel %vm480, %v560, 0
      %v811 = vsel %vm480, %v561, 0
      %v814 = vsel %vm480, %v562, 0
      %v817 = vsel %vm480, %v563, 0
      %v820 = vsel %vm480, %v564, 0
      %v823 = vsel %vm480, %v565, 0
      %v826 = vsel %vm480, %v566, 0
      %v829 = vsel %vm480, %v567, 0
      %v832 = vsel %vm634, %v568, 0
      %834 = vmatprep.subr.mxu0 0.0
      %835 = vmatpush1.msra.mxu0 %v832
      %836 = vmatprep.subr.mxu0 0.0
      %837 = vmatpush1.msra.mxu0 0.0
      %838 = vmatprep.subr.mxu0 0.0
      %839 = vmatpush1.msra.mxu0 0.0
      %840 = vmatprep.subr.mxu0 0.0
      %841 = vmatpush1.msra.mxu0 0.0
      %842 = vmatprep.subr.mxu0 0.0
      %843 = vmatpush1.msra.mxu0 0.0
      %844 = vmatprep.subr.mxu0 0.0
      %845 = vmatpush1.msra.mxu0 0.0
      %846 = vmatprep.subr.mxu0 0.0
      %847 = vmatpush1.msra.mxu0 0.0
      %848 = vmatprep.subr.mxu0 0.0
      %849 = vmatpush1.msra.mxu0 0.0
      %850 = vmatprep.subr.mxu0 0.0
      %851 = vmatpush1.msra.mxu0 0.0
      %852 = vmatprep.subr.mxu0 0.0
      %853 = vmatpush1.msra.mxu0 0.0
      %854 = vmatprep.subr.mxu0 0.0
      %855 = vmatpush1.msra.mxu0 0.0
      %856 = vmatprep.subr.mxu0 0.0
      %857 = vmatpush1.msra.mxu0 0.0
      %858 = vmatprep.subr.mxu0 0.0
      %859 = vmatpush1.msra.mxu0 0.0
      %860 = vmatprep.subr.mxu0 0.0
      %861 = vmatpush1.msra.mxu0 0.0
      %862 = vmatprep.subr.mxu0 0.0
      %863 = vmatpush1.msra.mxu0 0.0
      %864 = vmatprep.subr.mxu0 0.0
      %865 = vmatpush1.msra.mxu0 0.0
      %866 = vmatprep.subr.mxu0 0.0
      %867 = vmatpush1.msra.mxu0 0.0
      %868 = vmatprep.subr.mxu0 0.0
      %869 = vmatpush1.msra.mxu0 0.0
      %870 = vmatprep.subr.mxu0 0.0
      %871 = vmatpush1.msra.mxu0 0.0
      %872 = vmatprep.subr.mxu0 0.0
      %873 = vmatpush1.msra.mxu0 0.0
      %874 = vmatprep.subr.mxu0 0.0
      %875 = vmatpush1.msra.mxu0 0.0
      %876 = vmatprep.subr.mxu0 0.0
      %877 = vmatpush1.msra.mxu0 0.0
      %878 = vmatprep.subr.mxu0 0.0
      %879 = vmatpush1.msra.mxu0 0.0
      %880 = vmatprep.subr.mxu0 0.0
      %881 = vmatpush1.msra.mxu0 0.0
      %882 = vmatprep.subr.mxu0 0.0
      %883 = vmatpush1.msra.mxu0 0.0
      %884 = vmatprep.subr.mxu0 0.0
      %885 = vmatpush1.msra.mxu0 0.0
      %886 = vmatprep.subr.mxu0 0.0
      %887 = vmatpush1.msra.mxu0 0.0
      %888 = vmatprep.subr.mxu0 0.0
      %889 = vmatpush1.msra.mxu0 0.0
      %890 = vmatprep.subr.mxu0 0.0
      %891 = vmatpush1.msra.mxu0 0.0
      %892 = vmatprep.subr.mxu0 0.0
      %893 = vmatpush1.msra.mxu0 0.0
      %894 = vmatprep.subr.mxu0 0.0
      %895 = vmatpush1.msra.mxu0 0.0
      %896 = vmatprep.subr.mxu0 0.0
      %897 = vmatpush1.msra.mxu0 0.0
      %898 = vmatprep.mubr.f32.mxu0 0.0
      %899 = vmatmul.mubr.f32.gmra.mrb[0].mxu0 %v784
      %v900 = vpop.f32.mrb[0].mxu0
      %v901 = vadd.f32 %v705, %v900
      %v902 = vpop.f32.mrb[0].mxu0
      %903 = vmatprep.mubr.f32.mxu0 0.0
      %904 = vmatmul.mubr.f32.gmra.mrb[0].mxu0 %v787
      %v905 = vpop.f32.mrb[0].mxu0
      %v906 = vadd.f32 %v710, %v905
      %v907 = vpop.f32.mrb[0].mxu0
      %908 = vmatprep.mubr.f32.mxu0 0.0
      %909 = vmatmul.mubr.f32.gmra.mrb[0].mxu0 %v790
      %v910 = vpop.f32.mrb[0].mxu0
      %v911 = vadd.f32 %v715, %v910
      %v912 = vpop.f32.mrb[0].mxu0
      %913 = vmatprep.mubr.f32.mxu0 0.0
      %914 = vmatmul.mubr.f32.gmra.mrb[0].mxu0 %v793
      %v915 = vpop.f32.mrb[0].mxu0
      %v916 = vadd.f32 %v720, %v915
      %v917 = vpop.f32.mrb[0].mxu0
      %918 = vmatprep.mubr.f32.mxu0 0.0
      %919 = vmatmul.mubr.f32.gmra.mrb[0].mxu0 %v796
      %v920 = vpop.f32.mrb[0].mxu0
      %v921 = vadd.f32 %v725, %v920
      %v922 = vpop.f32.mrb[0].mxu0
      %923 = vmatprep.mubr.f32.mxu0 0.0
      %924 = vmatmul.mubr.f32.gmra.mrb[0].mxu0 %v799
      %v925 = vpop.f32.mrb[0].mxu0
      %v926 = vadd.f32 %v730, %v925
      %v927 = vpop.f32.mrb[0].mxu0
      %928 = vmatprep.mubr.f32.mxu0 0.0
      %929 = vmatmul.mubr.f32.gmra.mrb[0].mxu0 %v802
      %v930 = vpop.f32.mrb[0].mxu0
      %v931 = vadd.f32 %v735, %v930
      %v932 = vpop.f32.mrb[0].mxu0
      %933 = vmatprep.mubr.f32.mxu0 0.0
      %934 = vmatmul.mubr.f32.gmra.mrb[0].mxu0 %v805
      %v935 = vpop.f32.mrb[0].mxu0
      %v936 = vadd.f32 %v740, %v935
      %v937 = vpop.f32.mrb[0].mxu0
      %938 = vmatprep.mubr.f32.mxu0 0.0
      %939 = vmatmul.mubr.f32.gmra.mrb[0].mxu0 %v808
      %v940 = vpop.f32.mrb[0].mxu0
      %v941 = vadd.f32 %v745, %v940
      %v942 = vpop.f32.mrb[0].mxu0
      %943 = vmatprep.mubr.f32.mxu0 0.0
      %944 = vmatmul.mubr.f32.gmra.mrb[0].mxu0 %v811
      %v945 = vpop.f32.mrb[0].mxu0
      %v946 = vadd.f32 %v750, %v945
      %v947 = vpop.f32.mrb[0].mxu0
      %948 = vmatprep.mubr.f32.mxu0 0.0
      %949 = vmatmul.mubr.f32.gmra.mrb[0].mxu0 %v814
      %v950 = vpop.f32.mrb[0].mxu0
      %v951 = vadd.f32 %v755, %v950
      %v952 = vpop.f32.mrb[0].mxu0
      %953 = vmatprep.mubr.f32.mxu0 0.0
      %954 = vmatmul.mubr.f32.gmra.mrb[0].mxu0 %v817
      %v955 = vpop.f32.mrb[0].mxu0
      %v956 = vadd.f32 %v760, %v955
      %v957 = vpop.f32.mrb[0].mxu0
      %958 = vmatprep.mubr.f32.mxu0 0.0
      %959 = vmatmul.mubr.f32.gmra.mrb[0].mxu0 %v820
      %v960 = vpop.f32.mrb[0].mxu0
      %v961 = vadd.f32 %v765, %v960
      %v962 = vpop.f32.mrb[0].mxu0
      %963 = vmatprep.mubr.f32.mxu0 0.0
      %964 = vmatmul.mubr.f32.gmra.mrb[0].mxu0 %v823
      %v965 = vpop.f32.mrb[0].mxu0
      %v966 = vadd.f32 %v770, %v965
      %v967 = vpop.f32.mrb[0].mxu0
      %968 = vmatprep.mubr.f32.mxu0 0.0
      %969 = vmatmul.mubr.f32.gmra.mrb[0].mxu0 %v826
      %v970 = vpop.f32.mrb[0].mxu0
      %v971 = vadd.f32 %v775, %v970
      %v972 = vpop.f32.mrb[0].mxu0
      %973 = vmatprep.mubr.f32.mxu0 0.0
      %974 = vmatmul.mubr.f32.gmra.mrb[0].mxu0 %v829
      %v975 = vpop.f32.mrb[0].mxu0
      %v976 = vadd.f32 %v780, %v975
      %v977 = vpop.f32.mrb[0].mxu0
      %978 = vdwg.mxu0
      %v979 = vld [vmem:[#allocation2 + $0x2] sm:$0xff]
      %v980 = vld [vmem:[#allocation2 + $0xa] sm:$0xff]
      %v981 = vld [vmem:[#allocation2 + $0x1a] sm:$0xff]
      %v982 = vld [vmem:[#allocation2 + $0x22] sm:$0xff]
      %v983 = vld [vmem:[#allocation2 + $0x32] sm:$0xff]
      %v984 = vld [vmem:[#allocation2 + $0x3a] sm:$0xff]
      %v985 = vld [vmem:[#allocation2 + $0x4a] sm:$0xff]
      %v986 = vld [vmem:[#allocation2 + $0x52] sm:$0xff]
      %v987 = vld [vmem:[#allocation2 + $0x62] sm:$0xff]
      %v988 = vld [vmem:[#allocation2 + $0x6a] sm:$0xff]
      %v989 = vld [vmem:[#allocation2 + $0x7a] sm:$0xff]
      %v990 = vld [vmem:[#allocation2 + $0x82] sm:$0xff]
      %v991 = vld [vmem:[#allocation2 + $0x92] sm:$0xff]
      %v992 = vld [vmem:[#allocation2 + $0x9a] sm:$0xff]
      %v993 = vld [vmem:[#allocation2 + $0xaa] sm:$0xff]
      %v994 = vld [vmem:[#allocation2 + $0xb2] sm:$0xff]
      %v995 = vld [vmem:[%s3 + $0x8] sm:$0xf]
      %v997 = vsel %vm480, %v979, 0
      %v1000 = vsel %vm480, %v980, 0
      %v1003 = vsel %vm480, %v981, 0
      %v1006 = vsel %vm480, %v982, 0
      %v1009 = vsel %vm480, %v983, 0
      %v1012 = vsel %vm480, %v984, 0
      %v1015 = vsel %vm480, %v985, 0
      %v1018 = vsel %vm480, %v986, 0
      %v1021 = vsel %vm480, %v987, 0
      %v1024 = vsel %vm480, %v988, 0
      %v1027 = vsel %vm480, %v989, 0
      %v1030 = vsel %vm480, %v990, 0
      %v1033 = vsel %vm480, %v991, 0
      %v1036 = vsel %vm480, %v992, 0
      %v1039 = vsel %vm480, %v993, 0
      %v1042 = vsel %vm480, %v994, 0
      %v1045 = vsel %vm634, %v995, 0
      %1047 = vmatprep.subr.mxu0 0.0
      %1048 = vmatpush1.msra.mxu0 %v1045
      %1049 = vmatprep.subr.mxu0 0.0
      %1050 = vmatpush1.msra.mxu0 0.0
      %1051 = vmatprep.subr.mxu0 0.0
      %1052 = vmatpush1.msra.mxu0 0.0
      %1053 = vmatprep.subr.mxu0 0.0
      %1054 = vmatpush1.msra.mxu0 0.0
      %1055 = vmatprep.subr.mxu0 0.0
      %1056 = vmatpush1.msra.mxu0 0.0
      %1057 = vmatprep.subr.mxu0 0.0
      %1058 = vmatpush1.msra.mxu0 0.0
      %1059 = vmatprep.subr.mxu0 0.0
      %1060 = vmatpush1.msra.mxu0 0.0
      %1061 = vmatprep.subr.mxu0 0.0
      %1062 = vmatpush1.msra.mxu0 0.0
      %1063 = vmatprep.subr.mxu0 0.0
      %1064 = vmatpush1.msra.mxu0 0.0
      %1065 = vmatprep.subr.mxu0 0.0
      %1066 = vmatpush1.msra.mxu0 0.0
      %1067 = vmatprep.subr.mxu0 0.0
      %1068 = vmatpush1.msra.mxu0 0.0
      %1069 = vmatprep.subr.mxu0 0.0
      %1070 = vmatpush1.msra.mxu0 0.0
      %1071 = vmatprep.subr.mxu0 0.0
      %1072 = vmatpush1.msra.mxu0 0.0
      %1073 = vmatprep.subr.mxu0 0.0
      %1074 = vmatpush1.msra.mxu0 0.0
      %1075 = vmatprep.subr.mxu0 0.0
      %1076 = vmatpush1.msra.mxu0 0.0
      %1077 = vmatprep.subr.mxu0 0.0
      %1078 = vmatpush1.msra.mxu0 0.0
      %1079 = vmatprep.subr.mxu0 0.0
      %1080 = vmatpush1.msra.mxu0 0.0
      %1081 = vmatprep.subr.mxu0 0.0
      %1082 = vmatpush1.msra.mxu0 0.0
      %1083 = vmatprep.subr.mxu0 0.0
      %1084 = vmatpush1.msra.mxu0 0.0
      %1085 = vmatprep.subr.mxu0 0.0
      %1086 = vmatpush1.msra.mxu0 0.0
      %1087 = vmatprep.subr.mxu0 0.0
      %1088 = vmatpush1.msra.mxu0 0.0
      %1089 = vmatprep.subr.mxu0 0.0
      %1090 = vmatpush1.msra.mxu0 0.0
      %1091 = vmatprep.subr.mxu0 0.0
      %1092 = vmatpush1.msra.mxu0 0.0
      %1093 = vmatprep.subr.mxu0 0.0
      %1094 = vmatpush1.msra.mxu0 0.0
      %1095 = vmatprep.subr.mxu0 0.0
      %1096 = vmatpush1.msra.mxu0 0.0
      %1097 = vmatprep.subr.mxu0 0.0
      %1098 = vmatpush1.msra.mxu0 0.0
      %1099 = vmatprep.subr.mxu0 0.0
      %1100 = vmatpush1.msra.mxu0 0.0
      %1101 = vmatprep.subr.mxu0 0.0
      %1102 = vmatpush1.msra.mxu0 0.0
      %1103 = vmatprep.subr.mxu0 0.0
      %1104 = vmatpush1.msra.mxu0 0.0
      %1105 = vmatprep.subr.mxu0 0.0
      %1106 = vmatpush1.msra.mxu0 0.0
      %1107 = vmatprep.subr.mxu0 0.0
      %1108 = vmatpush1.msra.mxu0 0.0
      %1109 = vmatprep.subr.mxu0 0.0
      %1110 = vmatpush1.msra.mxu0 0.0
      %1111 = vmatprep.mubr.f32.mxu0 0.0
      %1112 = vmatmul.mubr.f32.gmra.mrb[0].mxu0 %v997
      %v1113 = vpop.f32.mrb[0].mxu0
      %v1114 = vadd.f32 0.0, %v1113
      %v1115 = vpop.f32.mrb[0].mxu0
      %1116 = vmatprep.mubr.f32.mxu0 0.0
      %1117 = vmatmul.mubr.f32.gmra.mrb[0].mxu0 %v1000
      %v1118 = vpop.f32.mrb[0].mxu0
      %v1119 = vadd.f32 0.0, %v1118
      %v1120 = vpop.f32.mrb[0].mxu0
      %1121 = vmatprep.mubr.f32.mxu0 0.0
      %1122 = vmatmul.mubr.f32.gmra.mrb[0].mxu0 %v1003
      %v1123 = vpop.f32.mrb[0].mxu0
      %v1124 = vadd.f32 0.0, %v1123
      %v1125 = vpop.f32.mrb[0].mxu0
      %1126 = vmatprep.mubr.f32.mxu0 0.0
      %1127 = vmatmul.mubr.f32.gmra.mrb[0].mxu0 %v1006
      %v1128 = vpop.f32.mrb[0].mxu0
      %v1129 = vadd.f32 0.0, %v1128
      %v1130 = vpop.f32.mrb[0].mxu0
      %1131 = vmatprep.mubr.f32.mxu0 0.0
      %1132 = vmatmul.mubr.f32.gmra.mrb[0].mxu0 %v1009
      %v1133 = vpop.f32.mrb[0].mxu0
      %v1134 = vadd.f32 0.0, %v1133
      %v1135 = vpop.f32.mrb[0].mxu0
      %1136 = vmatprep.mubr.f32.mxu0 0.0
      %1137 = vmatmul.mubr.f32.gmra.mrb[0].mxu0 %v1012
      %v1138 = vpop.f32.mrb[0].mxu0
      %v1139 = vadd.f32 0.0, %v1138
      %v1140 = vpop.f32.mrb[0].mxu0
      %1141 = vmatprep.mubr.f32.mxu0 0.0
      %1142 = vmatmul.mubr.f32.gmra.mrb[0].mxu0 %v1015
      %v1143 = vpop.f32.mrb[0].mxu0
      %v1144 = vadd.f32 0.0, %v1143
      %v1145 = vpop.f32.mrb[0].mxu0
      %1146 = vmatprep.mubr.f32.mxu0 0.0
      %1147 = vmatmul.mubr.f32.gmra.mrb[0].mxu0 %v1018
      %v1148 = vpop.f32.mrb[0].mxu0
      %v1149 = vadd.f32 0.0, %v1148
      %v1150 = vpop.f32.mrb[0].mxu0
      %1151 = vmatprep.mubr.f32.mxu0 0.0
      %1152 = vmatmul.mubr.f32.gmra.mrb[0].mxu0 %v1021
      %v1153 = vpop.f32.mrb[0].mxu0
      %v1154 = vadd.f32 0.0, %v1153
      %v1155 = vpop.f32.mrb[0].mxu0
      %1156 = vmatprep.mubr.f32.mxu0 0.0
      %1157 = vmatmul.mubr.f32.gmra.mrb[0].mxu0 %v1024
      %v1158 = vpop.f32.mrb[0].mxu0
      %v1159 = vadd.f32 0.0, %v1158
      %v1160 = vpop.f32.mrb[0].mxu0
      %1161 = vmatprep.mubr.f32.mxu0 0.0
      %1162 = vmatmul.mubr.f32.gmra.mrb[0].mxu0 %v1027
      %v1163 = vpop.f32.mrb[0].mxu0
      %v1164 = vadd.f32 0.0, %v1163
      %v1165 = vpop.f32.mrb[0].mxu0
      %1166 = vmatprep.mubr.f32.mxu0 0.0
      %1167 = vmatmul.mubr.f32.gmra.mrb[0].mxu0 %v1030
      %v1168 = vpop.f32.mrb[0].mxu0
      %v1169 = vadd.f32 0.0, %v1168
      %v1170 = vpop.f32.mrb[0].mxu0
      %1171 = vmatprep.mubr.f32.mxu0 0.0
      %1172 = vmatmul.mubr.f32.gmra.mrb[0].mxu0 %v1033
      %v1173 = vpop.f32.mrb[0].mxu0
      %v1174 = vadd.f32 0.0, %v1173
      %v1175 = vpop.f32.mrb[0].mxu0
      %1176 = vmatprep.mubr.f32.mxu0 0.0
      %1177 = vmatmul.mubr.f32.gmra.mrb[0].mxu0 %v1036
      %v1178 = vpop.f32.mrb[0].mxu0
      %v1179 = vadd.f32 0.0, %v1178
      %v1180 = vpop.f32.mrb[0].mxu0
      %1181 = vmatprep.mubr.f32.mxu0 0.0
      %1182 = vmatmul.mubr.f32.gmra.mrb[0].mxu0 %v1039
      %v1183 = vpop.f32.mrb[0].mxu0
      %v1184 = vadd.f32 0.0, %v1183
      %v1185 = vpop.f32.mrb[0].mxu0
      %1186 = vmatprep.mubr.f32.mxu0 0.0
      %1187 = vmatmul.mubr.f32.gmra.mrb[0].mxu0 %v1042
      %v1188 = vpop.f32.mrb[0].mxu0
      %v1189 = vadd.f32 0.0, %v1188
      %v1190 = vpop.f32.mrb[0].mxu0
      %1191 = vdwg.mxu0
      %v1192 = vadd.f32 %v901, %v1114
      %v1193 = vadd.f32 %v906, %v1119
      %v1194 = vadd.f32 %v911, %v1124
      %v1195 = vadd.f32 %v916, %v1129
      %v1196 = vadd.f32 %v921, %v1134
      %v1197 = vadd.f32 %v926, %v1139
      %v1198 = vadd.f32 %v931, %v1144
      %v1199 = vadd.f32 %v936, %v1149
      %v1200 = vadd.f32 %v941, %v1154
      %v1201 = vadd.f32 %v946, %v1159
      %v1202 = vadd.f32 %v951, %v1164
      %v1203 = vadd.f32 %v956, %v1169
      %v1204 = vadd.f32 %v961, %v1174
      %v1205 = vadd.f32 %v966, %v1179
      %v1206 = vadd.f32 %v971, %v1184
      %v1207 = vadd.f32 %v976, %v1189
      %v1208 = vld [vmem:[%s479] sm:$0xff]
      %v1209 = vld [vmem:[%s479 + $0x8] sm:$0xff]
      %v1210 = vld [vmem:[%s479 + $0x18] sm:$0xff]
      %v1211 = vld [vmem:[%s479 + $0x20] sm:$0xff]
      %v1212 = vld [vmem:[%s479 + $0x30] sm:$0xff]
      %v1213 = vld [vmem:[%s479 + $0x38] sm:$0xff]
      %v1214 = vld [vmem:[%s479 + $0x48] sm:$0xff]
      %v1215 = vld [vmem:[%s479 + $0x50] sm:$0xff]
      %v1216 = vld [vmem:[%s479 + $0x60] sm:$0xff]
      %v1217 = vld [vmem:[%s479 + $0x68] sm:$0xff]
      %v1218 = vld [vmem:[%s479 + $0x78] sm:$0xff]
      %v1219 = vld [vmem:[%s479 + $0x80] sm:$0xff]
      %v1220 = vld [vmem:[%s479 + $0x90] sm:$0xff]
      %v1221 = vld [vmem:[%s479 + $0x98] sm:$0xff]
      %v1222 = vld [vmem:[%s479 + $0xa8] sm:$0xff]
      %v1223 = vld [vmem:[%s479 + $0xb0] sm:$0xff]
      %v1224 = vld [vmem:[%s3 + $0xc] sm:$0xf]
      %v1226 = vsel %vm480, %v1208, 0
      %v1229 = vsel %vm480, %v1209, 0
      %v1232 = vsel %vm480, %v1210, 0
      %v1235 = vsel %vm480, %v1211, 0
      %v1238 = vsel %vm480, %v1212, 0
      %v1241 = vsel %vm480, %v1213, 0
      %v1244 = vsel %vm480, %v1214, 0
      %v1247 = vsel %vm480, %v1215, 0
      %v1250 = vsel %vm480, %v1216, 0
      %v1253 = vsel %vm480, %v1217, 0
      %v1256 = vsel %vm480, %v1218, 0
      %v1259 = vsel %vm480, %v1219, 0
      %v1262 = vsel %vm480, %v1220, 0
      %v1265 = vsel %vm480, %v1221, 0
      %v1268 = vsel %vm480, %v1222, 0
      %v1271 = vsel %vm480, %v1223, 0
      %v1274 = vsel %vm634, %v1224, 0
      %1276 = vmatprep.subr.mxu0 0.0
      %1277 = vmatpush1.msra.mxu0 %v1274
      %1278 = vmatprep.subr.mxu0 0.0
      %1279 = vmatpush1.msra.mxu0 0.0
      %1280 = vmatprep.subr.mxu0 0.0
      %1281 = vmatpush1.msra.mxu0 0.0
      %1282 = vmatprep.subr.mxu0 0.0
      %1283 = vmatpush1.msra.mxu0 0.0
      %1284 = vmatprep.subr.mxu0 0.0
      %1285 = vmatpush1.msra.mxu0 0.0
      %1286 = vmatprep.subr.mxu0 0.0
      %1287 = vmatpush1.msra.mxu0 0.0
      %1288 = vmatprep.subr.mxu0 0.0
      %1289 = vmatpush1.msra.mxu0 0.0
      %1290 = vmatprep.subr.mxu0 0.0
      %1291 = vmatpush1.msra.mxu0 0.0
      %1292 = vmatprep.subr.mxu0 0.0
      %1293 = vmatpush1.msra.mxu0 0.0
      %1294 = vmatprep.subr.mxu0 0.0
      %1295 = vmatpush1.msra.mxu0 0.0
      %1296 = vmatprep.subr.mxu0 0.0
      %1297 = vmatpush1.msra.mxu0 0.0
      %1298 = vmatprep.subr.mxu0 0.0
      %1299 = vmatpush1.msra.mxu0 0.0
      %1300 = vmatprep.subr.mxu0 0.0
      %1301 = vmatpush1.msra.mxu0 0.0
      %1302 = vmatprep.subr.mxu0 0.0
      %1303 = vmatpush1.msra.mxu0 0.0
      %1304 = vmatprep.subr.mxu0 0.0
      %1305 = vmatpush1.msra.mxu0 0.0
      %1306 = vmatprep.subr.mxu0 0.0
      %1307 = vmatpush1.msra.mxu0 0.0
      %1308 = vmatprep.subr.mxu0 0.0
      %1309 = vmatpush1.msra.mxu0 0.0
      %1310 = vmatprep.subr.mxu0 0.0
      %1311 = vmatpush1.msra.mxu0 0.0
      %1312 = vmatprep.subr.mxu0 0.0
      %1313 = vmatpush1.msra.mxu0 0.0
      %1314 = vmatprep.subr.mxu0 0.0
      %1315 = vmatpush1.msra.mxu0 0.0
      %1316 = vmatprep.subr.mxu0 0.0
      %1317 = vmatpush1.msra.mxu0 0.0
      %1318 = vmatprep.subr.mxu0 0.0
      %1319 = vmatpush1.msra.mxu0 0.0
      %1320 = vmatprep.subr.mxu0 0.0
      %1321 = vmatpush1.msra.mxu0 0.0
      %1322 = vmatprep.subr.mxu0 0.0
      %1323 = vmatpush1.msra.mxu0 0.0
      %1324 = vmatprep.subr.mxu0 0.0
      %1325 = vmatpush1.msra.mxu0 0.0
      %1326 = vmatprep.subr.mxu0 0.0
      %1327 = vmatpush1.msra.mxu0 0.0
      %1328 = vmatprep.subr.mxu0 0.0
      %1329 = vmatpush1.msra.mxu0 0.0
      %1330 = vmatprep.subr.mxu0 0.0
      %1331 = vmatpush1.msra.mxu0 0.0
      %1332 = vmatprep.subr.mxu0 0.0
      %1333 = vmatpush1.msra.mxu0 0.0
      %1334 = vmatprep.subr.mxu0 0.0
      %1335 = vmatpush1.msra.mxu0 0.0
      %1336 = vmatprep.subr.mxu0 0.0
      %1337 = vmatpush1.msra.mxu0 0.0
      %1338 = vmatprep.subr.mxu0 0.0
      %1339 = vmatpush1.msra.mxu0 0.0
      %1340 = vmatprep.mubr.f32.mxu0 0.0
      %1341 = vmatmul.mubr.f32.gmra.mrb[0].mxu0 %v1226
      %v1342 = vpop.f32.mrb[0].mxu0
      %v1343 = vadd.f32 0.0, %v1342
      %v1344 = vpop.f32.mrb[0].mxu0
      %1345 = vmatprep.mubr.f32.mxu0 0.0
      %1346 = vmatmul.mubr.f32.gmra.mrb[0].mxu0 %v1229
      %v1347 = vpop.f32.mrb[0].mxu0
      %v1348 = vadd.f32 0.0, %v1347
      %v1349 = vpop.f32.mrb[0].mxu0
      %1350 = vmatprep.mubr.f32.mxu0 0.0
      %1351 = vmatmul.mubr.f32.gmra.mrb[0].mxu0 %v1232
      %v1352 = vpop.f32.mrb[0].mxu0
      %v1353 = vadd.f32 0.0, %v1352
      %v1354 = vpop.f32.mrb[0].mxu0
      %1355 = vmatprep.mubr.f32.mxu0 0.0
      %1356 = vmatmul.mubr.f32.gmra.mrb[0].mxu0 %v1235
      %v1357 = vpop.f32.mrb[0].mxu0
      %v1358 = vadd.f32 0.0, %v1357
      %v1359 = vpop.f32.mrb[0].mxu0
      %1360 = vmatprep.mubr.f32.mxu0 0.0
      %1361 = vmatmul.mubr.f32.gmra.mrb[0].mxu0 %v1238
      %v1362 = vpop.f32.mrb[0].mxu0
      %v1363 = vadd.f32 0.0, %v1362
      %v1364 = vpop.f32.mrb[0].mxu0
      %1365 = vmatprep.mubr.f32.mxu0 0.0
      %1366 = vmatmul.mubr.f32.gmra.mrb[0].mxu0 %v1241
      %v1367 = vpop.f32.mrb[0].mxu0
      %v1368 = vadd.f32 0.0, %v1367
      %v1369 = vpop.f32.mrb[0].mxu0
      %1370 = vmatprep.mubr.f32.mxu0 0.0
      %1371 = vmatmul.mubr.f32.gmra.mrb[0].mxu0 %v1244
      %v1372 = vpop.f32.mrb[0].mxu0
      %v1373 = vadd.f32 0.0, %v1372
      %v1374 = vpop.f32.mrb[0].mxu0
      %1375 = vmatprep.mubr.f32.mxu0 0.0
      %1376 = vmatmul.mubr.f32.gmra.mrb[0].mxu0 %v1247
      %v1377 = vpop.f32.mrb[0].mxu0
      %v1378 = vadd.f32 0.0, %v1377
      %v1379 = vpop.f32.mrb[0].mxu0
      %1380 = vmatprep.mubr.f32.mxu0 0.0
      %1381 = vmatmul.mubr.f32.gmra.mrb[0].mxu0 %v1250
      %v1382 = vpop.f32.mrb[0].mxu0
      %v1383 = vadd.f32 0.0, %v1382
      %v1384 = vpop.f32.mrb[0].mxu0
      %1385 = vmatprep.mubr.f32.mxu0 0.0
      %1386 = vmatmul.mubr.f32.gmra.mrb[0].mxu0 %v1253
      %v1387 = vpop.f32.mrb[0].mxu0
      %v1388 = vadd.f32 0.0, %v1387
      %v1389 = vpop.f32.mrb[0].mxu0
      %1390 = vmatprep.mubr.f32.mxu0 0.0
      %1391 = vmatmul.mubr.f32.gmra.mrb[0].mxu0 %v1256
      %v1392 = vpop.f32.mrb[0].mxu0
      %v1393 = vadd.f32 0.0, %v1392
      %v1394 = vpop.f32.mrb[0].mxu0
      %1395 = vmatprep.mubr.f32.mxu0 0.0
      %1396 = vmatmul.mubr.f32.gmra.mrb[0].mxu0 %v1259
      %v1397 = vpop.f32.mrb[0].mxu0
      %v1398 = vadd.f32 0.0, %v1397
      %v1399 = vpop.f32.mrb[0].mxu0
      %1400 = vmatprep.mubr.f32.mxu0 0.0
      %1401 = vmatmul.mubr.f32.gmra.mrb[0].mxu0 %v1262
      %v1402 = vpop.f32.mrb[0].mxu0
      %v1403 = vadd.f32 0.0, %v1402
      %v1404 = vpop.f32.mrb[0].mxu0
      %1405 = vmatprep.mubr.f32.mxu0 0.0
      %1406 = vmatmul.mubr.f32.gmra.mrb[0].mxu0 %v1265
      %v1407 = vpop.f32.mrb[0].mxu0
      %v1408 = vadd.f32 0.0, %v1407
      %v1409 = vpop.f32.mrb[0].mxu0
      %1410 = vmatprep.mubr.f32.mxu0 0.0
      %1411 = vmatmul.mubr.f32.gmra.mrb[0].mxu0 %v1268
      %v1412 = vpop.f32.mrb[0].mxu0
      %v1413 = vadd.f32 0.0, %v1412
      %v1414 = vpop.f32.mrb[0].mxu0
      %1415 = vmatprep.mubr.f32.mxu0 0.0
      %1416 = vmatmul.mubr.f32.gmra.mrb[0].mxu0 %v1271
      %v1417 = vpop.f32.mrb[0].mxu0
      %v1418 = vadd.f32 0.0, %v1417
      %v1419 = vpop.f32.mrb[0].mxu0
      %1420 = vdwg.mxu0
      %v1421 = vadd.f32 %v1192, %v1343
      %v1422 = vadd.f32 %v1193, %v1348
      %v1423 = vadd.f32 %v1194, %v1353
      %v1424 = vadd.f32 %v1195, %v1358
      %v1425 = vadd.f32 %v1196, %v1363
      %v1426 = vadd.f32 %v1197, %v1368
      %v1427 = vadd.f32 %v1198, %v1373
      %v1428 = vadd.f32 %v1199, %v1378
      %v1429 = vadd.f32 %v1200, %v1383
      %v1430 = vadd.f32 %v1201, %v1388
      %v1431 = vadd.f32 %v1202, %v1393
      %v1432 = vadd.f32 %v1203, %v1398
      %v1433 = vadd.f32 %v1204, %v1403
      %v1434 = vadd.f32 %v1205, %v1408
      %v1435 = vadd.f32 %v1206, %v1413
      %v1436 = vadd.f32 %v1207, %v1418
      %v1437 = vld [vmem:[%s479 + $0x1] sm:$0xff]
      %v1438 = vld [vmem:[%s479 + $0x9] sm:$0xff]
      %v1439 = vld [vmem:[%s479 + $0x19] sm:$0xff]
      %v1440 = vld [vmem:[%s479 + $0x21] sm:$0xff]
      %v1441 = vld [vmem:[%s479 + $0x31] sm:$0xff]
      %v1442 = vld [vmem:[%s479 + $0x39] sm:$0xff]
      %v1443 = vld [vmem:[%s479 + $0x49] sm:$0xff]
      %v1444 = vld [vmem:[%s479 + $0x51] sm:$0xff]
      %v1445 = vld [vmem:[%s479 + $0x61] sm:$0xff]
      %v1446 = vld [vmem:[%s479 + $0x69] sm:$0xff]
      %v1447 = vld [vmem:[%s479 + $0x79] sm:$0xff]
      %v1448 = vld [vmem:[%s479 + $0x81] sm:$0xff]
      %v1449 = vld [vmem:[%s479 + $0x91] sm:$0xff]
      %v1450 = vld [vmem:[%s479 + $0x99] sm:$0xff]
      %v1451 = vld [vmem:[%s479 + $0xa9] sm:$0xff]
      %v1452 = vld [vmem:[%s479 + $0xb1] sm:$0xff]
      %v1453 = vld [vmem:[%s3 + $0x10] sm:$0xf]
      %v1455 = vsel %vm480, %v1437, 0
      %v1458 = vsel %vm480, %v1438, 0
      %v1461 = vsel %vm480, %v1439, 0
      %v1464 = vsel %vm480, %v1440, 0
      %v1467 = vsel %vm480, %v1441, 0
      %v1470 = vsel %vm480, %v1442, 0
      %v1473 = vsel %vm480, %v1443, 0
      %v1476 = vsel %vm480, %v1444, 0
      %v1479 = vsel %vm480, %v1445, 0
      %v1482 = vsel %vm480, %v1446, 0
      %v1485 = vsel %vm480, %v1447, 0
      %v1488 = vsel %vm480, %v1448, 0
      %v1491 = vsel %vm480, %v1449, 0
      %v1494 = vsel %vm480, %v1450, 0
      %v1497 = vsel %vm480, %v1451, 0
      %v1500 = vsel %vm480, %v1452, 0
      %v1503 = vsel %vm634, %v1453, 0
      %1505 = vmatprep.subr.mxu0 0.0
      %1506 = vmatpush1.msra.mxu0 %v1503
      %1507 = vmatprep.subr.mxu0 0.0
      %1508 = vmatpush1.msra.mxu0 0.0
      %1509 = vmatprep.subr.mxu0 0.0
      %1510 = vmatpush1.msra.mxu0 0.0
      %1511 = vmatprep.subr.mxu0 0.0
      %1512 = vmatpush1.msra.mxu0 0.0
      %1513 = vmatprep.subr.mxu0 0.0
      %1514 = vmatpush1.msra.mxu0 0.0
      %1515 = vmatprep.subr.mxu0 0.0
      %1516 = vmatpush1.msra.mxu0 0.0
      %1517 = vmatprep.subr.mxu0 0.0
      %1518 = vmatpush1.msra.mxu0 0.0
      %1519 = vmatprep.subr.mxu0 0.0
      %1520 = vmatpush1.msra.mxu0 0.0
      %1521 = vmatprep.subr.mxu0 0.0
      %1522 = vmatpush1.msra.mxu0 0.0
      %1523 = vmatprep.subr.mxu0 0.0
      %1524 = vmatpush1.msra.mxu0 0.0
      %1525 = vmatprep.subr.mxu0 0.0
      %1526 = vmatpush1.msra.mxu0 0.0
      %1527 = vmatprep.subr.mxu0 0.0
      %1528 = vmatpush1.msra.mxu0 0.0
      %1529 = vmatprep.subr.mxu0 0.0
      %1530 = vmatpush1.msra.mxu0 0.0
      %1531 = vmatprep.subr.mxu0 0.0
      %1532 = vmatpush1.msra.mxu0 0.0
      %1533 = vmatprep.subr.mxu0 0.0
      %1534 = vmatpush1.msra.mxu0 0.0
      %1535 = vmatprep.subr.mxu0 0.0
      %1536 = vmatpush1.msra.mxu0 0.0
      %1537 = vmatprep.subr.mxu0 0.0
      %1538 = vmatpush1.msra.mxu0 0.0
      %1539 = vmatprep.subr.mxu0 0.0
      %1540 = vmatpush1.msra.mxu0 0.0
      %1541 = vmatprep.subr.mxu0 0.0
      %1542 = vmatpush1.msra.mxu0 0.0
      %1543 = vmatprep.subr.mxu0 0.0
      %1544 = vmatpush1.msra.mxu0 0.0
      %1545 = vmatprep.subr.mxu0 0.0
      %1546 = vmatpush1.msra.mxu0 0.0
      %1547 = vmatprep.subr.mxu0 0.0
      %1548 = vmatpush1.msra.mxu0 0.0
      %1549 = vmatprep.subr.mxu0 0.0
      %1550 = vmatpush1.msra.mxu0 0.0
      %1551 = vmatprep.subr.mxu0 0.0
      %1552 = vmatpush1.msra.mxu0 0.0
      %1553 = vmatprep.subr.mxu0 0.0
      %1554 = vmatpush1.msra.mxu0 0.0
      %1555 = vmatprep.subr.mxu0 0.0
      %1556 = vmatpush1.msra.mxu0 0.0
      %1557 = vmatprep.subr.mxu0 0.0
      %1558 = vmatpush1.msra.mxu0 0.0
      %1559 = vmatprep.subr.mxu0 0.0
      %1560 = vmatpush1.msra.mxu0 0.0
      %1561 = vmatprep.subr.mxu0 0.0
      %1562 = vmatpush1.msra.mxu0 0.0
      %1563 = vmatprep.subr.mxu0 0.0
      %1564 = vmatpush1.msra.mxu0 0.0
      %1565 = vmatprep.subr.mxu0 0.0
      %1566 = vmatpush1.msra.mxu0 0.0
      %1567 = vmatprep.subr.mxu0 0.0
      %1568 = vmatpush1.msra.mxu0 0.0
      %1569 = vmatprep.mubr.f32.mxu0 0.0
      %1570 = vmatmul.mubr.f32.gmra.mrb[0].mxu0 %v1455
      %v1571 = vpop.f32.mrb[0].mxu0
      %v1572 = vadd.f32 0.0, %v1571
      %v1573 = vpop.f32.mrb[0].mxu0
      %1574 = vmatprep.mubr.f32.mxu0 0.0
      %1575 = vmatmul.mubr.f32.gmra.mrb[0].mxu0 %v1458
      %v1576 = vpop.f32.mrb[0].mxu0
      %v1577 = vadd.f32 0.0, %v1576
      %v1578 = vpop.f32.mrb[0].mxu0
      %1579 = vmatprep.mubr.f32.mxu0 0.0
      %1580 = vmatmul.mubr.f32.gmra.mrb[0].mxu0 %v1461
      %v1581 = vpop.f32.mrb[0].mxu0
      %v1582 = vadd.f32 0.0, %v1581
      %v1583 = vpop.f32.mrb[0].mxu0
      %1584 = vmatprep.mubr.f32.mxu0 0.0
      %1585 = vmatmul.mubr.f32.gmra.mrb[0].mxu0 %v1464
      %v1586 = vpop.f32.mrb[0].mxu0
      %v1587 = vadd.f32 0.0, %v1586
      %v1588 = vpop.f32.mrb[0].mxu0
      %1589 = vmatprep.mubr.f32.mxu0 0.0
      %1590 = vmatmul.mubr.f32.gmra.mrb[0].mxu0 %v1467
      %v1591 = vpop.f32.mrb[0].mxu0
      %v1592 = vadd.f32 0.0, %v1591
      %v1593 = vpop.f32.mrb[0].mxu0
      %1594 = vmatprep.mubr.f32.mxu0 0.0
      %1595 = vmatmul.mubr.f32.gmra.mrb[0].mxu0 %v1470
      %v1596 = vpop.f32.mrb[0].mxu0
      %v1597 = vadd.f32 0.0, %v1596
      %v1598 = vpop.f32.mrb[0].mxu0
      %1599 = vmatprep.mubr.f32.mxu0 0.0
      %1600 = vmatmul.mubr.f32.gmra.mrb[0].mxu0 %v1473
      %v1601 = vpop.f32.mrb[0].mxu0
      %v1602 = vadd.f32 0.0, %v1601
      %v1603 = vpop.f32.mrb[0].mxu0
      %1604 = vmatprep.mubr.f32.mxu0 0.0
      %1605 = vmatmul.mubr.f32.gmra.mrb[0].mxu0 %v1476
      %v1606 = vpop.f32.mrb[0].mxu0
      %v1607 = vadd.f32 0.0, %v1606
      %v1608 = vpop.f32.mrb[0].mxu0
      %1609 = vmatprep.mubr.f32.mxu0 0.0
      %1610 = vmatmul.mubr.f32.gmra.mrb[0].mxu0 %v1479
      %v1611 = vpop.f32.mrb[0].mxu0
      %v1612 = vadd.f32 0.0, %v1611
      %v1613 = vpop.f32.mrb[0].mxu0
      %1614 = vmatprep.mubr.f32.mxu0 0.0
      %1615 = vmatmul.mubr.f32.gmra.mrb[0].mxu0 %v1482
      %v1616 = vpop.f32.mrb[0].mxu0
      %v1617 = vadd.f32 0.0, %v1616
      %v1618 = vpop.f32.mrb[0].mxu0
      %1619 = vmatprep.mubr.f32.mxu0 0.0
      %1620 = vmatmul.mubr.f32.gmra.mrb[0].mxu0 %v1485
      %v1621 = vpop.f32.mrb[0].mxu0
      %v1622 = vadd.f32 0.0, %v1621
      %v1623 = vpop.f32.mrb[0].mxu0
      %1624 = vmatprep.mubr.f32.mxu0 0.0
      %1625 = vmatmul.mubr.f32.gmra.mrb[0].mxu0 %v1488
      %v1626 = vpop.f32.mrb[0].mxu0
      %v1627 = vadd.f32 0.0, %v1626
      %v1628 = vpop.f32.mrb[0].mxu0
      %1629 = vmatprep.mubr.f32.mxu0 0.0
      %1630 = vmatmul.mubr.f32.gmra.mrb[0].mxu0 %v1491
      %v1631 = vpop.f32.mrb[0].mxu0
      %v1632 = vadd.f32 0.0, %v1631
      %v1633 = vpop.f32.mrb[0].mxu0
      %1634 = vmatprep.mubr.f32.mxu0 0.0
      %1635 = vmatmul.mubr.f32.gmra.mrb[0].mxu0 %v1494
      %v1636 = vpop.f32.mrb[0].mxu0
      %v1637 = vadd.f32 0.0, %v1636
      %v1638 = vpop.f32.mrb[0].mxu0
      %1639 = vmatprep.mubr.f32.mxu0 0.0
      %1640 = vmatmul.mubr.f32.gmra.mrb[0].mxu0 %v1497
      %v1641 = vpop.f32.mrb[0].mxu0
      %v1642 = vadd.f32 0.0, %v1641
      %v1643 = vpop.f32.mrb[0].mxu0
      %1644 = vmatprep.mubr.f32.mxu0 0.0
      %1645 = vmatmul.mubr.f32.gmra.mrb[0].mxu0 %v1500
      %v1646 = vpop.f32.mrb[0].mxu0
      %v1647 = vadd.f32 0.0, %v1646
      %v1648 = vpop.f32.mrb[0].mxu0
      %1649 = vdwg.mxu0
      %v1650 = vadd.f32 %v1421, %v1572
      %v1651 = vadd.f32 %v1422, %v1577
      %v1652 = vadd.f32 %v1423, %v1582
      %v1653 = vadd.f32 %v1424, %v1587
      %v1654 = vadd.f32 %v1425, %v1592
      %v1655 = vadd.f32 %v1426, %v1597
      %v1656 = vadd.f32 %v1427, %v1602
      %v1657 = vadd.f32 %v1428, %v1607
      %v1658 = vadd.f32 %v1429, %v1612
      %v1659 = vadd.f32 %v1430, %v1617
      %v1660 = vadd.f32 %v1431, %v1622
      %v1661 = vadd.f32 %v1432, %v1627
      %v1662 = vadd.f32 %v1433, %v1632
      %v1663 = vadd.f32 %v1434, %v1637
      %v1664 = vadd.f32 %v1435, %v1642
      %v1665 = vadd.f32 %v1436, %v1647
      %v1666 = vld [vmem:[%s479 + $0x2] sm:$0xff]
      %v1667 = vld [vmem:[%s479 + $0xa] sm:$0xff]
      %v1668 = vld [vmem:[%s479 + $0x1a] sm:$0xff]
      %v1669 = vld [vmem:[%s479 + $0x22] sm:$0xff]
      %v1670 = vld [vmem:[%s479 + $0x32] sm:$0xff]
      %v1671 = vld [vmem:[%s479 + $0x3a] sm:$0xff]
      %v1672 = vld [vmem:[%s479 + $0x4a] sm:$0xff]
      %v1673 = vld [vmem:[%s479 + $0x52] sm:$0xff]
      %v1674 = vld [vmem:[%s479 + $0x62] sm:$0xff]
      %v1675 = vld [vmem:[%s479 + $0x6a] sm:$0xff]
      %v1676 = vld [vmem:[%s479 + $0x7a] sm:$0xff]
      %v1677 = vld [vmem:[%s479 + $0x82] sm:$0xff]
      %v1678 = vld [vmem:[%s479 + $0x92] sm:$0xff]
      %v1679 = vld [vmem:[%s479 + $0x9a] sm:$0xff]
      %v1680 = vld [vmem:[%s479 + $0xaa] sm:$0xff]
      %v1681 = vld [vmem:[%s479 + $0xb2] sm:$0xff]
      %v1682 = vld [vmem:[%s3 + $0x14] sm:$0xf]
      %v1684 = vsel %vm480, %v1666, 0
      %v1687 = vsel %vm480, %v1667, 0
      %v1690 = vsel %vm480, %v1668, 0
      %v1693 = vsel %vm480, %v1669, 0
      %v1696 = vsel %vm480, %v1670, 0
      %v1699 = vsel %vm480, %v1671, 0
      %v1702 = vsel %vm480, %v1672, 0
      %v1705 = vsel %vm480, %v1673, 0
      %v1708 = vsel %vm480, %v1674, 0
      %v1711 = vsel %vm480, %v1675, 0
      %v1714 = vsel %vm480, %v1676, 0
      %v1717 = vsel %vm480, %v1677, 0
      %v1720 = vsel %vm480, %v1678, 0
      %v1723 = vsel %vm480, %v1679, 0
      %v1726 = vsel %vm480, %v1680, 0
      %v1729 = vsel %vm480, %v1681, 0
      %v1732 = vsel %vm634, %v1682, 0
      %1734 = vmatprep.subr.mxu0 0.0
      %1735 = vmatpush1.msra.mxu0 %v1732
      %1736 = vmatprep.subr.mxu0 0.0
      %1737 = vmatpush1.msra.mxu0 0.0
      %1738 = vmatprep.subr.mxu0 0.0
      %1739 = vmatpush1.msra.mxu0 0.0
      %1740 = vmatprep.subr.mxu0 0.0
      %1741 = vmatpush1.msra.mxu0 0.0
      %1742 = vmatprep.subr.mxu0 0.0
      %1743 = vmatpush1.msra.mxu0 0.0
      %1744 = vmatprep.subr.mxu0 0.0
      %1745 = vmatpush1.msra.mxu0 0.0
      %1746 = vmatprep.subr.mxu0 0.0
      %1747 = vmatpush1.msra.mxu0 0.0
      %1748 = vmatprep.subr.mxu0 0.0
      %1749 = vmatpush1.msra.mxu0 0.0
      %1750 = vmatprep.subr.mxu0 0.0
      %1751 = vmatpush1.msra.mxu0 0.0
      %1752 = vmatprep.subr.mxu0 0.0
      %1753 = vmatpush1.msra.mxu0 0.0
      %1754 = vmatprep.subr.mxu0 0.0
      %1755 = vmatpush1.msra.mxu0 0.0
      %1756 = vmatprep.subr.mxu0 0.0
      %1757 = vmatpush1.msra.mxu0 0.0
      %1758 = vmatprep.subr.mxu0 0.0
      %1759 = vmatpush1.msra.mxu0 0.0
      %1760 = vmatprep.subr.mxu0 0.0
      %1761 = vmatpush1.msra.mxu0 0.0
      %1762 = vmatprep.subr.mxu0 0.0
      %1763 = vmatpush1.msra.mxu0 0.0
      %1764 = vmatprep.subr.mxu0 0.0
      %1765 = vmatpush1.msra.mxu0 0.0
      %1766 = vmatprep.subr.mxu0 0.0
      %1767 = vmatpush1.msra.mxu0 0.0
      %1768 = vmatprep.subr.mxu0 0.0
      %1769 = vmatpush1.msra.mxu0 0.0
      %1770 = vmatprep.subr.mxu0 0.0
      %1771 = vmatpush1.msra.mxu0 0.0
      %1772 = vmatprep.subr.mxu0 0.0
      %1773 = vmatpush1.msra.mxu0 0.0
      %1774 = vmatprep.subr.mxu0 0.0
      %1775 = vmatpush1.msra.mxu0 0.0
      %1776 = vmatprep.subr.mxu0 0.0
      %1777 = vmatpush1.msra.mxu0 0.0
      %1778 = vmatprep.subr.mxu0 0.0
      %1779 = vmatpush1.msra.mxu0 0.0
      %1780 = vmatprep.subr.mxu0 0.0
      %1781 = vmatpush1.msra.mxu0 0.0
      %1782 = vmatprep.subr.mxu0 0.0
      %1783 = vmatpush1.msra.mxu0 0.0
      %1784 = vmatprep.subr.mxu0 0.0
      %1785 = vmatpush1.msra.mxu0 0.0
      %1786 = vmatprep.subr.mxu0 0.0
      %1787 = vmatpush1.msra.mxu0 0.0
      %1788 = vmatprep.subr.mxu0 0.0
      %1789 = vmatpush1.msra.mxu0 0.0
      %1790 = vmatprep.subr.mxu0 0.0
      %1791 = vmatpush1.msra.mxu0 0.0
      %1792 = vmatprep.subr.mxu0 0.0
      %1793 = vmatpush1.msra.mxu0 0.0
      %1794 = vmatprep.subr.mxu0 0.0
      %1795 = vmatpush1.msra.mxu0 0.0
      %1796 = vmatprep.subr.mxu0 0.0
      %1797 = vmatpush1.msra.mxu0 0.0
      %1798 = vmatprep.mubr.f32.mxu0 0.0
      %1799 = vmatmul.mubr.f32.gmra.mrb[0].mxu0 %v1684
      %v1800 = vpop.f32.mrb[0].mxu0
      %v1801 = vadd.f32 0.0, %v1800
      %v1802 = vpop.f32.mrb[0].mxu0
      %1803 = vmatprep.mubr.f32.mxu0 0.0
      %1804 = vmatmul.mubr.f32.gmra.mrb[0].mxu0 %v1687
      %v1805 = vpop.f32.mrb[0].mxu0
      %v1806 = vadd.f32 0.0, %v1805
      %v1807 = vpop.f32.mrb[0].mxu0
      %1808 = vmatprep.mubr.f32.mxu0 0.0
      %1809 = vmatmul.mubr.f32.gmra.mrb[0].mxu0 %v1690
      %v1810 = vpop.f32.mrb[0].mxu0
      %v1811 = vadd.f32 0.0, %v1810
      %v1812 = vpop.f32.mrb[0].mxu0
      %1813 = vmatprep.mubr.f32.mxu0 0.0
      %1814 = vmatmul.mubr.f32.gmra.mrb[0].mxu0 %v1693
      %v1815 = vpop.f32.mrb[0].mxu0
      %v1816 = vadd.f32 0.0, %v1815
      %v1817 = vpop.f32.mrb[0].mxu0
      %1818 = vmatprep.mubr.f32.mxu0 0.0
      %1819 = vmatmul.mubr.f32.gmra.mrb[0].mxu0 %v1696
      %v1820 = vpop.f32.mrb[0].mxu0
      %v1821 = vadd.f32 0.0, %v1820
      %v1822 = vpop.f32.mrb[0].mxu0
      %1823 = vmatprep.mubr.f32.mxu0 0.0
      %1824 = vmatmul.mubr.f32.gmra.mrb[0].mxu0 %v1699
      %v1825 = vpop.f32.mrb[0].mxu0
      %v1826 = vadd.f32 0.0, %v1825
      %v1827 = vpop.f32.mrb[0].mxu0
      %1828 = vmatprep.mubr.f32.mxu0 0.0
      %1829 = vmatmul.mubr.f32.gmra.mrb[0].mxu0 %v1702
      %v1830 = vpop.f32.mrb[0].mxu0
      %v1831 = vadd.f32 0.0, %v1830
      %v1832 = vpop.f32.mrb[0].mxu0
      %1833 = vmatprep.mubr.f32.mxu0 0.0
      %1834 = vmatmul.mubr.f32.gmra.mrb[0].mxu0 %v1705
      %v1835 = vpop.f32.mrb[0].mxu0
      %v1836 = vadd.f32 0.0, %v1835
      %v1837 = vpop.f32.mrb[0].mxu0
      %1838 = vmatprep.mubr.f32.mxu0 0.0
      %1839 = vmatmul.mubr.f32.gmra.mrb[0].mxu0 %v1708
      %v1840 = vpop.f32.mrb[0].mxu0
      %v1841 = vadd.f32 0.0, %v1840
      %v1842 = vpop.f32.mrb[0].mxu0
      %1843 = vmatprep.mubr.f32.mxu0 0.0
      %1844 = vmatmul.mubr.f32.gmra.mrb[0].mxu0 %v1711
      %v1845 = vpop.f32.mrb[0].mxu0
      %v1846 = vadd.f32 0.0, %v1845
      %v1847 = vpop.f32.mrb[0].mxu0
      %1848 = vmatprep.mubr.f32.mxu0 0.0
      %1849 = vmatmul.mubr.f32.gmra.mrb[0].mxu0 %v1714
      %v1850 = vpop.f32.mrb[0].mxu0
      %v1851 = vadd.f32 0.0, %v1850
      %v1852 = vpop.f32.mrb[0].mxu0
      %1853 = vmatprep.mubr.f32.mxu0 0.0
      %1854 = vmatmul.mubr.f32.gmra.mrb[0].mxu0 %v1717
      %v1855 = vpop.f32.mrb[0].mxu0
      %v1856 = vadd.f32 0.0, %v1855
      %v1857 = vpop.f32.mrb[0].mxu0
      %1858 = vmatprep.mubr.f32.mxu0 0.0
      %1859 = vmatmul.mubr.f32.gmra.mrb[0].mxu0 %v1720
      %v1860 = vpop.f32.mrb[0].mxu0
      %v1861 = vadd.f32 0.0, %v1860
      %v1862 = vpop.f32.mrb[0].mxu0
      %1863 = vmatprep.mubr.f32.mxu0 0.0
      %1864 = vmatmul.mubr.f32.gmra.mrb[0].mxu0 %v1723
      %v1865 = vpop.f32.mrb[0].mxu0
      %v1866 = vadd.f32 0.0, %v1865
      %v1867 = vpop.f32.mrb[0].mxu0
      %1868 = vmatprep.mubr.f32.mxu0 0.0
      %1869 = vmatmul.mubr.f32.gmra.mrb[0].mxu0 %v1726
      %v1870 = vpop.f32.mrb[0].mxu0
      %v1871 = vadd.f32 0.0, %v1870
      %v1872 = vpop.f32.mrb[0].mxu0
      %1873 = vmatprep.mubr.f32.mxu0 0.0
      %1874 = vmatmul.mubr.f32.gmra.mrb[0].mxu0 %v1729
      %v1875 = vpop.f32.mrb[0].mxu0
      %v1876 = vadd.f32 0.0, %v1875
      %v1877 = vpop.f32.mrb[0].mxu0
      %1878 = vdwg.mxu0
      %v1879 = vadd.f32 %v1650, %v1801
      %v1880 = vadd.f32 %v1651, %v1806
      %v1881 = vadd.f32 %v1652, %v1811
      %v1882 = vadd.f32 %v1653, %v1816
      %v1883 = vadd.f32 %v1654, %v1821
      %v1884 = vadd.f32 %v1655, %v1826
      %v1885 = vadd.f32 %v1656, %v1831
      %v1886 = vadd.f32 %v1657, %v1836
      %v1887 = vadd.f32 %v1658, %v1841
      %v1888 = vadd.f32 %v1659, %v1846
      %v1889 = vadd.f32 %v1660, %v1851
      %v1890 = vadd.f32 %v1661, %v1856
      %v1891 = vadd.f32 %v1662, %v1861
      %v1892 = vadd.f32 %v1663, %v1866
      %v1893 = vadd.f32 %v1664, %v1871
      %v1894 = vadd.f32 %v1665, %v1876
      %s1895 = scalar_lea.vmem [#allocation2], 48
      %v1896 = vld [vmem:[%s1895] sm:$0xff]
      %v1897 = vld [vmem:[%s1895 + $0x8] sm:$0xff]
      %v1898 = vld [vmem:[%s1895 + $0x18] sm:$0xff]
      %v1899 = vld [vmem:[%s1895 + $0x20] sm:$0xff]
      %v1900 = vld [vmem:[%s1895 + $0x30] sm:$0xff]
      %v1901 = vld [vmem:[%s1895 + $0x38] sm:$0xff]
      %v1902 = vld [vmem:[%s1895 + $0x48] sm:$0xff]
      %v1903 = vld [vmem:[%s1895 + $0x50] sm:$0xff]
      %v1904 = vld [vmem:[%s1895 + $0x60] sm:$0xff]
      %v1905 = vld [vmem:[%s1895 + $0x68] sm:$0xff]
      %v1906 = vld [vmem:[%s1895 + $0x78] sm:$0xff]
      %v1907 = vld [vmem:[%s1895 + $0x80] sm:$0xff]
      %v1908 = vld [vmem:[%s1895 + $0x90] sm:$0xff]
      %v1909 = vld [vmem:[%s1895 + $0x98] sm:$0xff]
      %v1910 = vld [vmem:[%s1895 + $0xa8] sm:$0xff]
      %v1911 = vld [vmem:[%s1895 + $0xb0] sm:$0xff]
      %v1912 = vld [vmem:[%s3 + $0x18] sm:$0xf]
      %v1914 = vsel %vm480, %v1896, 0
      %v1917 = vsel %vm480, %v1897, 0
      %v1920 = vsel %vm480, %v1898, 0
      %v1923 = vsel %vm480, %v1899, 0
      %v1926 = vsel %vm480, %v1900, 0
      %v1929 = vsel %vm480, %v1901, 0
      %v1932 = vsel %vm480, %v1902, 0
      %v1935 = vsel %vm480, %v1903, 0
      %v1938 = vsel %vm480, %v1904, 0
      %v1941 = vsel %vm480, %v1905, 0
      %v1944 = vsel %vm480, %v1906, 0
      %v1947 = vsel %vm480, %v1907, 0
      %v1950 = vsel %vm480, %v1908, 0
      %v1953 = vsel %vm480, %v1909, 0
      %v1956 = vsel %vm480, %v1910, 0
      %v1959 = vsel %vm480, %v1911, 0
      %v1962 = vsel %vm634, %v1912, 0
      %1964 = vmatprep.subr.mxu0 0.0
      %1965 = vmatpush1.msra.mxu0 %v1962
      %1966 = vmatprep.subr.mxu0 0.0
      %1967 = vmatpush1.msra.mxu0 0.0
      %1968 = vmatprep.subr.mxu0 0.0
      %1969 = vmatpush1.msra.mxu0 0.0
      %1970 = vmatprep.subr.mxu0 0.0
      %1971 = vmatpush1.msra.mxu0 0.0
      %1972 = vmatprep.subr.mxu0 0.0
      %1973 = vmatpush1.msra.mxu0 0.0
      %1974 = vmatprep.subr.mxu0 0.0
      %1975 = vmatpush1.msra.mxu0 0.0
      %1976 = vmatprep.subr.mxu0 0.0
      %1977 = vmatpush1.msra.mxu0 0.0
      %1978 = vmatprep.subr.mxu0 0.0
      %1979 = vmatpush1.msra.mxu0 0.0
      %1980 = vmatprep.subr.mxu0 0.0
      %1981 = vmatpush1.msra.mxu0 0.0
      %1982 = vmatprep.subr.mxu0 0.0
      %1983 = vmatpush1.msra.mxu0 0.0
      %1984 = vmatprep.subr.mxu0 0.0
      %1985 = vmatpush1.msra.mxu0 0.0
      %1986 = vmatprep.subr.mxu0 0.0
      %1987 = vmatpush1.msra.mxu0 0.0
      %1988 = vmatprep.subr.mxu0 0.0
      %1989 = vmatpush1.msra.mxu0 0.0
      %1990 = vmatprep.subr.mxu0 0.0
      %1991 = vmatpush1.msra.mxu0 0.0
      %1992 = vmatprep.subr.mxu0 0.0
      %1993 = vmatpush1.msra.mxu0 0.0
      %1994 = vmatprep.subr.mxu0 0.0
      %1995 = vmatpush1.msra.mxu0 0.0
      %1996 = vmatprep.subr.mxu0 0.0
      %1997 = vmatpush1.msra.mxu0 0.0
      %1998 = vmatprep.subr.mxu0 0.0
      %1999 = vmatpush1.msra.mxu0 0.0
      %2000 = vmatprep.subr.mxu0 0.0
      %2001 = vmatpush1.msra.mxu0 0.0
      %2002 = vmatprep.subr.mxu0 0.0
      %2003 = vmatpush1.msra.mxu0 0.0
      %2004 = vmatprep.subr.mxu0 0.0
      %2005 = vmatpush1.msra.mxu0 0.0
      %2006 = vmatprep.subr.mxu0 0.0
      %2007 = vmatpush1.msra.mxu0 0.0
      %2008 = vmatprep.subr.mxu0 0.0
      %2009 = vmatpush1.msra.mxu0 0.0
      %2010 = vmatprep.subr.mxu0 0.0
      %2011 = vmatpush1.msra.mxu0 0.0
      %2012 = vmatprep.subr.mxu0 0.0
      %2013 = vmatpush1.msra.mxu0 0.0
      %2014 = vmatprep.subr.mxu0 0.0
      %2015 = vmatpush1.msra.mxu0 0.0
      %2016 = vmatprep.subr.mxu0 0.0
      %2017 = vmatpush1.msra.mxu0 0.0
      %2018 = vmatprep.subr.mxu0 0.0
      %2019 = vmatpush1.msra.mxu0 0.0
      %2020 = vmatprep.subr.mxu0 0.0
      %2021 = vmatpush1.msra.mxu0 0.0
      %2022 = vmatprep.subr.mxu0 0.0
      %2023 = vmatpush1.msra.mxu0 0.0
      %2024 = vmatprep.subr.mxu0 0.0
      %2025 = vmatpush1.msra.mxu0 0.0
      %2026 = vmatprep.subr.mxu0 0.0
      %2027 = vmatpush1.msra.mxu0 0.0
      %2028 = vmatprep.mubr.f32.mxu0 0.0
      %2029 = vmatmul.mubr.f32.gmra.mrb[0].mxu0 %v1914
      %v2030 = vpop.f32.mrb[0].mxu0
      %v2031 = vadd.f32 0.0, %v2030
      %v2032 = vpop.f32.mrb[0].mxu0
      %2033 = vmatprep.mubr.f32.mxu0 0.0
      %2034 = vmatmul.mubr.f32.gmra.mrb[0].mxu0 %v1917
      %v2035 = vpop.f32.mrb[0].mxu0
      %v2036 = vadd.f32 0.0, %v2035
      %v2037 = vpop.f32.mrb[0].mxu0
      %2038 = vmatprep.mubr.f32.mxu0 0.0
      %2039 = vmatmul.mubr.f32.gmra.mrb[0].mxu0 %v1920
      %v2040 = vpop.f32.mrb[0].mxu0
      %v2041 = vadd.f32 0.0, %v2040
      %v2042 = vpop.f32.mrb[0].mxu0
      %2043 = vmatprep.mubr.f32.mxu0 0.0
      %2044 = vmatmul.mubr.f32.gmra.mrb[0].mxu0 %v1923
      %v2045 = vpop.f32.mrb[0].mxu0
      %v2046 = vadd.f32 0.0, %v2045
      %v2047 = vpop.f32.mrb[0].mxu0
      %2048 = vmatprep.mubr.f32.mxu0 0.0
      %2049 = vmatmul.mubr.f32.gmra.mrb[0].mxu0 %v1926
      %v2050 = vpop.f32.mrb[0].mxu0
      %v2051 = vadd.f32 0.0, %v2050
      %v2052 = vpop.f32.mrb[0].mxu0
      %2053 = vmatprep.mubr.f32.mxu0 0.0
      %2054 = vmatmul.mubr.f32.gmra.mrb[0].mxu0 %v1929
      %v2055 = vpop.f32.mrb[0].mxu0
      %v2056 = vadd.f32 0.0, %v2055
      %v2057 = vpop.f32.mrb[0].mxu0
      %2058 = vmatprep.mubr.f32.mxu0 0.0
      %2059 = vmatmul.mubr.f32.gmra.mrb[0].mxu0 %v1932
      %v2060 = vpop.f32.mrb[0].mxu0
      %v2061 = vadd.f32 0.0, %v2060
      %v2062 = vpop.f32.mrb[0].mxu0
      %2063 = vmatprep.mubr.f32.mxu0 0.0
      %2064 = vmatmul.mubr.f32.gmra.mrb[0].mxu0 %v1935
      %v2065 = vpop.f32.mrb[0].mxu0
      %v2066 = vadd.f32 0.0, %v2065
      %v2067 = vpop.f32.mrb[0].mxu0
      %2068 = vmatprep.mubr.f32.mxu0 0.0
      %2069 = vmatmul.mubr.f32.gmra.mrb[0].mxu0 %v1938
      %v2070 = vpop.f32.mrb[0].mxu0
      %v2071 = vadd.f32 0.0, %v2070
      %v2072 = vpop.f32.mrb[0].mxu0
      %2073 = vmatprep.mubr.f32.mxu0 0.0
      %2074 = vmatmul.mubr.f32.gmra.mrb[0].mxu0 %v1941
      %v2075 = vpop.f32.mrb[0].mxu0
      %v2076 = vadd.f32 0.0, %v2075
      %v2077 = vpop.f32.mrb[0].mxu0
      %2078 = vmatprep.mubr.f32.mxu0 0.0
      %2079 = vmatmul.mubr.f32.gmra.mrb[0].mxu0 %v1944
      %v2080 = vpop.f32.mrb[0].mxu0
      %v2081 = vadd.f32 0.0, %v2080
      %v2082 = vpop.f32.mrb[0].mxu0
      %2083 = vmatprep.mubr.f32.mxu0 0.0
      %2084 = vmatmul.mubr.f32.gmra.mrb[0].mxu0 %v1947
      %v2085 = vpop.f32.mrb[0].mxu0
      %v2086 = vadd.f32 0.0, %v2085
      %v2087 = vpop.f32.mrb[0].mxu0
      %2088 = vmatprep.mubr.f32.mxu0 0.0
      %2089 = vmatmul.mubr.f32.gmra.mrb[0].mxu0 %v1950
      %v2090 = vpop.f32.mrb[0].mxu0
      %v2091 = vadd.f32 0.0, %v2090
      %v2092 = vpop.f32.mrb[0].mxu0
      %2093 = vmatprep.mubr.f32.mxu0 0.0
      %2094 = vmatmul.mubr.f32.gmra.mrb[0].mxu0 %v1953
      %v2095 = vpop.f32.mrb[0].mxu0
      %v2096 = vadd.f32 0.0, %v2095
      %v2097 = vpop.f32.mrb[0].mxu0
      %2098 = vmatprep.mubr.f32.mxu0 0.0
      %2099 = vmatmul.mubr.f32.gmra.mrb[0].mxu0 %v1956
      %v2100 = vpop.f32.mrb[0].mxu0
      %v2101 = vadd.f32 0.0, %v2100
      %v2102 = vpop.f32.mrb[0].mxu0
      %2103 = vmatprep.mubr.f32.mxu0 0.0
      %2104 = vmatmul.mubr.f32.gmra.mrb[0].mxu0 %v1959
      %v2105 = vpop.f32.mrb[0].mxu0
      %v2106 = vadd.f32 0.0, %v2105
      %v2107 = vpop.f32.mrb[0].mxu0
      %2108 = vdwg.mxu0
      %v2109 = vadd.f32 %v1879, %v2031
      %v2110 = vadd.f32 %v1880, %v2036
      %v2111 = vadd.f32 %v1881, %v2041
      %v2112 = vadd.f32 %v1882, %v2046
      %v2113 = vadd.f32 %v1883, %v2051
      %v2114 = vadd.f32 %v1884, %v2056
      %v2115 = vadd.f32 %v1885, %v2061
      %v2116 = vadd.f32 %v1886, %v2066
      %v2117 = vadd.f32 %v1887, %v2071
      %v2118 = vadd.f32 %v1888, %v2076
      %v2119 = vadd.f32 %v1889, %v2081
      %v2120 = vadd.f32 %v1890, %v2086
      %v2121 = vadd.f32 %v1891, %v2091
      %v2122 = vadd.f32 %v1892, %v2096
      %v2123 = vadd.f32 %v1893, %v2101
      %v2124 = vadd.f32 %v1894, %v2106
      %v2125 = vld [vmem:[%s1895 + $0x1] sm:$0xff]
      %v2126 = vld [vmem:[%s1895 + $0x9] sm:$0xff]
      %v2127 = vld [vmem:[%s1895 + $0x19] sm:$0xff]
      %v2128 = vld [vmem:[%s1895 + $0x21] sm:$0xff]
      %v2129 = vld [vmem:[%s1895 + $0x31] sm:$0xff]
      %v2130 = vld [vmem:[%s1895 + $0x39] sm:$0xff]
      %v2131 = vld [vmem:[%s1895 + $0x49] sm:$0xff]
      %v2132 = vld [vmem:[%s1895 + $0x51] sm:$0xff]
      %v2133 = vld [vmem:[%s1895 + $0x61] sm:$0xff]
      %v2134 = vld [vmem:[%s1895 + $0x69] sm:$0xff]
      %v2135 = vld [vmem:[%s1895 + $0x79] sm:$0xff]
      %v2136 = vld [vmem:[%s1895 + $0x81] sm:$0xff]
      %v2137 = vld [vmem:[%s1895 + $0x91] sm:$0xff]
      %v2138 = vld [vmem:[%s1895 + $0x99] sm:$0xff]
      %v2139 = vld [vmem:[%s1895 + $0xa9] sm:$0xff]
      %v2140 = vld [vmem:[%s1895 + $0xb1] sm:$0xff]
      %v2141 = vld [vmem:[%s3 + $0x1c] sm:$0xf]
      %v2143 = vsel %vm480, %v2125, 0
      %v2146 = vsel %vm480, %v2126, 0
      %v2149 = vsel %vm480, %v2127, 0
      %v2152 = vsel %vm480, %v2128, 0
      %v2155 = vsel %vm480, %v2129, 0
      %v2158 = vsel %vm480, %v2130, 0
      %v2161 = vsel %vm480, %v2131, 0
      %v2164 = vsel %vm480, %v2132, 0
      %v2167 = vsel %vm480, %v2133, 0
      %v2170 = vsel %vm480, %v2134, 0
      %v2173 = vsel %vm480, %v2135, 0
      %v2176 = vsel %vm480, %v2136, 0
      %v2179 = vsel %vm480, %v2137, 0
      %v2182 = vsel %vm480, %v2138, 0
      %v2185 = vsel %vm480, %v2139, 0
      %v2188 = vsel %vm480, %v2140, 0
      %v2191 = vsel %vm634, %v2141, 0
      %2193 = vmatprep.subr.mxu0 0.0
      %2194 = vmatpush1.msra.mxu0 %v2191
      %2195 = vmatprep.subr.mxu0 0.0
      %2196 = vmatpush1.msra.mxu0 0.0
      %2197 = vmatprep.subr.mxu0 0.0
      %2198 = vmatpush1.msra.mxu0 0.0
      %2199 = vmatprep.subr.mxu0 0.0
      %2200 = vmatpush1.msra.mxu0 0.0
      %2201 = vmatprep.subr.mxu0 0.0
      %2202 = vmatpush1.msra.mxu0 0.0
      %2203 = vmatprep.subr.mxu0 0.0
      %2204 = vmatpush1.msra.mxu0 0.0
      %2205 = vmatprep.subr.mxu0 0.0
      %2206 = vmatpush1.msra.mxu0 0.0
      %2207 = vmatprep.subr.mxu0 0.0
      %2208 = vmatpush1.msra.mxu0 0.0
      %2209 = vmatprep.subr.mxu0 0.0
      %2210 = vmatpush1.msra.mxu0 0.0
      %2211 = vmatprep.subr.mxu0 0.0
      %2212 = vmatpush1.msra.mxu0 0.0
      %2213 = vmatprep.subr.mxu0 0.0
      %2214 = vmatpush1.msra.mxu0 0.0
      %2215 = vmatprep.subr.mxu0 0.0
      %2216 = vmatpush1.msra.mxu0 0.0
      %2217 = vmatprep.subr.mxu0 0.0
      %2218 = vmatpush1.msra.mxu0 0.0
      %2219 = vmatprep.subr.mxu0 0.0
      %2220 = vmatpush1.msra.mxu0 0.0
      %2221 = vmatprep.subr.mxu0 0.0
      %2222 = vmatpush1.msra.mxu0 0.0
      %2223 = vmatprep.subr.mxu0 0.0
      %2224 = vmatpush1.msra.mxu0 0.0
      %2225 = vmatprep.subr.mxu0 0.0
      %2226 = vmatpush1.msra.mxu0 0.0
      %2227 = vmatprep.subr.mxu0 0.0
      %2228 = vmatpush1.msra.mxu0 0.0
      %2229 = vmatprep.subr.mxu0 0.0
      %2230 = vmatpush1.msra.mxu0 0.0
      %2231 = vmatprep.subr.mxu0 0.0
      %2232 = vmatpush1.msra.mxu0 0.0
      %2233 = vmatprep.subr.mxu0 0.0
      %2234 = vmatpush1.msra.mxu0 0.0
      %2235 = vmatprep.subr.mxu0 0.0
      %2236 = vmatpush1.msra.mxu0 0.0
      %2237 = vmatprep.subr.mxu0 0.0
      %2238 = vmatpush1.msra.mxu0 0.0
      %2239 = vmatprep.subr.mxu0 0.0
      %2240 = vmatpush1.msra.mxu0 0.0
      %2241 = vmatprep.subr.mxu0 0.0
      %2242 = vmatpush1.msra.mxu0 0.0
      %2243 = vmatprep.subr.mxu0 0.0
      %2244 = vmatpush1.msra.mxu0 0.0
      %2245 = vmatprep.subr.mxu0 0.0
      %2246 = vmatpush1.msra.mxu0 0.0
      %2247 = vmatprep.subr.mxu0 0.0
      %2248 = vmatpush1.msra.mxu0 0.0
      %2249 = vmatprep.subr.mxu0 0.0
      %2250 = vmatpush1.msra.mxu0 0.0
      %2251 = vmatprep.subr.mxu0 0.0
      %2252 = vmatpush1.msra.mxu0 0.0
      %2253 = vmatprep.subr.mxu0 0.0
      %2254 = vmatpush1.msra.mxu0 0.0
      %2255 = vmatprep.subr.mxu0 0.0
      %2256 = vmatpush1.msra.mxu0 0.0
      %2257 = vmatprep.mubr.f32.mxu0 0.0
      %2258 = vmatmul.mubr.f32.gmra.mrb[0].mxu0 %v2143
      %v2259 = vpop.f32.mrb[0].mxu0
      %v2260 = vadd.f32 0.0, %v2259
      %v2261 = vpop.f32.mrb[0].mxu0
      %2262 = vmatprep.mubr.f32.mxu0 0.0
      %2263 = vmatmul.mubr.f32.gmra.mrb[0].mxu0 %v2146
      %v2264 = vpop.f32.mrb[0].mxu0
      %v2265 = vadd.f32 0.0, %v2264
      %v2266 = vpop.f32.mrb[0].mxu0
      %2267 = vmatprep.mubr.f32.mxu0 0.0
      %2268 = vmatmul.mubr.f32.gmra.mrb[0].mxu0 %v2149
      %v2269 = vpop.f32.mrb[0].mxu0
      %v2270 = vadd.f32 0.0, %v2269
      %v2271 = vpop.f32.mrb[0].mxu0
      %2272 = vmatprep.mubr.f32.mxu0 0.0
      %2273 = vmatmul.mubr.f32.gmra.mrb[0].mxu0 %v2152
      %v2274 = vpop.f32.mrb[0].mxu0
      %v2275 = vadd.f32 0.0, %v2274
      %v2276 = vpop.f32.mrb[0].mxu0
      %2277 = vmatprep.mubr.f32.mxu0 0.0
      %2278 = vmatmul.mubr.f32.gmra.mrb[0].mxu0 %v2155
      %v2279 = vpop.f32.mrb[0].mxu0
      %v2280 = vadd.f32 0.0, %v2279
      %v2281 = vpop.f32.mrb[0].mxu0
      %2282 = vmatprep.mubr.f32.mxu0 0.0
      %2283 = vmatmul.mubr.f32.gmra.mrb[0].mxu0 %v2158
      %v2284 = vpop.f32.mrb[0].mxu0
      %v2285 = vadd.f32 0.0, %v2284
      %v2286 = vpop.f32.mrb[0].mxu0
      %2287 = vmatprep.mubr.f32.mxu0 0.0
      %2288 = vmatmul.mubr.f32.gmra.mrb[0].mxu0 %v2161
      %v2289 = vpop.f32.mrb[0].mxu0
      %v2290 = vadd.f32 0.0, %v2289
      %v2291 = vpop.f32.mrb[0].mxu0
      %2292 = vmatprep.mubr.f32.mxu0 0.0
      %2293 = vmatmul.mubr.f32.gmra.mrb[0].mxu0 %v2164
      %v2294 = vpop.f32.mrb[0].mxu0
      %v2295 = vadd.f32 0.0, %v2294
      %v2296 = vpop.f32.mrb[0].mxu0
      %2297 = vmatprep.mubr.f32.mxu0 0.0
      %2298 = vmatmul.mubr.f32.gmra.mrb[0].mxu0 %v2167
      %v2299 = vpop.f32.mrb[0].mxu0
      %v2300 = vadd.f32 0.0, %v2299
      %v2301 = vpop.f32.mrb[0].mxu0
      %2302 = vmatprep.mubr.f32.mxu0 0.0
      %2303 = vmatmul.mubr.f32.gmra.mrb[0].mxu0 %v2170
      %v2304 = vpop.f32.mrb[0].mxu0
      %v2305 = vadd.f32 0.0, %v2304
      %v2306 = vpop.f32.mrb[0].mxu0
      %2307 = vmatprep.mubr.f32.mxu0 0.0
      %2308 = vmatmul.mubr.f32.gmra.mrb[0].mxu0 %v2173
      %v2309 = vpop.f32.mrb[0].mxu0
      %v2310 = vadd.f32 0.0, %v2309
      %v2311 = vpop.f32.mrb[0].mxu0
      %2312 = vmatprep.mubr.f32.mxu0 0.0
      %2313 = vmatmul.mubr.f32.gmra.mrb[0].mxu0 %v2176
      %v2314 = vpop.f32.mrb[0].mxu0
      %v2315 = vadd.f32 0.0, %v2314
      %v2316 = vpop.f32.mrb[0].mxu0
      %2317 = vmatprep.mubr.f32.mxu0 0.0
      %2318 = vmatmul.mubr.f32.gmra.mrb[0].mxu0 %v2179
      %v2319 = vpop.f32.mrb[0].mxu0
      %v2320 = vadd.f32 0.0, %v2319
      %v2321 = vpop.f32.mrb[0].mxu0
      %2322 = vmatprep.mubr.f32.mxu0 0.0
      %2323 = vmatmul.mubr.f32.gmra.mrb[0].mxu0 %v2182
      %v2324 = vpop.f32.mrb[0].mxu0
      %v2325 = vadd.f32 0.0, %v2324
      %v2326 = vpop.f32.mrb[0].mxu0
      %2327 = vmatprep.mubr.f32.mxu0 0.0
      %2328 = vmatmul.mubr.f32.gmra.mrb[0].mxu0 %v2185
      %v2329 = vpop.f32.mrb[0].mxu0
      %v2330 = vadd.f32 0.0, %v2329
      %v2331 = vpop.f32.mrb[0].mxu0
      %2332 = vmatprep.mubr.f32.mxu0 0.0
      %2333 = vmatmul.mubr.f32.gmra.mrb[0].mxu0 %v2188
      %v2334 = vpop.f32.mrb[0].mxu0
      %v2335 = vadd.f32 0.0, %v2334
      %v2336 = vpop.f32.mrb[0].mxu0
      %2337 = vdwg.mxu0
      %v2338 = vadd.f32 %v2109, %v2260
      %v2339 = vadd.f32 %v2110, %v2265
      %v2340 = vadd.f32 %v2111, %v2270
      %v2341 = vadd.f32 %v2112, %v2275
      %v2342 = vadd.f32 %v2113, %v2280
      %v2343 = vadd.f32 %v2114, %v2285
      %v2344 = vadd.f32 %v2115, %v2290
      %v2345 = vadd.f32 %v2116, %v2295
      %v2346 = vadd.f32 %v2117, %v2300
      %v2347 = vadd.f32 %v2118, %v2305
      %v2348 = vadd.f32 %v2119, %v2310
      %v2349 = vadd.f32 %v2120, %v2315
      %v2350 = vadd.f32 %v2121, %v2320
      %v2351 = vadd.f32 %v2122, %v2325
      %v2352 = vadd.f32 %v2123, %v2330
      %v2353 = vadd.f32 %v2124, %v2335
      %v2354 = vld [vmem:[%s1895 + $0x2] sm:$0xff]
      %v2355 = vld [vmem:[%s1895 + $0xa] sm:$0xff]
      %v2356 = vld [vmem:[%s1895 + $0x1a] sm:$0xff]
      %v2357 = vld [vmem:[%s1895 + $0x22] sm:$0xff]
      %v2358 = vld [vmem:[%s1895 + $0x32] sm:$0xff]
      %v2359 = vld [vmem:[%s1895 + $0x3a] sm:$0xff]
      %v2360 = vld [vmem:[%s1895 + $0x4a] sm:$0xff]
      %v2361 = vld [vmem:[%s1895 + $0x52] sm:$0xff]
      %v2362 = vld [vmem:[%s1895 + $0x62] sm:$0xff]
      %v2363 = vld [vmem:[%s1895 + $0x6a] sm:$0xff]
      %v2364 = vld [vmem:[%s1895 + $0x7a] sm:$0xff]
      %v2365 = vld [vmem:[%s1895 + $0x82] sm:$0xff]
      %v2366 = vld [vmem:[%s1895 + $0x92] sm:$0xff]
      %v2367 = vld [vmem:[%s1895 + $0x9a] sm:$0xff]
      %v2368 = vld [vmem:[%s1895 + $0xaa] sm:$0xff]
      %v2369 = vld [vmem:[%s1895 + $0xb2] sm:$0xff]
      %v2370 = vld [vmem:[%s3 + $0x20] sm:$0xf]
      %v2372 = vsel %vm480, %v2354, 0
      %v2375 = vsel %vm480, %v2355, 0
      %v2378 = vsel %vm480, %v2356, 0
      %v2381 = vsel %vm480, %v2357, 0
      %v2384 = vsel %vm480, %v2358, 0
      %v2387 = vsel %vm480, %v2359, 0
      %v2390 = vsel %vm480, %v2360, 0
      %v2393 = vsel %vm480, %v2361, 0
      %v2396 = vsel %vm480, %v2362, 0
      %v2399 = vsel %vm480, %v2363, 0
      %v2402 = vsel %vm480, %v2364, 0
      %v2405 = vsel %vm480, %v2365, 0
      %v2408 = vsel %vm480, %v2366, 0
      %v2411 = vsel %vm480, %v2367, 0
      %v2414 = vsel %vm480, %v2368, 0
      %v2417 = vsel %vm480, %v2369, 0
      %v2420 = vsel %vm634, %v2370, 0
      %2422 = vmatprep.subr.mxu0 0.0
      %2423 = vmatpush1.msra.mxu0 %v2420
      %2424 = vmatprep.subr.mxu0 0.0
      %2425 = vmatpush1.msra.mxu0 0.0
      %2426 = vmatprep.subr.mxu0 0.0
      %2427 = vmatpush1.msra.mxu0 0.0
      %2428 = vmatprep.subr.mxu0 0.0
      %2429 = vmatpush1.msra.mxu0 0.0
      %2430 = vmatprep.subr.mxu0 0.0
      %2431 = vmatpush1.msra.mxu0 0.0
      %2432 = vmatprep.subr.mxu0 0.0
      %2433 = vmatpush1.msra.mxu0 0.0
      %2434 = vmatprep.subr.mxu0 0.0
      %2435 = vmatpush1.msra.mxu0 0.0
      %2436 = vmatprep.subr.mxu0 0.0
      %2437 = vmatpush1.msra.mxu0 0.0
      %2438 = vmatprep.subr.mxu0 0.0
      %2439 = vmatpush1.msra.mxu0 0.0
      %2440 = vmatprep.subr.mxu0 0.0
      %2441 = vmatpush1.msra.mxu0 0.0
      %2442 = vmatprep.subr.mxu0 0.0
      %2443 = vmatpush1.msra.mxu0 0.0
      %2444 = vmatprep.subr.mxu0 0.0
      %2445 = vmatpush1.msra.mxu0 0.0
      %2446 = vmatprep.subr.mxu0 0.0
      %2447 = vmatpush1.msra.mxu0 0.0
      %2448 = vmatprep.subr.mxu0 0.0
      %2449 = vmatpush1.msra.mxu0 0.0
      %2450 = vmatprep.subr.mxu0 0.0
      %2451 = vmatpush1.msra.mxu0 0.0
      %2452 = vmatprep.subr.mxu0 0.0
      %2453 = vmatpush1.msra.mxu0 0.0
      %2454 = vmatprep.subr.mxu0 0.0
      %2455 = vmatpush1.msra.mxu0 0.0
      %2456 = vmatprep.subr.mxu0 0.0
      %2457 = vmatpush1.msra.mxu0 0.0
      %2458 = vmatprep.subr.mxu0 0.0
      %2459 = vmatpush1.msra.mxu0 0.0
      %2460 = vmatprep.subr.mxu0 0.0
      %2461 = vmatpush1.msra.mxu0 0.0
      %2462 = vmatprep.subr.mxu0 0.0
      %2463 = vmatpush1.msra.mxu0 0.0
      %2464 = vmatprep.subr.mxu0 0.0
      %2465 = vmatpush1.msra.mxu0 0.0
      %2466 = vmatprep.subr.mxu0 0.0
      %2467 = vmatpush1.msra.mxu0 0.0
      %2468 = vmatprep.subr.mxu0 0.0
      %2469 = vmatpush1.msra.mxu0 0.0
      %2470 = vmatprep.subr.mxu0 0.0
      %2471 = vmatpush1.msra.mxu0 0.0
      %2472 = vmatprep.subr.mxu0 0.0
      %2473 = vmatpush1.msra.mxu0 0.0
      %2474 = vmatprep.subr.mxu0 0.0
      %2475 = vmatpush1.msra.mxu0 0.0
      %2476 = vmatprep.subr.mxu0 0.0
      %2477 = vmatpush1.msra.mxu0 0.0
      %2478 = vmatprep.subr.mxu0 0.0
      %2479 = vmatpush1.msra.mxu0 0.0
      %2480 = vmatprep.subr.mxu0 0.0
      %2481 = vmatpush1.msra.mxu0 0.0
      %2482 = vmatprep.subr.mxu0 0.0
      %2483 = vmatpush1.msra.mxu0 0.0
      %2484 = vmatprep.subr.mxu0 0.0
      %2485 = vmatpush1.msra.mxu0 0.0
      %2486 = vmatprep.mubr.f32.mxu0 0.0
      %2487 = vmatmul.mubr.f32.gmra.mrb[0].mxu0 %v2372
      %v2488 = vpop.f32.mrb[0].mxu0
      %v2489 = vadd.f32 0.0, %v2488
      %v2490 = vpop.f32.mrb[0].mxu0
      %2491 = vmatprep.mubr.f32.mxu0 0.0
      %2492 = vmatmul.mubr.f32.gmra.mrb[0].mxu0 %v2375
      %v2493 = vpop.f32.mrb[0].mxu0
      %v2494 = vadd.f32 0.0, %v2493
      %v2495 = vpop.f32.mrb[0].mxu0
      %2496 = vmatprep.mubr.f32.mxu0 0.0
      %2497 = vmatmul.mubr.f32.gmra.mrb[0].mxu0 %v2378
      %v2498 = vpop.f32.mrb[0].mxu0
      %v2499 = vadd.f32 0.0, %v2498
      %v2500 = vpop.f32.mrb[0].mxu0
      %2501 = vmatprep.mubr.f32.mxu0 0.0
      %2502 = vmatmul.mubr.f32.gmra.mrb[0].mxu0 %v2381
      %v2503 = vpop.f32.mrb[0].mxu0
      %v2504 = vadd.f32 0.0, %v2503
      %v2505 = vpop.f32.mrb[0].mxu0
      %2506 = vmatprep.mubr.f32.mxu0 0.0
      %2507 = vmatmul.mubr.f32.gmra.mrb[0].mxu0 %v2384
      %v2508 = vpop.f32.mrb[0].mxu0
      %v2509 = vadd.f32 0.0, %v2508
      %v2510 = vpop.f32.mrb[0].mxu0
      %2511 = vmatprep.mubr.f32.mxu0 0.0
      %2512 = vmatmul.mubr.f32.gmra.mrb[0].mxu0 %v2387
      %v2513 = vpop.f32.mrb[0].mxu0
      %v2514 = vadd.f32 0.0, %v2513
      %v2515 = vpop.f32.mrb[0].mxu0
      %2516 = vmatprep.mubr.f32.mxu0 0.0
      %2517 = vmatmul.mubr.f32.gmra.mrb[0].mxu0 %v2390
      %v2518 = vpop.f32.mrb[0].mxu0
      %v2519 = vadd.f32 0.0, %v2518
      %v2520 = vpop.f32.mrb[0].mxu0
      %2521 = vmatprep.mubr.f32.mxu0 0.0
      %2522 = vmatmul.mubr.f32.gmra.mrb[0].mxu0 %v2393
      %v2523 = vpop.f32.mrb[0].mxu0
      %v2524 = vadd.f32 0.0, %v2523
      %v2525 = vpop.f32.mrb[0].mxu0
      %2526 = vmatprep.mubr.f32.mxu0 0.0
      %2527 = vmatmul.mubr.f32.gmra.mrb[0].mxu0 %v2396
      %v2528 = vpop.f32.mrb[0].mxu0
      %v2529 = vadd.f32 0.0, %v2528
      %v2530 = vpop.f32.mrb[0].mxu0
      %2531 = vmatprep.mubr.f32.mxu0 0.0
      %2532 = vmatmul.mubr.f32.gmra.mrb[0].mxu0 %v2399
      %v2533 = vpop.f32.mrb[0].mxu0
      %v2534 = vadd.f32 0.0, %v2533
      %v2535 = vpop.f32.mrb[0].mxu0
      %2536 = vmatprep.mubr.f32.mxu0 0.0
      %2537 = vmatmul.mubr.f32.gmra.mrb[0].mxu0 %v2402
      %v2538 = vpop.f32.mrb[0].mxu0
      %v2539 = vadd.f32 0.0, %v2538
      %v2540 = vpop.f32.mrb[0].mxu0
      %2541 = vmatprep.mubr.f32.mxu0 0.0
      %2542 = vmatmul.mubr.f32.gmra.mrb[0].mxu0 %v2405
      %v2543 = vpop.f32.mrb[0].mxu0
      %v2544 = vadd.f32 0.0, %v2543
      %v2545 = vpop.f32.mrb[0].mxu0
      %2546 = vmatprep.mubr.f32.mxu0 0.0
      %2547 = vmatmul.mubr.f32.gmra.mrb[0].mxu0 %v2408
      %v2548 = vpop.f32.mrb[0].mxu0
      %v2549 = vadd.f32 0.0, %v2548
      %v2550 = vpop.f32.mrb[0].mxu0
      %2551 = vmatprep.mubr.f32.mxu0 0.0
      %2552 = vmatmul.mubr.f32.gmra.mrb[0].mxu0 %v2411
      %v2553 = vpop.f32.mrb[0].mxu0
      %v2554 = vadd.f32 0.0, %v2553
      %v2555 = vpop.f32.mrb[0].mxu0
      %2556 = vmatprep.mubr.f32.mxu0 0.0
      %2557 = vmatmul.mubr.f32.gmra.mrb[0].mxu0 %v2414
      %v2558 = vpop.f32.mrb[0].mxu0
      %v2559 = vadd.f32 0.0, %v2558
      %v2560 = vpop.f32.mrb[0].mxu0
      %2561 = vmatprep.mubr.f32.mxu0 0.0
      %2562 = vmatmul.mubr.f32.gmra.mrb[0].mxu0 %v2417
      %v2563 = vpop.f32.mrb[0].mxu0
      %v2564 = vadd.f32 0.0, %v2563
      %v2565 = vpop.f32.mrb[0].mxu0
      %2566 = vdwg.mxu0
      %v2567 = vadd.f32 %v2338, %v2489
      %v2568 = vadd.f32 %v2339, %v2494
      %v2569 = vadd.f32 %v2340, %v2499
      %v2570 = vadd.f32 %v2341, %v2504
      %v2571 = vadd.f32 %v2342, %v2509
      %v2572 = vadd.f32 %v2343, %v2514
      %v2573 = vadd.f32 %v2344, %v2519
      %v2574 = vadd.f32 %v2345, %v2524
      %v2575 = vadd.f32 %v2346, %v2529
      %v2576 = vadd.f32 %v2347, %v2534
      %v2577 = vadd.f32 %v2348, %v2539
      %v2578 = vadd.f32 %v2349, %v2544
      %v2579 = vadd.f32 %v2350, %v2549
      %v2580 = vadd.f32 %v2351, %v2554
      %v2581 = vadd.f32 %v2352, %v2559
      %v2582 = vadd.f32 %v2353, %v2564
      %v2583 = vld [vmem:[%s4] sm:$0x1]
      %v2585 = vlaneseq
      %v2586 = vshrl.u32 %v2585, 7
      %v2587 = vsub.s32 0, %v2586
      %v2588 = vrot.slane %v2583, %v2587
      %v2590 = vadd.f32 %v2567, %v2588
      %v2591 = vadd.f32 %v2568, %v2588
      %v2592 = vadd.f32 %v2569, %v2588
      %v2593 = vadd.f32 %v2570, %v2588
      %v2594 = vadd.f32 %v2571, %v2588
      %v2595 = vadd.f32 %v2572, %v2588
      %v2596 = vadd.f32 %v2573, %v2588
      %v2597 = vadd.f32 %v2574, %v2588
      %v2598 = vadd.f32 %v2575, %v2588
      %v2599 = vadd.f32 %v2576, %v2588
      %v2600 = vadd.f32 %v2577, %v2588
      %v2601 = vadd.f32 %v2578, %v2588
      %v2602 = vadd.f32 %v2579, %v2588
      %v2603 = vadd.f32 %v2580, %v2588
      %v2604 = vadd.f32 %v2581, %v2588
      %v2605 = vadd.f32 %v2582, %v2588
      %v2606 = vmax.f32 %v2590, 0.0
      %v2607 = vmax.f32 %v2591, 0.0
      %v2608 = vmax.f32 %v2592, 0.0
      %v2609 = vmax.f32 %v2593, 0.0
      %v2610 = vmax.f32 %v2594, 0.0
      %v2611 = vmax.f32 %v2595, 0.0
      %v2612 = vmax.f32 %v2596, 0.0
      %v2613 = vmax.f32 %v2597, 0.0
      %v2614 = vmax.f32 %v2598, 0.0
      %v2615 = vmax.f32 %v2599, 0.0
      %v2616 = vmax.f32 %v2600, 0.0
      %v2617 = vmax.f32 %v2601, 0.0
      %v2618 = vmax.f32 %v2602, 0.0
      %v2619 = vmax.f32 %v2603, 0.0
      %v2620 = vmax.f32 %v2604, 0.0
      %v2621 = vmax.f32 %v2605, 0.0
      %v2622 = vld [vmem:[%s5] sm:$0xf]
      %v2623 = vld [vmem:[%s6] sm:$0x1]
      %v2625 = vlaneseq
      %v2626 = vshrl.u32 %v2625, 7
      %v2627 = vsub.s32 0, %v2626
      %v2628 = vrot.slane %v2623, %v2627
      %v2631 = vsel %vm480, %v2606, 0
      %v2634 = vsel %vm480, %v2607, 0
      %v2637 = vsel %vm480, %v2608, 0
      %v2640 = vsel %vm480, %v2609, 0
      %v2643 = vsel %vm480, %v2610, 0
      %v2646 = vsel %vm480, %v2611, 0
      %v2649 = vsel %vm480, %v2612, 0
      %v2652 = vsel %vm480, %v2613, 0
      %v2655 = vsel %vm480, %v2614, 0
      %v2658 = vsel %vm480, %v2615, 0
      %v2661 = vsel %vm480, %v2616, 0
      %v2664 = vsel %vm480, %v2617, 0
      %v2667 = vsel %vm480, %v2618, 0
      %v2670 = vsel %vm480, %v2619, 0
      %v2673 = vsel %vm480, %v2620, 0
      %v2676 = vsel %vm480, %v2621, 0
      %v2679 = vsel %vm634, %v2622, 0
      %2681 = vmatprep.subr.mxu0 0.0
      %2682 = vmatpush1.msra.mxu0 %v2679
      %2683 = vmatprep.subr.mxu0 0.0
      %2684 = vmatpush1.msra.mxu0 0.0
      %2685 = vmatprep.subr.mxu0 0.0
      %2686 = vmatpush1.msra.mxu0 0.0
      %2687 = vmatprep.subr.mxu0 0.0
      %2688 = vmatpush1.msra.mxu0 0.0
      %2689 = vmatprep.subr.mxu0 0.0
      %2690 = vmatpush1.msra.mxu0 0.0
      %2691 = vmatprep.subr.mxu0 0.0
      %2692 = vmatpush1.msra.mxu0 0.0
      %2693 = vmatprep.subr.mxu0 0.0
      %2694 = vmatpush1.msra.mxu0 0.0
      %2695 = vmatprep.subr.mxu0 0.0
      %2696 = vmatpush1.msra.mxu0 0.0
      %2697 = vmatprep.subr.mxu0 0.0
      %2698 = vmatpush1.msra.mxu0 0.0
      %2699 = vmatprep.subr.mxu0 0.0
      %2700 = vmatpush1.msra.mxu0 0.0
      %2701 = vmatprep.subr.mxu0 0.0
      %2702 = vmatpush1.msra.mxu0 0.0
      %2703 = vmatprep.subr.mxu0 0.0
      %2704 = vmatpush1.msra.mxu0 0.0
      %2705 = vmatprep.subr.mxu0 0.0
      %2706 = vmatpush1.msra.mxu0 0.0
      %2707 = vmatprep.subr.mxu0 0.0
      %2708 = vmatpush1.msra.mxu0 0.0
      %2709 = vmatprep.subr.mxu0 0.0
      %2710 = vmatpush1.msra.mxu0 0.0
      %2711 = vmatprep.subr.mxu0 0.0
      %2712 = vmatpush1.msra.mxu0 0.0
      %2713 = vmatprep.subr.mxu0 0.0
      %2714 = vmatpush1.msra.mxu0 0.0
      %2715 = vmatprep.subr.mxu0 0.0
      %2716 = vmatpush1.msra.mxu0 0.0
      %2717 = vmatprep.subr.mxu0 0.0
      %2718 = vmatpush1.msra.mxu0 0.0
      %2719 = vmatprep.subr.mxu0 0.0
      %2720 = vmatpush1.msra.mxu0 0.0
      %2721 = vmatprep.subr.mxu0 0.0
      %2722 = vmatpush1.msra.mxu0 0.0
      %2723 = vmatprep.subr.mxu0 0.0
      %2724 = vmatpush1.msra.mxu0 0.0
      %2725 = vmatprep.subr.mxu0 0.0
      %2726 = vmatpush1.msra.mxu0 0.0
      %2727 = vmatprep.subr.mxu0 0.0
      %2728 = vmatpush1.msra.mxu0 0.0
      %2729 = vmatprep.subr.mxu0 0.0
      %2730 = vmatpush1.msra.mxu0 0.0
      %2731 = vmatprep.subr.mxu0 0.0
      %2732 = vmatpush1.msra.mxu0 0.0
      %2733 = vmatprep.subr.mxu0 0.0
      %2734 = vmatpush1.msra.mxu0 0.0
      %2735 = vmatprep.subr.mxu0 0.0
      %2736 = vmatpush1.msra.mxu0 0.0
      %2737 = vmatprep.subr.mxu0 0.0
      %2738 = vmatpush1.msra.mxu0 0.0
      %2739 = vmatprep.subr.mxu0 0.0
      %2740 = vmatpush1.msra.mxu0 0.0
      %2741 = vmatprep.subr.mxu0 0.0
      %2742 = vmatpush1.msra.mxu0 0.0
      %2743 = vmatprep.subr.mxu0 0.0
      %2744 = vmatpush1.msra.mxu0 0.0
      %2745 = vmatprep.mubr.f32.mxu0 0.0
      %2746 = vmatmul.mubr.f32.gmra.mrb[0].mxu0 %v2631
      %v2747 = vpop.f32.mrb[0].mxu0
      %v2748 = vadd.f32 %v2628, %v2747
      %v2749 = vpop.f32.mrb[0].mxu0
      %2750 = vmatprep.mubr.f32.mxu0 0.0
      %2751 = vmatmul.mubr.f32.gmra.mrb[0].mxu0 %v2634
      %v2752 = vpop.f32.mrb[0].mxu0
      %v2753 = vadd.f32 %v2628, %v2752
      %v2754 = vpop.f32.mrb[0].mxu0
      %2755 = vmatprep.mubr.f32.mxu0 0.0
      %2756 = vmatmul.mubr.f32.gmra.mrb[0].mxu0 %v2637
      %v2757 = vpop.f32.mrb[0].mxu0
      %v2758 = vadd.f32 %v2628, %v2757
      %v2759 = vpop.f32.mrb[0].mxu0
      %2760 = vmatprep.mubr.f32.mxu0 0.0
      %2761 = vmatmul.mubr.f32.gmra.mrb[0].mxu0 %v2640
      %v2762 = vpop.f32.mrb[0].mxu0
      %v2763 = vadd.f32 %v2628, %v2762
      %v2764 = vpop.f32.mrb[0].mxu0
      %2765 = vmatprep.mubr.f32.mxu0 0.0
      %2766 = vmatmul.mubr.f32.gmra.mrb[0].mxu0 %v2643
      %v2767 = vpop.f32.mrb[0].mxu0
      %v2768 = vadd.f32 %v2628, %v2767
      %v2769 = vpop.f32.mrb[0].mxu0
      %2770 = vmatprep.mubr.f32.mxu0 0.0
      %2771 = vmatmul.mubr.f32.gmra.mrb[0].mxu0 %v2646
      %v2772 = vpop.f32.mrb[0].mxu0
      %v2773 = vadd.f32 %v2628, %v2772
      %v2774 = vpop.f32.mrb[0].mxu0
      %2775 = vmatprep.mubr.f32.mxu0 0.0
      %2776 = vmatmul.mubr.f32.gmra.mrb[0].mxu0 %v2649
      %v2777 = vpop.f32.mrb[0].mxu0
      %v2778 = vadd.f32 %v2628, %v2777
      %v2779 = vpop.f32.mrb[0].mxu0
      %2780 = vmatprep.mubr.f32.mxu0 0.0
      %2781 = vmatmul.mubr.f32.gmra.mrb[0].mxu0 %v2652
      %v2782 = vpop.f32.mrb[0].mxu0
      %v2783 = vadd.f32 %v2628, %v2782
      %v2784 = vpop.f32.mrb[0].mxu0
      %2785 = vmatprep.mubr.f32.mxu0 0.0
      %2786 = vmatmul.mubr.f32.gmra.mrb[0].mxu0 %v2655
      %v2787 = vpop.f32.mrb[0].mxu0
      %v2788 = vadd.f32 %v2628, %v2787
      %v2789 = vpop.f32.mrb[0].mxu0
      %2790 = vmatprep.mubr.f32.mxu0 0.0
      %2791 = vmatmul.mubr.f32.gmra.mrb[0].mxu0 %v2658
      %v2792 = vpop.f32.mrb[0].mxu0
      %v2793 = vadd.f32 %v2628, %v2792
      %v2794 = vpop.f32.mrb[0].mxu0
      %2795 = vmatprep.mubr.f32.mxu0 0.0
      %2796 = vmatmul.mubr.f32.gmra.mrb[0].mxu0 %v2661
      %v2797 = vpop.f32.mrb[0].mxu0
      %v2798 = vadd.f32 %v2628, %v2797
      %v2799 = vpop.f32.mrb[0].mxu0
      %2800 = vmatprep.mubr.f32.mxu0 0.0
      %2801 = vmatmul.mubr.f32.gmra.mrb[0].mxu0 %v2664
      %v2802 = vpop.f32.mrb[0].mxu0
      %v2803 = vadd.f32 %v2628, %v2802
      %v2804 = vpop.f32.mrb[0].mxu0
      %2805 = vmatprep.mubr.f32.mxu0 0.0
      %2806 = vmatmul.mubr.f32.gmra.mrb[0].mxu0 %v2667
      %v2807 = vpop.f32.mrb[0].mxu0
      %v2808 = vadd.f32 %v2628, %v2807
      %v2809 = vpop.f32.mrb[0].mxu0
      %2810 = vmatprep.mubr.f32.mxu0 0.0
      %2811 = vmatmul.mubr.f32.gmra.mrb[0].mxu0 %v2670
      %v2812 = vpop.f32.mrb[0].mxu0
      %v2813 = vadd.f32 %v2628, %v2812
      %v2814 = vpop.f32.mrb[0].mxu0
      %2815 = vmatprep.mubr.f32.mxu0 0.0
      %2816 = vmatmul.mubr.f32.gmra.mrb[0].mxu0 %v2673
      %v2817 = vpop.f32.mrb[0].mxu0
      %v2818 = vadd.f32 %v2628, %v2817
      %v2819 = vpop.f32.mrb[0].mxu0
      %2820 = vmatprep.mubr.f32.mxu0 0.0
      %2821 = vmatmul.mubr.f32.gmra.mrb[0].mxu0 %v2676
      %v2822 = vpop.f32.mrb[0].mxu0
      %v2823 = vadd.f32 %v2628, %v2822
      %v2824 = vpop.f32.mrb[0].mxu0
      %2825 = vdwg.mxu0
      %v2826 = vld [vmem:[%s400] sm:$0xff]
      %v2827 = vld [vmem:[%s400 + $0x8] sm:$0xff]
      %v2828 = vld [vmem:[%s400 + $0x10] sm:$0xff]
      %v2829 = vld [vmem:[%s400 + $0x18] sm:$0xff]
      %v2830 = vld [vmem:[%s400 + $0x20] sm:$0xff]
      %v2831 = vld [vmem:[%s400 + $0x28] sm:$0xff]
      %v2832 = vld [vmem:[%s400 + $0x30] sm:$0xff]
      %v2833 = vld [vmem:[%s400 + $0x38] sm:$0xff]
      %v2834 = vld [vmem:[%s400 + $0x40] sm:$0xff]
      %v2835 = vld [vmem:[%s400 + $0x48] sm:$0xff]
      %v2836 = vld [vmem:[%s400 + $0x50] sm:$0xff]
      %v2837 = vld [vmem:[%s400 + $0x58] sm:$0xff]
      %v2838 = vld [vmem:[%s400 + $0x60] sm:$0xff]
      %v2839 = vld [vmem:[%s400 + $0x68] sm:$0xff]
      %v2840 = vld [vmem:[%s400 + $0x70] sm:$0xff]
      %v2841 = vld [vmem:[%s400 + $0x78] sm:$0xff]
      %v2842 = vadd.f32 %v2826, %v2748
      %v2843 = vadd.f32 %v2827, %v2753
      %v2844 = vadd.f32 %v2828, %v2758
      %v2845 = vadd.f32 %v2829, %v2763
      %v2846 = vadd.f32 %v2830, %v2768
      %v2847 = vadd.f32 %v2831, %v2773
      %v2848 = vadd.f32 %v2832, %v2778
      %v2849 = vadd.f32 %v2833, %v2783
      %v2850 = vadd.f32 %v2834, %v2788
      %v2851 = vadd.f32 %v2835, %v2793
      %v2852 = vadd.f32 %v2836, %v2798
      %v2853 = vadd.f32 %v2837, %v2803
      %v2854 = vadd.f32 %v2838, %v2808
      %v2855 = vadd.f32 %v2839, %v2813
      %v2856 = vadd.f32 %v2840, %v2818
      %v2857 = vadd.f32 %v2841, %v2823
      %2858 = vst.msk [vmem:[%s445] sm:$0xff] %vm480, %v2842
      %2859 = vst.msk [vmem:[%s445 + $0x8] sm:$0xff] %vm480, %v2843
      %2860 = vst.msk [vmem:[%s445 + $0x10] sm:$0xff] %vm480, %v2844
      %2861 = vst.msk [vmem:[%s445 + $0x18] sm:$0xff] %vm480, %v2845
      %2862 = vst.msk [vmem:[%s445 + $0x20] sm:$0xff] %vm480, %v2846
      %2863 = vst.msk [vmem:[%s445 + $0x28] sm:$0xff] %vm480, %v2847
      %2864 = vst.msk [vmem:[%s445 + $0x30] sm:$0xff] %vm480, %v2848
      %2865 = vst.msk [vmem:[%s445 + $0x38] sm:$0xff] %vm480, %v2849
      %2866 = vst.msk [vmem:[%s445 + $0x40] sm:$0xff] %vm480, %v2850
      %2867 = vst.msk [vmem:[%s445 + $0x48] sm:$0xff] %vm480, %v2851
      %2868 = vst.msk [vmem:[%s445 + $0x50] sm:$0xff] %vm480, %v2852
      %2869 = vst.msk [vmem:[%s445 + $0x58] sm:$0xff] %vm480, %v2853
      %2870 = vst.msk [vmem:[%s445 + $0x60] sm:$0xff] %vm480, %v2854
      %2871 = vst.msk [vmem:[%s445 + $0x68] sm:$0xff] %vm480, %v2855
      %2872 = vst.msk [vmem:[%s445 + $0x70] sm:$0xff] %vm480, %v2856
      %2873 = vst.msk [vmem:[%s445 + $0x78] sm:$0xff] %vm480, %v2857
      %s2874 = smul.u32 8, %s23
      %p2875 = scmp.lt.s32.totalorder %s22, 1
      %s2876 = scalar_select %p2875, %s22, 1
      %p2877 = scmp.lt.s32.totalorder %s2874, 15
      %s2878 = scalar_select %p2877, %s2874, 15
      %s2879 = smul.addr %s2878, 2
      %s2880 = smul.addr %s2876, 32
      %s2881 = sadd.s32 %s2879, %s2880
      %s2882 = smul.addr %s2881, 8
      %s2883 = scalar_lea.vmem %s7, %s2882
      // Predicated region
      $region65: #{tpu_custom_call.1} parent=47 // pred_check
        %p2884 = pneg %p234
      $region66: #{tpu_custom_call.1} parent=47 // pred_check_branch
        %2886 = sbr.rel (%p2884) target = $region68
      $region67: #{tpu_custom_call.1} parent=47 // pred_region
        %s2887 = smul.u32 8, %s23
      $region68: #{tpu_custom_call.1} parent=47 // pred_fallthru
        _
    $region48: #{tpu_custom_call.1} parent=5 // pred_fallthru
      _
    %p2888 = scmp.le.s32.totalorder 2, %s13
    // Predicated region
    $region69: #{tpu_custom_call.1} parent=5 // pred_check
      %p2889 = pneg %p2888
    $region70: #{tpu_custom_call.1} parent=5 // pred_check_branch
      %2891 = sbr.rel (%p2889) target = $region72
    $region71: #{tpu_custom_call.1} parent=5 // pred_region
      %s2892 = ssub.s32 %s13, 2
      // Predicated region
      $region73: #{tpu_custom_call.1} parent=71 // pred_check
        %p2893 = pneg %p240
      $region74: #{tpu_custom_call.1} parent=71 // pred_check_branch
        %2895 = sbr.rel (%p2893) target = $region76
      $region75: #{tpu_custom_call.1} parent=71 // pred_region
        %s2896 = smul.u32 8, %s25
        %p2897 = scmp.lt.s32.totalorder %s24, 1
        %s2898 = scalar_select %p2897, %s24, 1
        %p2899 = scmp.lt.s32.totalorder %s2896, 15
        %s2900 = scalar_select %p2899, %s2896, 15
        %s2901 = smul.addr %s2900, 2
        %s2902 = smul.addr %s2898, 32
        %s2903 = sadd.s32 %s2901, %s2902
        %s2904 = smul.addr %s2903, 8
        %s2905 = scalar_lea.vmem %s7, %s2904
      $region76: #{tpu_custom_call.1} parent=71 // pred_fallthru
        _
    $region72: #{tpu_custom_call.1} parent=5 // pred_fallthru
      _
  $region6: #{tpu_custom_call.1} parent=0 // loop_footer
    %s17 = sadd.s32 1, %s13
  $region7: #{tpu_custom_call.1} parent=0 // loop_footer_branch
    %12 = sbr.rel target = $region3
  $region8: #{tpu_custom_call.1} parent=0 // loop_exit
    _

</llo_original>
